<compile_context>
chip_gen: v5e
topology: v5e:2x2
jax: 0.10.0
libtpu: 0.0.40
codegen_flags: <defaults>
</compile_context>

<pallas_src>
import jax
import jax.numpy as jnp
from jax import lax
from jax.experimental import pallas as pl
from jax.experimental.pallas import tpu as pltpu


# ----------------------------------------------------------------------------
# Kernels
# ----------------------------------------------------------------------------
def _fused_conv_bn_kernel(x_ref, w_ref, scale_ref, gamma_ref, beta_ref,
                          o_ref, xpad_ref):
    """Fused 3x3 'same' conv + per-out-channel scale + training-mode BN.

    x_ref     : (N, H, W, Cin)          unpadded NHWC input
    w_ref     : (9*Cin, Cout)           weights flattened over (dy, dx, ci)
    scale_ref : (Cout, 1)               per-channel output scale (pr*sel / ones)
    gamma_ref : (Cout, 1)               BN weight
    beta_ref  : (Cout, 1)               BN bias
    o_ref     : (N, Cout, H*W)          channel-major, lane-dense output
    xpad_ref  : (N, H+2, W+2, Cin) f32  VMEM scratch (zero-padded input)
    """
    N, H, W, Cin = x_ref.shape
    HW = H * W

    # Halo handled on-chip: zero the scratch, write the interior.
    xpad_ref[...] = jnp.zeros_like(xpad_ref)
    xpad_ref[:, 1:H + 1, 1:W + 1, :] = x_ref[...].astype(jnp.float32)

    # im2col: nine shifted views concatenated along the contraction (lane) axis.
    slabs = []
    for dy in range(3):
        for dx in range(3):
            slabs.append(
                xpad_ref[:, dy:dy + H, dx:dx + W, :].reshape(N * HW, Cin))
    patches = jnp.concatenate(slabs, axis=-1)              # (N*HW, 9*Cin)

    # Single MXU matmul.
    acc = jnp.dot(patches, w_ref[...].astype(jnp.float32),
                  preferred_element_type=jnp.float32)      # (N*HW, Cout)

    # Channel-major (lane-dense) layout for the whole epilogue + store.
    y = jnp.transpose(acc)                                 # (Cout, N*HW)

    # pr/sel fused as a single per-channel output scale (conv is linear in W).
    y = y * scale_ref[...].astype(jnp.float32)

    # Training-mode BatchNorm2d: stats over (N, H, W), single pass, eps=1e-5.
    cnt = jnp.float32(N * HW)
    s1 = jnp.sum(y, axis=1, keepdims=True)                 # (Cout, 1)
    s2 = jnp.sum(y * y, axis=1, keepdims=True)             # (Cout, 1)
    mean = s1 / cnt
    var = s2 / cnt - mean * mean
    inv = lax.rsqrt(var + 1e-5)
    out = (y - mean) * (inv * gamma_ref[...].astype(jnp.float32)) \
          + beta_ref[...].astype(jnp.float32)              # (Cout, N*HW)

    # Dense 256-lane stores; N is tiny and static.
    for n in range(N):
        o_ref[n] = out[:, n * HW:(n + 1) * HW].astype(o_ref.dtype)


def _wstat_kernel(w_ref, sel_ref, pr_ref):
    """Weight reductions for the i==0 branch.

    w_ref : (9*Cin, Cout) flattened weights
    sel_avg[c] = sum_cin mean_{3x3} W[c, cin] = total_sum[c] / 9
    pr_avg[c]  = mean_{cin, 3x3} W[c]         = total_sum[c] / (9*Cin)
    """
    w = w_ref[...].astype(jnp.float32)
    s = jnp.sum(w, axis=0, keepdims=True)                  # (1, Cout)
    sel_ref[...] = (s / 9.0).astype(sel_ref.dtype)
    pr_ref[...] = (s / float(w.shape[0])).astype(pr_ref.dtype)


# ----------------------------------------------------------------------------
# Pallas wrappers
# ----------------------------------------------------------------------------
def fused_conv_bn(x_nhwc, w2d, scale, gamma, beta):
    """Returns (N, Cout, H*W); caller reshapes (free) to NCHW."""
    N, H, W, Cin = x_nhwc.shape
    Cout = w2d.shape[-1]
    scale2 = scale.reshape(Cout, 1).astype(jnp.float32)
    gamma2 = gamma.reshape(Cout, 1).astype(jnp.float32)
    beta2 = beta.reshape(Cout, 1).astype(jnp.float32)

    return pl.pallas_call(
        _fused_conv_bn_kernel,
        out_shape=jax.ShapeDtypeStruct((N, Cout, H * W), x_nhwc.dtype),
        grid_spec=pltpu.PrefetchScalarGridSpec(
            num_scalar_prefetch=0,
            grid=(1,),
            in_specs=[
                pl.BlockSpec((N, H, W, Cin), lambda i: (0, 0, 0, 0)),
                pl.BlockSpec((9 * Cin, Cout), lambda i: (0, 0)),
                pl.BlockSpec((Cout, 1), lambda i: (0, 0)),
                pl.BlockSpec((Cout, 1), lambda i: (0, 0)),
                pl.BlockSpec((Cout, 1), lambda i: (0, 0)),
            ],
            out_specs=pl.BlockSpec((N, Cout, H * W), lambda i: (0, 0, 0)),
            scratch_shapes=[pltpu.VMEM((N, H + 2, W + 2, Cin), jnp.float32)],
        ),
        compiler_params=pltpu.CompilerParams(
            dimension_semantics=("arbitrary",),
            vmem_limit_bytes=32 * 1024 * 1024,   # fits v7x's 64 MiB budget
        ),
    )(x_nhwc, w2d, scale2, gamma2, beta2)


def weight_stats(weights_oihw):
    Cout, Cin = weights_oihw.shape[0], weights_oihw.shape[1]
    # OIHW -> (H*W*Cin, Cout): reduction axis on sublanes, channels on lanes.
    w_flat = jnp.transpose(weights_oihw, (2, 3, 1, 0)).reshape(9 * Cin, Cout)
    sel_avg, pr_avg = pl.pallas_call(
        _wstat_kernel,
        out_shape=(
            jax.ShapeDtypeStruct((1, Cout), jnp.float32),
            jax.ShapeDtypeStruct((1, Cout), jnp.float32),
        ),
        grid_spec=pltpu.PrefetchScalarGridSpec(
            num_scalar_prefetch=0,
            grid=(1,),
            in_specs=[pl.BlockSpec((9 * Cin, Cout), lambda i: (0, 0))],
            out_specs=[
                pl.BlockSpec((1, Cout), lambda i: (0, 0)),
                pl.BlockSpec((1, Cout), lambda i: (0, 0)),
            ],
        ),
    )(w_flat)
    return sel_avg, pr_avg


# ----------------------------------------------------------------------------
# Module-equivalent forward (NCHW in / NCHW out, like the PyTorch module)
# ----------------------------------------------------------------------------
def convolution15_forward(params, inputs, sel, pr, i, pattern):
    weights = params["weights"]            # (Cout, Cin, 3, 3) OIHW
    gamma = params["bn_gamma"]             # (Cout,)
    beta = params["bn_beta"]               # (Cout,)
    Cout, Cin = weights.shape[0], weights.shape[1]

    def run_conv(scale):
        N, _, H, W = inputs.shape
        # TODO(synk): at larger shapes keep activations NHWC end-to-end so this
        # small input-side XLA transpose disappears too (output side is already
        # a free reshape).
        x_nhwc = jnp.transpose(inputs, (0, 2, 3, 1))
        w2d = jnp.transpose(weights, (2, 3, 1, 0)).reshape(9 * Cin, Cout)
        y = fused_conv_bn(x_nhwc, w2d, scale, gamma, beta)   # (N, Cout, H*W)
        return y.reshape(N, Cout, H, W)                      # free -> NCHW

    if pattern == 0:
        return run_conv(jnp.ones((Cout,), jnp.float32))
    elif i == 0:
        return weight_stats(weights)
    elif i == 1:
        # pr scales the weights per out-channel; sel scales the conv output per
        # out-channel. Conv is linear in W, so both fuse into one output scale.
        scale = (pr.reshape(Cout).astype(jnp.float32)
                 * sel.reshape(Cout).astype(jnp.float32))
        return run_conv(scale)


# ----------------------------------------------------------------------------
# Plain-JAX reference (for sanity checking)
# ----------------------------------------------------------------------------
def _ref_conv(x, w):
    return lax.conv_general_dilated(
        x, w, window_strides=(1, 1), padding="SAME",
        dimension_numbers=("NCHW", "OIHW", "NCHW"))


def _ref_bn(y, gamma, beta):
    mean = y.mean(axis=(0, 2, 3), keepdims=True)
    var = ((y - mean) ** 2).mean(axis=(0, 2, 3), keepdims=True)
    return ((y - mean) / jnp.sqrt(var + 1e-5)
            * gamma.reshape(1, -1, 1, 1) + beta.reshape(1, -1, 1, 1))


# ----------------------------------------------------------------------------
# Main
# ----------------------------------------------------------------------------
if __name__ == "__main__":
    in_features, out_features = 4, 8
    N, H, W = 2, 16, 16

    key = jax.random.PRNGKey(0)
    k_w, k_x, k_sel, k_pr = jax.random.split(key, 4)

    # kaiming_normal_(mode='fan_out', nonlinearity='relu'):
    # std = sqrt(2 / (out_features * 3 * 3))
    fan_out = out_features * 3 * 3
    std = (2.0 / fan_out) ** 0.5
    weights = jax.random.normal(k_w, (out_features, in_features, 3, 3),
                                jnp.float32) * std
    params = {
        "weights": weights,
        "bn_gamma": jnp.ones((out_features,), jnp.float32),
        "bn_beta": jnp.zeros((out_features,), jnp.float32),
    }

    x = jax.random.normal(k_x, (N, in_features, H, W), jnp.float32)
    sel = jax.random.uniform(k_sel, (out_features,), jnp.float32)
    pr = jax.random.uniform(k_pr, (out_features,), jnp.float32)

    # --- pattern == 0 : bn(conv(x, W)) ---
    out0 = convolution15_forward(params, x, sel, pr, i=1, pattern=0)
    out0 = jax.block_until_ready(out0)
    ref0 = _ref_bn(_ref_conv(x, weights), params["bn_gamma"], params["bn_beta"])
    assert out0.shape == (N, out_features, H, W)
    assert jnp.allclose(out0, ref0, atol=2e-3, rtol=2e-3)

    # --- pattern != 0, i == 0 : weight reductions ---
    sel_avg, pr_avg = convolution15_forward(params, x, sel, pr, i=0, pattern=1)
    sel_avg, pr_avg = jax.block_until_ready((sel_avg, pr_avg))
    ref_sel = jnp.sum(jnp.mean(weights, axis=(2, 3)), axis=1).reshape(1, out_features)
    ref_pr = jnp.mean(weights, axis=(1, 2, 3)).reshape(1, out_features)
    assert sel_avg.shape == (1, out_features) and pr_avg.shape == (1, out_features)
    assert jnp.allclose(sel_avg, ref_sel, atol=1e-5, rtol=1e-5)
    assert jnp.allclose(pr_avg, ref_pr, atol=1e-5, rtol=1e-5)

    # --- pattern != 0, i == 1 : bn(sel * conv(x, pr * W)) ---
    out1 = convolution15_forward(params, x, sel, pr, i=1, pattern=1)
    out1 = jax.block_until_ready(out1)
    w_scaled = weights * pr.reshape(out_features, 1, 1, 1)
    ref_conv1 = _ref_conv(x, w_scaled) * sel.reshape(1, out_features, 1, 1)
    ref1 = _ref_bn(ref_conv1, params["bn_gamma"], params["bn_beta"])
    assert out1.shape == (N, out_features, H, W)
    assert jnp.allclose(out1, ref1, atol=2e-3, rtol=2e-3)

    print("KERNEL_OK")
</pallas_src>

<mosaic_0001>
module attributes {stable_mosaic.version = 11 : i64} {
  func.func @_fused_conv_bn_kernel(%arg0: i32, %arg1: memref<2x16x16x4xf32, #tpu.memory_space<vmem>>, %arg2: memref<36x8xf32, #tpu.memory_space<vmem>>, %arg3: memref<8x1xf32, #tpu.memory_space<vmem>>, %arg4: memref<8x1xf32, #tpu.memory_space<vmem>>, %arg5: memref<8x1xf32, #tpu.memory_space<vmem>>, %arg6: memref<2x8x256xf32, #tpu.memory_space<vmem>>, %arg7: memref<2x18x18x4xf32, #tpu.memory_space<vmem>>) attributes {dimension_semantics = [#tpu.dimension_semantics<arbitrary>], iteration_bounds = array<i64: 1>, scalar_prefetch = 0 : i64, scratch_operands = 1 : i64, tpu.core_type = #tpu.core_type<tc>, window_params = [{pipeline_mode = #tpu.pipeline_mode<synchronous>, transform_indices = @transform_0, window_bounds = array<i64: 2, 16, 16, 4>}, {pipeline_mode = #tpu.pipeline_mode<synchronous>, transform_indices = @transform_1, window_bounds = array<i64: 36, 8>}, {pipeline_mode = #tpu.pipeline_mode<synchronous>, transform_indices = @transform_2, window_bounds = array<i64: 8, 1>}, {pipeline_mode = #tpu.pipeline_mode<synchronous>, transform_indices = @transform_3, window_bounds = array<i64: 8, 1>}, {pipeline_mode = #tpu.pipeline_mode<synchronous>, transform_indices = @transform_4, window_bounds = array<i64: 8, 1>}, {pipeline_mode = #tpu.pipeline_mode<synchronous>, transform_indices = @transform_5, window_bounds = array<i64: 2, 8, 256>}]} {
    %cst = arith.constant 0.000000e+00 : f32
    %0 = vector.broadcast %cst : f32 to vector<2x18x18x4xf32>
    %c0 = arith.constant 0 : index
    %c0_0 = arith.constant 0 : index
    %c0_1 = arith.constant 0 : index
    %c0_2 = arith.constant 0 : index
    %1 = vector.load %arg7[%c0, %c0_0, %c0_1, %c0_2] : memref<2x18x18x4xf32, #tpu.memory_space<vmem>>, vector<2x18x18x4xf32>
    tpu.vector_store %arg7[%c0, %c0_0, %c0_1, %c0_2], %0 {strides = array<i32>} : memref<2x18x18x4xf32, #tpu.memory_space<vmem>>, vector<2x18x18x4xf32>,
    %c0_3 = arith.constant 0 : index
    %c0_4 = arith.constant 0 : index
    %c0_5 = arith.constant 0 : index
    %c0_6 = arith.constant 0 : index
    %2 = vector.load %arg1[%c0_3, %c0_4, %c0_5, %c0_6] : memref<2x16x16x4xf32, #tpu.memory_space<vmem>>, vector<2x16x16x4xf32>
    %c0_7 = arith.constant 0 : index
    %c1 = arith.constant 1 : index
    %c1_8 = arith.constant 1 : index
    %c0_9 = arith.constant 0 : index
    %3 = vector.load %arg7[%c0_7, %c1, %c1_8, %c0_9] : memref<2x18x18x4xf32, #tpu.memory_space<vmem>>, vector<2x16x16x4xf32>
    tpu.vector_store %arg7[%c0_7, %c1, %c1_8, %c0_9], %2 {strides = array<i32>} : memref<2x18x18x4xf32, #tpu.memory_space<vmem>>, vector<2x16x16x4xf32>,
    %c0_10 = arith.constant 0 : index
    %c0_11 = arith.constant 0 : index
    %c0_12 = arith.constant 0 : index
    %c0_13 = arith.constant 0 : index
    %4 = vector.load %arg7[%c0_10, %c0_11, %c0_12, %c0_13] : memref<2x18x18x4xf32, #tpu.memory_space<vmem>>, vector<2x16x16x4xf32>
    %5 = vector.shape_cast %4 : vector<2x16x16x4xf32> to vector<512x4xf32>
    %c0_14 = arith.constant 0 : index
    %c0_15 = arith.constant 0 : index
    %c1_16 = arith.constant 1 : index
    %c0_17 = arith.constant 0 : index
    %6 = vector.load %arg7[%c0_14, %c0_15, %c1_16, %c0_17] : memref<2x18x18x4xf32, #tpu.memory_space<vmem>>, vector<2x16x16x4xf32>
    %7 = vector.shape_cast %6 : vector<2x16x16x4xf32> to vector<512x4xf32>
    %c0_18 = arith.constant 0 : index
    %c0_19 = arith.constant 0 : index
    %c2 = arith.constant 2 : index
    %c0_20 = arith.constant 0 : index
    %8 = vector.load %arg7[%c0_18, %c0_19, %c2, %c0_20] : memref<2x18x18x4xf32, #tpu.memory_space<vmem>>, vector<2x16x16x4xf32>
    %9 = vector.shape_cast %8 : vector<2x16x16x4xf32> to vector<512x4xf32>
    %c0_21 = arith.constant 0 : index
    %c1_22 = arith.constant 1 : index
    %c0_23 = arith.constant 0 : index
    %c0_24 = arith.constant 0 : index
    %10 = vector.load %arg7[%c0_21, %c1_22, %c0_23, %c0_24] : memref<2x18x18x4xf32, #tpu.memory_space<vmem>>, vector<2x16x16x4xf32>
    %11 = vector.shape_cast %10 : vector<2x16x16x4xf32> to vector<512x4xf32>
    %c0_25 = arith.constant 0 : index
    %c1_26 = arith.constant 1 : index
    %c1_27 = arith.constant 1 : index
    %c0_28 = arith.constant 0 : index
    %12 = vector.load %arg7[%c0_25, %c1_26, %c1_27, %c0_28] : memref<2x18x18x4xf32, #tpu.memory_space<vmem>>, vector<2x16x16x4xf32>
    %13 = vector.shape_cast %12 : vector<2x16x16x4xf32> to vector<512x4xf32>
    %c0_29 = arith.constant 0 : index
    %c1_30 = arith.constant 1 : index
    %c2_31 = arith.constant 2 : index
    %c0_32 = arith.constant 0 : index
    %14 = vector.load %arg7[%c0_29, %c1_30, %c2_31, %c0_32] : memref<2x18x18x4xf32, #tpu.memory_space<vmem>>, vector<2x16x16x4xf32>
    %15 = vector.shape_cast %14 : vector<2x16x16x4xf32> to vector<512x4xf32>
    %c0_33 = arith.constant 0 : index
    %c2_34 = arith.constant 2 : index
    %c0_35 = arith.constant 0 : index
    %c0_36 = arith.constant 0 : index
    %16 = vector.load %arg7[%c0_33, %c2_34, %c0_35, %c0_36] : memref<2x18x18x4xf32, #tpu.memory_space<vmem>>, vector<2x16x16x4xf32>
    %17 = vector.shape_cast %16 : vector<2x16x16x4xf32> to vector<512x4xf32>
    %c0_37 = arith.constant 0 : index
    %c2_38 = arith.constant 2 : index
    %c1_39 = arith.constant 1 : index
    %c0_40 = arith.constant 0 : index
    %18 = vector.load %arg7[%c0_37, %c2_38, %c1_39, %c0_40] : memref<2x18x18x4xf32, #tpu.memory_space<vmem>>, vector<2x16x16x4xf32>
    %19 = vector.shape_cast %18 : vector<2x16x16x4xf32> to vector<512x4xf32>
    %c0_41 = arith.constant 0 : index
    %c2_42 = arith.constant 2 : index
    %c2_43 = arith.constant 2 : index
    %c0_44 = arith.constant 0 : index
    %20 = vector.load %arg7[%c0_41, %c2_42, %c2_43, %c0_44] : memref<2x18x18x4xf32, #tpu.memory_space<vmem>>, vector<2x16x16x4xf32>
    %21 = vector.shape_cast %20 : vector<2x16x16x4xf32> to vector<512x4xf32>
    %22 = tpu.concatenate %5, %7, %9, %11, %13, %15, %17, %19, %21 in 1 : vector<512x4xf32>, vector<512x4xf32>, vector<512x4xf32>, vector<512x4xf32>, vector<512x4xf32>, vector<512x4xf32>, vector<512x4xf32>, vector<512x4xf32>, vector<512x4xf32> -> vector<512x36xf32>
    %c0_45 = arith.constant 0 : index
    %c0_46 = arith.constant 0 : index
    %23 = vector.load %arg2[%c0_45, %c0_46] : memref<36x8xf32, #tpu.memory_space<vmem>>, vector<36x8xf32>
    %cst_47 = arith.constant dense<0.000000e+00> : vector<512x8xf32>
    %24 = tpu.matmul %22, %23, %cst_47 {dimension_numbers = #tpu.dot_dimension_numbers<[1], [0], [0], [1], [0, 0, 1, 1], [], []>} : vector<512x36xf32>, vector<36x8xf32>, vector<512x8xf32> -> vector<512x8xf32>
    %25 = tpu.transpose %24, [1, 0] : vector<512x8xf32> -> vector<8x512xf32>
    %c0_48 = arith.constant 0 : index
    %c0_49 = arith.constant 0 : index
    %26 = vector.load %arg3[%c0_48, %c0_49] : memref<8x1xf32, #tpu.memory_space<vmem>>, vector<8x1xf32>
    %27 = vector.broadcast %26 : vector<8x1xf32> to vector<8x512xf32>
    %28 = arith.mulf %25, %27 : vector<8x512xf32>
    %cst_50 = arith.constant dense<0.000000e+00> : vector<8xf32>
    %29 = vector.multi_reduction <add>, %28, %cst_50 [1] : vector<8x512xf32> to vector<8xf32>
    %30 = vector.shape_cast %29 : vector<8xf32> to vector<8x1xf32>
    %31 = arith.mulf %28, %28 : vector<8x512xf32>
    %cst_51 = arith.constant dense<0.000000e+00> : vector<8xf32>
    %32 = vector.multi_reduction <add>, %31, %cst_51 [1] : vector<8x512xf32> to vector<8xf32>
    %33 = vector.shape_cast %32 : vector<8xf32> to vector<8x1xf32>
    %cst_52 = arith.constant 5.120000e+02 : f32
    %34 = vector.broadcast %cst_52 : f32 to vector<8x1xf32>
    %35 = arith.divf %30, %34 : vector<8x1xf32>
    %cst_53 = arith.constant 5.120000e+02 : f32
    %36 = vector.broadcast %cst_53 : f32 to vector<8x1xf32>
    %37 = arith.divf %33, %36 : vector<8x1xf32>
    %38 = arith.mulf %35, %35 : vector<8x1xf32>
    %39 = arith.subf %37, %38 : vector<8x1xf32>
    %cst_54 = arith.constant 9.99999974E-6 : f32
    %40 = vector.broadcast %cst_54 : f32 to vector<8x1xf32>
    %41 = arith.addf %39, %40 : vector<8x1xf32>
    %42 = math.rsqrt %41 : vector<8x1xf32>
    %43 = vector.broadcast %35 : vector<8x1xf32> to vector<8x512xf32>
    %44 = arith.subf %28, %43 : vector<8x512xf32>
    %c0_55 = arith.constant 0 : index
    %c0_56 = arith.constant 0 : index
    %45 = vector.load %arg4[%c0_55, %c0_56] : memref<8x1xf32, #tpu.memory_space<vmem>>, vector<8x1xf32>
    %46 = arith.mulf %42, %45 : vector<8x1xf32>
    %47 = vector.broadcast %46 : vector<8x1xf32> to vector<8x512xf32>
    %48 = arith.mulf %44, %47 : vector<8x512xf32>
    %c0_57 = arith.constant 0 : index
    %c0_58 = arith.constant 0 : index
    %49 = vector.load %arg5[%c0_57, %c0_58] : memref<8x1xf32, #tpu.memory_space<vmem>>, vector<8x1xf32>
    %50 = vector.broadcast %49 : vector<8x1xf32> to vector<8x512xf32>
    %51 = arith.addf %48, %50 : vector<8x512xf32>
    %52 = vector.extract_strided_slice %51 {offsets = [0, 0], sizes = [8, 256], strides = [1, 1]} : vector<8x512xf32> to vector<8x256xf32>
    %c0_59 = arith.constant 0 : index
    %c0_60 = arith.constant 0 : index
    %c0_61 = arith.constant 0 : index
    %53 = vector.load %arg6[%c0_59, %c0_60, %c0_61] : memref<2x8x256xf32, #tpu.memory_space<vmem>>, vector<1x8x256xf32>
    %54 = vector.shape_cast %53 : vector<1x8x256xf32> to vector<8x256xf32>
    %55 = vector.shape_cast %52 : vector<8x256xf32> to vector<1x8x256xf32>
    tpu.vector_store %arg6[%c0_59, %c0_60, %c0_61], %55 {strides = array<i32>} : memref<2x8x256xf32, #tpu.memory_space<vmem>>, vector<1x8x256xf32>,
    %56 = vector.extract_strided_slice %51 {offsets = [0, 256], sizes = [8, 256], strides = [1, 1]} : vector<8x512xf32> to vector<8x256xf32>
    %c1_62 = arith.constant 1 : index
    %c0_63 = arith.constant 0 : index
    %c0_64 = arith.constant 0 : index
    %57 = vector.load %arg6[%c1_62, %c0_63, %c0_64] : memref<2x8x256xf32, #tpu.memory_space<vmem>>, vector<1x8x256xf32>
    %58 = vector.shape_cast %57 : vector<1x8x256xf32> to vector<8x256xf32>
    %59 = vector.shape_cast %56 : vector<8x256xf32> to vector<1x8x256xf32>
    tpu.vector_store %arg6[%c1_62, %c0_63, %c0_64], %59 {strides = array<i32>} : memref<2x8x256xf32, #tpu.memory_space<vmem>>, vector<1x8x256xf32>,
    return
  }
  func.func @transform_0(%arg0: i32) -> (i32, i32, i32, i32) {
    %c0_i32 = arith.constant 0 : i32
    %c0_i32_0 = arith.constant 0 : i32
    %c0_i32_1 = arith.constant 0 : i32
    %c0_i32_2 = arith.constant 0 : i32
    %c0_i32_3 = arith.constant 0 : i32
    return %c0_i32, %c0_i32_0, %c0_i32_1, %c0_i32_2 : i32, i32, i32, i32
  }
  func.func @transform_1(%arg0: i32) -> (i32, i32) {
    %c0_i32 = arith.constant 0 : i32
    %c0_i32_0 = arith.constant 0 : i32
    %c0_i32_1 = arith.constant 0 : i32
    return %c0_i32, %c0_i32_0 : i32, i32
  }
  func.func @transform_2(%arg0: i32) -> (i32, i32) {
    %c0_i32 = arith.constant 0 : i32
    %c0_i32_0 = arith.constant 0 : i32
    %c0_i32_1 = arith.constant 0 : i32
    return %c0_i32, %c0_i32_0 : i32, i32
  }
  func.func @transform_3(%arg0: i32) -> (i32, i32) {
    %c0_i32 = arith.constant 0 : i32
    %c0_i32_0 = arith.constant 0 : i32
    %c0_i32_1 = arith.constant 0 : i32
    return %c0_i32, %c0_i32_0 : i32, i32
  }
  func.func @transform_4(%arg0: i32) -> (i32, i32) {
    %c0_i32 = arith.constant 0 : i32
    %c0_i32_0 = arith.constant 0 : i32
    %c0_i32_1 = arith.constant 0 : i32
    return %c0_i32, %c0_i32_0 : i32, i32
  }
  func.func @transform_5(%arg0: i32) -> (i32, i32, i32) {
    %c0_i32 = arith.constant 0 : i32
    %c0_i32_0 = arith.constant 0 : i32
    %c0_i32_1 = arith.constant 0 : i32
    %c0_i32_2 = arith.constant 0 : i32
    return %c0_i32, %c0_i32_0, %c0_i32_1 : i32, i32, i32
  }
}

</mosaic_0001>

<llo_original>
// kernel: tpu_custom_call.1
$region0: #{tpu_custom_call.1}
  #allocation0 [shape = 'u32[]', space=smem, size = 0x4, offset = 0x4, fixed_abs, tag = 'smem constant byte address 0x4 - core index']
  #allocation1 [shape = 'u32[72,128]{1,0:T(1,128)}', space=vmem, size = 0x9000, scoped, tag = 'internal scratch']
  #allocation2 [shape = 'f32[2,18,18,4]{3,2,1,0:T(8,128)}', space=vmem, size = 0x6c000, scoped, tag = 'scratch operand']
  %s0 = inlined_call_operand.vmem [shape: f32[2,16,16,4], index: 0, kind: input, shape index: {}]
  %s1 = inlined_call_operand.vmem [shape: f32[36,8], index: 1, kind: input, shape index: {}]
  %s2 = inlined_call_operand.vmem [shape: f32[8,1], index: 2, kind: input, shape index: {}]
  %s3 = inlined_call_operand.vmem [shape: f32[8,1], index: 3, kind: input, shape index: {}]
  %s4 = inlined_call_operand.vmem [shape: f32[8,1], index: 4, kind: input, shape index: {}]
  %s5 = inlined_call_operand.hbm [shape: f32[2,8,256], index: 5, kind: output, shape index: {}]
  %s6 = sld [smem:[#allocation0]]
  $region30: #{tpu_custom_call.1} parent=0
    _
  %s8 = ssub.s32 1, %s6
  %s9 = scalar_select 0, %s8, %s6
  $region1: #{tpu_custom_call.1} parent=0
    #allocation3 [shape = 'u8[16384]{0}', space=vmem, size = 0x4000, scoped, tag = 'output window, operand 0, single buffered']
    #allocation4 [shape = 's32[1]{0}', space=sflag, size = 0x4, scoped, tag = 'scoped memory for tpu_custom_call.1']
    %10 = vsyncpa [#allocation4], 0
    // Predicated region
    $region2: #{tpu_custom_call.1} parent=1 // pred_check
      _
    $region3: #{tpu_custom_call.1} parent=1 // pred_check_branch
      %12 = sbr.rel (0) target = $region5
    $region4: #{tpu_custom_call.1} parent=1 // pred_region
      _
    $region5: #{tpu_custom_call.1} parent=1 // pred_fallthru
      _
    // Predicated region
    $region6: #{tpu_custom_call.1} parent=1 // pred_check
      _
    $region7: #{tpu_custom_call.1} parent=1 // pred_check_branch
      %14 = sbr.rel (0) target = $region9
    $region8: #{tpu_custom_call.1} parent=1 // pred_region
      _
    $region9: #{tpu_custom_call.1} parent=1 // pred_fallthru
      _
    // Predicated region
    $region10: #{tpu_custom_call.1} parent=1 // pred_check
      _
    $region11: #{tpu_custom_call.1} parent=1 // pred_check_branch
      %16 = sbr.rel (0) target = $region13
    $region12: #{tpu_custom_call.1} parent=1 // pred_region
      _
    $region13: #{tpu_custom_call.1} parent=1 // pred_fallthru
      _
    // Predicated region
    $region14: #{tpu_custom_call.1} parent=1 // pred_check
      _
    $region15: #{tpu_custom_call.1} parent=1 // pred_check_branch
      %18 = sbr.rel (0) target = $region17
    $region16: #{tpu_custom_call.1} parent=1 // pred_region
      _
    $region17: #{tpu_custom_call.1} parent=1 // pred_fallthru
      _
    // Predicated region
    $region18: #{tpu_custom_call.1} parent=1 // pred_check
      _
    $region19: #{tpu_custom_call.1} parent=1 // pred_check_branch
      %20 = sbr.rel (0) target = $region21
    $region20: #{tpu_custom_call.1} parent=1 // pred_region
      _
    $region21: #{tpu_custom_call.1} parent=1 // pred_fallthru
      _
    %vm21 = vcmask 31744
    %22 = vst.msk [vmem:[#allocation2] sm:$0xff] %vm21, 0.0
    %23 = vst.msk [vmem:[#allocation2 + $0x8] sm:$0xff] %vm21, 0.0
    %vm24 = vcmask 25600
    %25 = vst.msk [vmem:[#allocation2 + $0x10] sm:$0x3] %vm24, 0.0
    %26 = vst.msk [vmem:[#allocation2 + $0x18] sm:$0xff] %vm21, 0.0
    %27 = vst.msk [vmem:[#allocation2 + $0x20] sm:$0xff] %vm21, 0.0
    %28 = vst.msk [vmem:[#allocation2 + $0x28] sm:$0x3] %vm24, 0.0
    %29 = vst.msk [vmem:[#allocation2 + $0x30] sm:$0xff] %vm21, 0.0
    %30 = vst.msk [vmem:[#allocation2 + $0x38] sm:$0xff] %vm21, 0.0
    %31 = vst.msk [vmem:[#allocation2 + $0x40] sm:$0x3] %vm24, 0.0
    %32 = vst.msk [vmem:[#allocation2 + $0x48] sm:$0xff] %vm21, 0.0
    %33 = vst.msk [vmem:[#allocation2 + $0x50] sm:$0xff] %vm21, 0.0
    %34 = vst.msk [vmem:[#allocation2 + $0x58] sm:$0x3] %vm24, 0.0
    %35 = vst.msk [vmem:[#allocation2 + $0x60] sm:$0xff] %vm21, 0.0
    %36 = vst.msk [vmem:[#allocation2 + $0x68] sm:$0xff] %vm21, 0.0
    %37 = vst.msk [vmem:[#allocation2 + $0x70] sm:$0x3] %vm24, 0.0
    %38 = vst.msk [vmem:[#allocation2 + $0x78] sm:$0xff] %vm21, 0.0
    %39 = vst.msk [vmem:[#allocation2 + $0x80] sm:$0xff] %vm21, 0.0
    %40 = vst.msk [vmem:[#allocation2 + $0x88] sm:$0x3] %vm24, 0.0
    %41 = vst.msk [vmem:[#allocation2 + $0x90] sm:$0xff] %vm21, 0.0
    %42 = vst.msk [vmem:[#allocation2 + $0x98] sm:$0xff] %vm21, 0.0
    %43 = vst.msk [vmem:[#allocation2 + $0xa0] sm:$0x3] %vm24, 0.0
    %44 = vst.msk [vmem:[#allocation2 + $0xa8] sm:$0xff] %vm21, 0.0
    %45 = vst.msk [vmem:[#allocation2 + $0xb0] sm:$0xff] %vm21, 0.0
    %46 = vst.msk [vmem:[#allocation2 + $0xb8] sm:$0x3] %vm24, 0.0
    %47 = vst.msk [vmem:[#allocation2 + $0xc0] sm:$0xff] %vm21, 0.0
    %48 = vst.msk [vmem:[#allocation2 + $0xc8] sm:$0xff] %vm21, 0.0
    %49 = vst.msk [vmem:[#allocation2 + $0xd0] sm:$0x3] %vm24, 0.0
    %50 = vst.msk [vmem:[#allocation2 + $0xd8] sm:$0xff] %vm21, 0.0
    %51 = vst.msk [vmem:[#allocation2 + $0xe0] sm:$0xff] %vm21, 0.0
    %52 = vst.msk [vmem:[#allocation2 + $0xe8] sm:$0x3] %vm24, 0.0
    %53 = vst.msk [vmem:[#allocation2 + $0xf0] sm:$0xff] %vm21, 0.0
    %54 = vst.msk [vmem:[#allocation2 + $0xf8] sm:$0xff] %vm21, 0.0
    %55 = vst.msk [vmem:[#allocation2 + $0x100] sm:$0x3] %vm24, 0.0
    %56 = vst.msk [vmem:[#allocation2 + $0x108] sm:$0xff] %vm21, 0.0
    %57 = vst.msk [vmem:[#allocation2 + $0x110] sm:$0xff] %vm21, 0.0
    %58 = vst.msk [vmem:[#allocation2 + $0x118] sm:$0x3] %vm24, 0.0
    %59 = vst.msk [vmem:[#allocation2 + $0x120] sm:$0xff] %vm21, 0.0
    %60 = vst.msk [vmem:[#allocation2 + $0x128] sm:$0xff] %vm21, 0.0
    %61 = vst.msk [vmem:[#allocation2 + $0x130] sm:$0x3] %vm24, 0.0
    %62 = vst.msk [vmem:[#allocation2 + $0x138] sm:$0xff] %vm21, 0.0
    %63 = vst.msk [vmem:[#allocation2 + $0x140] sm:$0xff] %vm21, 0.0
    %64 = vst.msk [vmem:[#allocation2 + $0x148] sm:$0x3] %vm24, 0.0
    %65 = vst.msk [vmem:[#allocation2 + $0x150] sm:$0xff] %vm21, 0.0
    %66 = vst.msk [vmem:[#allocation2 + $0x158] sm:$0xff] %vm21, 0.0
    %67 = vst.msk [vmem:[#allocation2 + $0x160] sm:$0x3] %vm24, 0.0
    %68 = vst.msk [vmem:[#allocation2 + $0x168] sm:$0xff] %vm21, 0.0
    %69 = vst.msk [vmem:[#allocation2 + $0x170] sm:$0xff] %vm21, 0.0
    %70 = vst.msk [vmem:[#allocation2 + $0x178] sm:$0x3] %vm24, 0.0
    %71 = vst.msk [vmem:[#allocation2 + $0x180] sm:$0xff] %vm21, 0.0
    %72 = vst.msk [vmem:[#allocation2 + $0x188] sm:$0xff] %vm21, 0.0
    %73 = vst.msk [vmem:[#allocation2 + $0x190] sm:$0x3] %vm24, 0.0
    %74 = vst.msk [vmem:[#allocation2 + $0x198] sm:$0xff] %vm21, 0.0
    %75 = vst.msk [vmem:[#allocation2 + $0x1a0] sm:$0xff] %vm21, 0.0
    %76 = vst.msk [vmem:[#allocation2 + $0x1a8] sm:$0x3] %vm24, 0.0
    %77 = vst.msk [vmem:[#allocation2 + $0x1b0] sm:$0xff] %vm21, 0.0
    %78 = vst.msk [vmem:[#allocation2 + $0x1b8] sm:$0xff] %vm21, 0.0
    %79 = vst.msk [vmem:[#allocation2 + $0x1c0] sm:$0x3] %vm24, 0.0
    %80 = vst.msk [vmem:[#allocation2 + $0x1c8] sm:$0xff] %vm21, 0.0
    %81 = vst.msk [vmem:[#allocation2 + $0x1d0] sm:$0xff] %vm21, 0.0
    %82 = vst.msk [vmem:[#allocation2 + $0x1d8] sm:$0x3] %vm24, 0.0
    %83 = vst.msk [vmem:[#allocation2 + $0x1e0] sm:$0xff] %vm21, 0.0
    %84 = vst.msk [vmem:[#allocation2 + $0x1e8] sm:$0xff] %vm21, 0.0
    %85 = vst.msk [vmem:[#allocation2 + $0x1f0] sm:$0x3] %vm24, 0.0
    %86 = vst.msk [vmem:[#allocation2 + $0x1f8] sm:$0xff] %vm21, 0.0
    %87 = vst.msk [vmem:[#allocation2 + $0x200] sm:$0xff] %vm21, 0.0
    %88 = vst.msk [vmem:[#allocation2 + $0x208] sm:$0x3] %vm24, 0.0
    %89 = vst.msk [vmem:[#allocation2 + $0x210] sm:$0xff] %vm21, 0.0
    %90 = vst.msk [vmem:[#allocation2 + $0x218] sm:$0xff] %vm21, 0.0
    %91 = vst.msk [vmem:[#allocation2 + $0x220] sm:$0x3] %vm24, 0.0
    %92 = vst.msk [vmem:[#allocation2 + $0x228] sm:$0xff] %vm21, 0.0
    %93 = vst.msk [vmem:[#allocation2 + $0x230] sm:$0xff] %vm21, 0.0
    %94 = vst.msk [vmem:[#allocation2 + $0x238] sm:$0x3] %vm24, 0.0
    %95 = vst.msk [vmem:[#allocation2 + $0x240] sm:$0xff] %vm21, 0.0
    %96 = vst.msk [vmem:[#allocation2 + $0x248] sm:$0xff] %vm21, 0.0
    %97 = vst.msk [vmem:[#allocation2 + $0x250] sm:$0x3] %vm24, 0.0
    %98 = vst.msk [vmem:[#allocation2 + $0x258] sm:$0xff] %vm21, 0.0
    %99 = vst.msk [vmem:[#allocation2 + $0x260] sm:$0xff] %vm21, 0.0
    %100 = vst.msk [vmem:[#allocation2 + $0x268] sm:$0x3] %vm24, 0.0
    %101 = vst.msk [vmem:[#allocation2 + $0x270] sm:$0xff] %vm21, 0.0
    %102 = vst.msk [vmem:[#allocation2 + $0x278] sm:$0xff] %vm21, 0.0
    %103 = vst.msk [vmem:[#allocation2 + $0x280] sm:$0x3] %vm24, 0.0
    %104 = vst.msk [vmem:[#allocation2 + $0x288] sm:$0xff] %vm21, 0.0
    %105 = vst.msk [vmem:[#allocation2 + $0x290] sm:$0xff] %vm21, 0.0
    %106 = vst.msk [vmem:[#allocation2 + $0x298] sm:$0x3] %vm24, 0.0
    %107 = vst.msk [vmem:[#allocation2 + $0x2a0] sm:$0xff] %vm21, 0.0
    %108 = vst.msk [vmem:[#allocation2 + $0x2a8] sm:$0xff] %vm21, 0.0
    %109 = vst.msk [vmem:[#allocation2 + $0x2b0] sm:$0x3] %vm24, 0.0
    %110 = vst.msk [vmem:[#allocation2 + $0x2b8] sm:$0xff] %vm21, 0.0
    %111 = vst.msk [vmem:[#allocation2 + $0x2c0] sm:$0xff] %vm21, 0.0
    %112 = vst.msk [vmem:[#allocation2 + $0x2c8] sm:$0x3] %vm24, 0.0
    %113 = vst.msk [vmem:[#allocation2 + $0x2d0] sm:$0xff] %vm21, 0.0
    %114 = vst.msk [vmem:[#allocation2 + $0x2d8] sm:$0xff] %vm21, 0.0
    %115 = vst.msk [vmem:[#allocation2 + $0x2e0] sm:$0x3] %vm24, 0.0
    %116 = vst.msk [vmem:[#allocation2 + $0x2e8] sm:$0xff] %vm21, 0.0
    %117 = vst.msk [vmem:[#allocation2 + $0x2f0] sm:$0xff] %vm21, 0.0
    %118 = vst.msk [vmem:[#allocation2 + $0x2f8] sm:$0x3] %vm24, 0.0
    %119 = vst.msk [vmem:[#allocation2 + $0x300] sm:$0xff] %vm21, 0.0
    %120 = vst.msk [vmem:[#allocation2 + $0x308] sm:$0xff] %vm21, 0.0
    %121 = vst.msk [vmem:[#allocation2 + $0x310] sm:$0x3] %vm24, 0.0
    %122 = vst.msk [vmem:[#allocation2 + $0x318] sm:$0xff] %vm21, 0.0
    %123 = vst.msk [vmem:[#allocation2 + $0x320] sm:$0xff] %vm21, 0.0
    %124 = vst.msk [vmem:[#allocation2 + $0x328] sm:$0x3] %vm24, 0.0
    %125 = vst.msk [vmem:[#allocation2 + $0x330] sm:$0xff] %vm21, 0.0
    %126 = vst.msk [vmem:[#allocation2 + $0x338] sm:$0xff] %vm21, 0.0
    %127 = vst.msk [vmem:[#allocation2 + $0x340] sm:$0x3] %vm24, 0.0
    %128 = vst.msk [vmem:[#allocation2 + $0x348] sm:$0xff] %vm21, 0.0
    %129 = vst.msk [vmem:[#allocation2 + $0x350] sm:$0xff] %vm21, 0.0
    %130 = vst.msk [vmem:[#allocation2 + $0x358] sm:$0x3] %vm24, 0.0
    %v131 = vld [vmem:[%s0] sm:$0xff]
    %v132 = vld [vmem:[%s0 + $0x8] sm:$0xff]
    %v133 = vld [vmem:[%s0 + $0x10] sm:$0xff]
    %v134 = vld [vmem:[%s0 + $0x18] sm:$0xff]
    %v135 = vld [vmem:[%s0 + $0x20] sm:$0xff]
    %v136 = vld [vmem:[%s0 + $0x28] sm:$0xff]
    %v137 = vld [vmem:[%s0 + $0x30] sm:$0xff]
    %v138 = vld [vmem:[%s0 + $0x38] sm:$0xff]
    %v139 = vld [vmem:[%s0 + $0x40] sm:$0xff]
    %v140 = vld [vmem:[%s0 + $0x48] sm:$0xff]
    %v141 = vld [vmem:[%s0 + $0x50] sm:$0xff]
    %v142 = vld [vmem:[%s0 + $0x58] sm:$0xff]
    %v143 = vld [vmem:[%s0 + $0x60] sm:$0xff]
    %v144 = vld [vmem:[%s0 + $0x68] sm:$0xff]
    %v145 = vld [vmem:[%s0 + $0x70] sm:$0xff]
    %v146 = vld [vmem:[%s0 + $0x78] sm:$0xff]
    %v147 = vld [vmem:[%s0 + $0x80] sm:$0xff]
    %v148 = vld [vmem:[%s0 + $0x88] sm:$0xff]
    %v149 = vld [vmem:[%s0 + $0x90] sm:$0xff]
    %v150 = vld [vmem:[%s0 + $0x98] sm:$0xff]
    %v151 = vld [vmem:[%s0 + $0xa0] sm:$0xff]
    %v152 = vld [vmem:[%s0 + $0xa8] sm:$0xff]
    %v153 = vld [vmem:[%s0 + $0xb0] sm:$0xff]
    %v154 = vld [vmem:[%s0 + $0xb8] sm:$0xff]
    %v155 = vld [vmem:[%s0 + $0xc0] sm:$0xff]
    %v156 = vld [vmem:[%s0 + $0xc8] sm:$0xff]
    %v157 = vld [vmem:[%s0 + $0xd0] sm:$0xff]
    %v158 = vld [vmem:[%s0 + $0xd8] sm:$0xff]
    %v159 = vld [vmem:[%s0 + $0xe0] sm:$0xff]
    %v160 = vld [vmem:[%s0 + $0xe8] sm:$0xff]
    %v161 = vld [vmem:[%s0 + $0xf0] sm:$0xff]
    %v162 = vld [vmem:[%s0 + $0xf8] sm:$0xff]
    %v163 = vld [vmem:[%s0 + $0x100] sm:$0xff]
    %v164 = vld [vmem:[%s0 + $0x108] sm:$0xff]
    %v165 = vld [vmem:[%s0 + $0x110] sm:$0xff]
    %v166 = vld [vmem:[%s0 + $0x118] sm:$0xff]
    %v167 = vld [vmem:[%s0 + $0x120] sm:$0xff]
    %v168 = vld [vmem:[%s0 + $0x128] sm:$0xff]
    %v169 = vld [vmem:[%s0 + $0x130] sm:$0xff]
    %v170 = vld [vmem:[%s0 + $0x138] sm:$0xff]
    %v171 = vld [vmem:[%s0 + $0x140] sm:$0xff]
    %v172 = vld [vmem:[%s0 + $0x148] sm:$0xff]
    %v173 = vld [vmem:[%s0 + $0x150] sm:$0xff]
    %v174 = vld [vmem:[%s0 + $0x158] sm:$0xff]
    %v175 = vld [vmem:[%s0 + $0x160] sm:$0xff]
    %v176 = vld [vmem:[%s0 + $0x168] sm:$0xff]
    %v177 = vld [vmem:[%s0 + $0x170] sm:$0xff]
    %v178 = vld [vmem:[%s0 + $0x178] sm:$0xff]
    %v179 = vld [vmem:[%s0 + $0x180] sm:$0xff]
    %v180 = vld [vmem:[%s0 + $0x188] sm:$0xff]
    %v181 = vld [vmem:[%s0 + $0x190] sm:$0xff]
    %v182 = vld [vmem:[%s0 + $0x198] sm:$0xff]
    %v183 = vld [vmem:[%s0 + $0x1a0] sm:$0xff]
    %v184 = vld [vmem:[%s0 + $0x1a8] sm:$0xff]
    %v185 = vld [vmem:[%s0 + $0x1b0] sm:$0xff]
    %v186 = vld [vmem:[%s0 + $0x1b8] sm:$0xff]
    %v187 = vld [vmem:[%s0 + $0x1c0] sm:$0xff]
    %v188 = vld [vmem:[%s0 + $0x1c8] sm:$0xff]
    %v189 = vld [vmem:[%s0 + $0x1d0] sm:$0xff]
    %v190 = vld [vmem:[%s0 + $0x1d8] sm:$0xff]
    %v191 = vld [vmem:[%s0 + $0x1e0] sm:$0xff]
    %v192 = vld [vmem:[%s0 + $0x1e8] sm:$0xff]
    %v193 = vld [vmem:[%s0 + $0x1f0] sm:$0xff]
    %v194 = vld [vmem:[%s0 + $0x1f8] sm:$0xff]
    %s195 = scalar_lea.vmem [#allocation2], 24
    %196 = vst.msk [vmem:[%s195 + $0x1] sm:$0xff] %vm21, %v131
    %197 = vst.msk [vmem:[%s195 + $0x9] sm:$0xff] %vm21, %v132
    %198 = vst.msk [vmem:[%s195 + $0x19] sm:$0xff] %vm21, %v133
    %199 = vst.msk [vmem:[%s195 + $0x21] sm:$0xff] %vm21, %v134
    %200 = vst.msk [vmem:[%s195 + $0x31] sm:$0xff] %vm21, %v135
    %201 = vst.msk [vmem:[%s195 + $0x39] sm:$0xff] %vm21, %v136
    %202 = vst.msk [vmem:[%s195 + $0x49] sm:$0xff] %vm21, %v137
    %203 = vst.msk [vmem:[%s195 + $0x51] sm:$0xff] %vm21, %v138
    %204 = vst.msk [vmem:[%s195 + $0x61] sm:$0xff] %vm21, %v139
    %205 = vst.msk [vmem:[%s195 + $0x69] sm:$0xff] %vm21, %v140
    %206 = vst.msk [vmem:[%s195 + $0x79] sm:$0xff] %vm21, %v141
    %207 = vst.msk [vmem:[%s195 + $0x81] sm:$0xff] %vm21, %v142
    %208 = vst.msk [vmem:[%s195 + $0x91] sm:$0xff] %vm21, %v143
    %209 = vst.msk [vmem:[%s195 + $0x99] sm:$0xff] %vm21, %v144
    %210 = vst.msk [vmem:[%s195 + $0xa9] sm:$0xff] %vm21, %v145
    %211 = vst.msk [vmem:[%s195 + $0xb1] sm:$0xff] %vm21, %v146
    %212 = vst.msk [vmem:[%s195 + $0xc1] sm:$0xff] %vm21, %v147
    %213 = vst.msk [vmem:[%s195 + $0xc9] sm:$0xff] %vm21, %v148
    %214 = vst.msk [vmem:[%s195 + $0xd9] sm:$0xff] %vm21, %v149
    %215 = vst.msk [vmem:[%s195 + $0xe1] sm:$0xff] %vm21, %v150
    %216 = vst.msk [vmem:[%s195 + $0xf1] sm:$0xff] %vm21, %v151
    %217 = vst.msk [vmem:[%s195 + $0xf9] sm:$0xff] %vm21, %v152
    %218 = vst.msk [vmem:[%s195 + $0x109] sm:$0xff] %vm21, %v153
    %219 = vst.msk [vmem:[%s195 + $0x111] sm:$0xff] %vm21, %v154
    %220 = vst.msk [vmem:[%s195 + $0x121] sm:$0xff] %vm21, %v155
    %221 = vst.msk [vmem:[%s195 + $0x129] sm:$0xff] %vm21, %v156
    %222 = vst.msk [vmem:[%s195 + $0x139] sm:$0xff] %vm21, %v157
    %223 = vst.msk [vmem:[%s195 + $0x141] sm:$0xff] %vm21, %v158
    %224 = vst.msk [vmem:[%s195 + $0x151] sm:$0xff] %vm21, %v159
    %225 = vst.msk [vmem:[%s195 + $0x159] sm:$0xff] %vm21, %v160
    %226 = vst.msk [vmem:[%s195 + $0x169] sm:$0xff] %vm21, %v161
    %227 = vst.msk [vmem:[%s195 + $0x171] sm:$0xff] %vm21, %v162
    %228 = vst.msk [vmem:[%s195 + $0x1b1] sm:$0xff] %vm21, %v163
    %229 = vst.msk [vmem:[%s195 + $0x1b9] sm:$0xff] %vm21, %v164
    %230 = vst.msk [vmem:[%s195 + $0x1c9] sm:$0xff] %vm21, %v165
    %231 = vst.msk [vmem:[%s195 + $0x1d1] sm:$0xff] %vm21, %v166
    %232 = vst.msk [vmem:[%s195 + $0x1e1] sm:$0xff] %vm21, %v167
    %233 = vst.msk [vmem:[%s195 + $0x1e9] sm:$0xff] %vm21, %v168
    %234 = vst.msk [vmem:[%s195 + $0x1f9] sm:$0xff] %vm21, %v169
    %235 = vst.msk [vmem:[%s195 + $0x201] sm:$0xff] %vm21, %v170
    %236 = vst.msk [vmem:[%s195 + $0x211] sm:$0xff] %vm21, %v171
    %237 = vst.msk [vmem:[%s195 + $0x219] sm:$0xff] %vm21, %v172
    %238 = vst.msk [vmem:[%s195 + $0x229] sm:$0xff] %vm21, %v173
    %239 = vst.msk [vmem:[%s195 + $0x231] sm:$0xff] %vm21, %v174
    %240 = vst.msk [vmem:[%s195 + $0x241] sm:$0xff] %vm21, %v175
    %241 = vst.msk [vmem:[%s195 + $0x249] sm:$0xff] %vm21, %v176
    %242 = vst.msk [vmem:[%s195 + $0x259] sm:$0xff] %vm21, %v177
    %243 = vst.msk [vmem:[%s195 + $0x261] sm:$0xff] %vm21, %v178
    %244 = vst.msk [vmem:[%s195 + $0x271] sm:$0xff] %vm21, %v179
    %245 = vst.msk [vmem:[%s195 + $0x279] sm:$0xff] %vm21, %v180
    %246 = vst.msk [vmem:[%s195 + $0x289] sm:$0xff] %vm21, %v181
    %247 = vst.msk [vmem:[%s195 + $0x291] sm:$0xff] %vm21, %v182
    %248 = vst.msk [vmem:[%s195 + $0x2a1] sm:$0xff] %vm21, %v183
    %249 = vst.msk [vmem:[%s195 + $0x2a9] sm:$0xff] %vm21, %v184
    %250 = vst.msk [vmem:[%s195 + $0x2b9] sm:$0xff] %vm21, %v185
    %251 = vst.msk [vmem:[%s195 + $0x2c1] sm:$0xff] %vm21, %v186
    %252 = vst.msk [vmem:[%s195 + $0x2d1] sm:$0xff] %vm21, %v187
    %253 = vst.msk [vmem:[%s195 + $0x2d9] sm:$0xff] %vm21, %v188
    %254 = vst.msk [vmem:[%s195 + $0x2e9] sm:$0xff] %vm21, %v189
    %255 = vst.msk [vmem:[%s195 + $0x2f1] sm:$0xff] %vm21, %v190
    %256 = vst.msk [vmem:[%s195 + $0x301] sm:$0xff] %vm21, %v191
    %257 = vst.msk [vmem:[%s195 + $0x309] sm:$0xff] %vm21, %v192
    %258 = vst.msk [vmem:[%s195 + $0x319] sm:$0xff] %vm21, %v193
    %259 = vst.msk [vmem:[%s195 + $0x321] sm:$0xff] %vm21, %v194
    %v260 = vld [vmem:[#allocation2] sm:$0xff]
    %v261 = vld [vmem:[#allocation2 + $0x8] sm:$0xff]
    %v262 = vld [vmem:[#allocation2 + $0x18] sm:$0xff]
    %v263 = vld [vmem:[#allocation2 + $0x20] sm:$0xff]
    %v264 = vld [vmem:[#allocation2 + $0x30] sm:$0xff]
    %v265 = vld [vmem:[#allocation2 + $0x38] sm:$0xff]
    %v266 = vld [vmem:[#allocation2 + $0x48] sm:$0xff]
    %v267 = vld [vmem:[#allocation2 + $0x50] sm:$0xff]
    %v268 = vld [vmem:[#allocation2 + $0x60] sm:$0xff]
    %v269 = vld [vmem:[#allocation2 + $0x68] sm:$0xff]
    %v270 = vld [vmem:[#allocation2 + $0x78] sm:$0xff]
    %v271 = vld [vmem:[#allocation2 + $0x80] sm:$0xff]
    %v272 = vld [vmem:[#allocation2 + $0x90] sm:$0xff]
    %v273 = vld [vmem:[#allocation2 + $0x98] sm:$0xff]
    %v274 = vld [vmem:[#allocation2 + $0xa8] sm:$0xff]
    %v275 = vld [vmem:[#allocation2 + $0xb0] sm:$0xff]
    %v276 = vld [vmem:[#allocation2 + $0xc0] sm:$0xff]
    %v277 = vld [vmem:[#allocation2 + $0xc8] sm:$0xff]
    %v278 = vld [vmem:[#allocation2 + $0xd8] sm:$0xff]
    %v279 = vld [vmem:[#allocation2 + $0xe0] sm:$0xff]
    %v280 = vld [vmem:[#allocation2 + $0xf0] sm:$0xff]
    %v281 = vld [vmem:[#allocation2 + $0xf8] sm:$0xff]
    %v282 = vld [vmem:[#allocation2 + $0x108] sm:$0xff]
    %v283 = vld [vmem:[#allocation2 + $0x110] sm:$0xff]
    %v284 = vld [vmem:[#allocation2 + $0x120] sm:$0xff]
    %v285 = vld [vmem:[#allocation2 + $0x128] sm:$0xff]
    %v286 = vld [vmem:[#allocation2 + $0x138] sm:$0xff]
    %v287 = vld [vmem:[#allocation2 + $0x140] sm:$0xff]
    %v288 = vld [vmem:[#allocation2 + $0x150] sm:$0xff]
    %v289 = vld [vmem:[#allocation2 + $0x158] sm:$0xff]
    %v290 = vld [vmem:[#allocation2 + $0x168] sm:$0xff]
    %v291 = vld [vmem:[#allocation2 + $0x170] sm:$0xff]
    %v292 = vld [vmem:[#allocation2 + $0x1b0] sm:$0xff]
    %v293 = vld [vmem:[#allocation2 + $0x1b8] sm:$0xff]
    %v294 = vld [vmem:[#allocation2 + $0x1c8] sm:$0xff]
    %v295 = vld [vmem:[#allocation2 + $0x1d0] sm:$0xff]
    %v296 = vld [vmem:[#allocation2 + $0x1e0] sm:$0xff]
    %v297 = vld [vmem:[#allocation2 + $0x1e8] sm:$0xff]
    %v298 = vld [vmem:[#allocation2 + $0x1f8] sm:$0xff]
    %v299 = vld [vmem:[#allocation2 + $0x200] sm:$0xff]
    %v300 = vld [vmem:[#allocation2 + $0x210] sm:$0xff]
    %v301 = vld [vmem:[#allocation2 + $0x218] sm:$0xff]
    %v302 = vld [vmem:[#allocation2 + $0x228] sm:$0xff]
    %v303 = vld [vmem:[#allocation2 + $0x230] sm:$0xff]
    %v304 = vld [vmem:[#allocation2 + $0x240] sm:$0xff]
    %v305 = vld [vmem:[#allocation2 + $0x248] sm:$0xff]
    %v306 = vld [vmem:[#allocation2 + $0x258] sm:$0xff]
    %v307 = vld [vmem:[#allocation2 + $0x260] sm:$0xff]
    %v308 = vld [vmem:[#allocation2 + $0x270] sm:$0xff]
    %v309 = vld [vmem:[#allocation2 + $0x278] sm:$0xff]
    %v310 = vld [vmem:[#allocation2 + $0x288] sm:$0xff]
    %v311 = vld [vmem:[#allocation2 + $0x290] sm:$0xff]
    %v312 = vld [vmem:[#allocation2 + $0x2a0] sm:$0xff]
    %v313 = vld [vmem:[#allocation2 + $0x2a8] sm:$0xff]
    %v314 = vld [vmem:[#allocation2 + $0x2b8] sm:$0xff]
    %v315 = vld [vmem:[#allocation2 + $0x2c0] sm:$0xff]
    %v316 = vld [vmem:[#allocation2 + $0x2d0] sm:$0xff]
    %v317 = vld [vmem:[#allocation2 + $0x2d8] sm:$0xff]
    %v318 = vld [vmem:[#allocation2 + $0x2e8] sm:$0xff]
    %v319 = vld [vmem:[#allocation2 + $0x2f0] sm:$0xff]
    %v320 = vld [vmem:[#allocation2 + $0x300] sm:$0xff]
    %v321 = vld [vmem:[#allocation2 + $0x308] sm:$0xff]
    %v322 = vld [vmem:[#allocation2 + $0x318] sm:$0xff]
    %v323 = vld [vmem:[#allocation2 + $0x320] sm:$0xff]
    %v324 = vld [vmem:[#allocation2 + $0x1] sm:$0xff]
    %v325 = vld [vmem:[#allocation2 + $0x9] sm:$0xff]
    %v326 = vld [vmem:[#allocation2 + $0x19] sm:$0xff]
    %v327 = vld [vmem:[#allocation2 + $0x21] sm:$0xff]
    %v328 = vld [vmem:[#allocation2 + $0x31] sm:$0xff]
    %v329 = vld [vmem:[#allocation2 + $0x39] sm:$0xff]
    %v330 = vld [vmem:[#allocation2 + $0x49] sm:$0xff]
    %v331 = vld [vmem:[#allocation2 + $0x51] sm:$0xff]
    %v332 = vld [vmem:[#allocation2 + $0x61] sm:$0xff]
    %v333 = vld [vmem:[#allocation2 + $0x69] sm:$0xff]
    %v334 = vld [vmem:[#allocation2 + $0x79] sm:$0xff]
    %v335 = vld [vmem:[#allocation2 + $0x81] sm:$0xff]
    %v336 = vld [vmem:[#allocation2 + $0x91] sm:$0xff]
    %v337 = vld [vmem:[#allocation2 + $0x99] sm:$0xff]
    %v338 = vld [vmem:[#allocation2 + $0xa9] sm:$0xff]
    %v339 = vld [vmem:[#allocation2 + $0xb1] sm:$0xff]
    %v340 = vld [vmem:[#allocation2 + $0xc1] sm:$0xff]
    %v341 = vld [vmem:[#allocation2 + $0xc9] sm:$0xff]
    %v342 = vld [vmem:[#allocation2 + $0xd9] sm:$0xff]
    %v343 = vld [vmem:[#allocation2 + $0xe1] sm:$0xff]
    %v344 = vld [vmem:[#allocation2 + $0xf1] sm:$0xff]
    %v345 = vld [vmem:[#allocation2 + $0xf9] sm:$0xff]
    %v346 = vld [vmem:[#allocation2 + $0x109] sm:$0xff]
    %v347 = vld [vmem:[#allocation2 + $0x111] sm:$0xff]
    %v348 = vld [vmem:[#allocation2 + $0x121] sm:$0xff]
    %v349 = vld [vmem:[#allocation2 + $0x129] sm:$0xff]
    %v350 = vld [vmem:[#allocation2 + $0x139] sm:$0xff]
    %v351 = vld [vmem:[#allocation2 + $0x141] sm:$0xff]
    %v352 = vld [vmem:[#allocation2 + $0x151] sm:$0xff]
    %v353 = vld [vmem:[#allocation2 + $0x159] sm:$0xff]
    %v354 = vld [vmem:[#allocation2 + $0x169] sm:$0xff]
    %v355 = vld [vmem:[#allocation2 + $0x171] sm:$0xff]
    %v356 = vld [vmem:[#allocation2 + $0x1b1] sm:$0xff]
    %v357 = vld [vmem:[#allocation2 + $0x1b9] sm:$0xff]
    %v358 = vld [vmem:[#allocation2 + $0x1c9] sm:$0xff]
    %v359 = vld [vmem:[#allocation2 + $0x1d1] sm:$0xff]
    %v360 = vld [vmem:[#allocation2 + $0x1e1] sm:$0xff]
    %v361 = vld [vmem:[#allocation2 + $0x1e9] sm:$0xff]
    %v362 = vld [vmem:[#allocation2 + $0x1f9] sm:$0xff]
    %v363 = vld [vmem:[#allocation2 + $0x201] sm:$0xff]
    %v364 = vld [vmem:[#allocation2 + $0x211] sm:$0xff]
    %v365 = vld [vmem:[#allocation2 + $0x219] sm:$0xff]
    %v366 = vld [vmem:[#allocation2 + $0x229] sm:$0xff]
    %v367 = vld [vmem:[#allocation2 + $0x231] sm:$0xff]
    %v368 = vld [vmem:[#allocation2 + $0x241] sm:$0xff]
    %v369 = vld [vmem:[#allocation2 + $0x249] sm:$0xff]
    %v370 = vld [vmem:[#allocation2 + $0x259] sm:$0xff]
    %v371 = vld [vmem:[#allocation2 + $0x261] sm:$0xff]
    %v372 = vld [vmem:[#allocation2 + $0x271] sm:$0xff]
    %v373 = vld [vmem:[#allocation2 + $0x279] sm:$0xff]
    %v374 = vld [vmem:[#allocation2 + $0x289] sm:$0xff]
    %v375 = vld [vmem:[#allocation2 + $0x291] sm:$0xff]
    %v376 = vld [vmem:[#allocation2 + $0x2a1] sm:$0xff]
    %v377 = vld [vmem:[#allocation2 + $0x2a9] sm:$0xff]
    %v378 = vld [vmem:[#allocation2 + $0x2b9] sm:$0xff]
    %v379 = vld [vmem:[#allocation2 + $0x2c1] sm:$0xff]
    %v380 = vld [vmem:[#allocation2 + $0x2d1] sm:$0xff]
    %v381 = vld [vmem:[#allocation2 + $0x2d9] sm:$0xff]
    %v382 = vld [vmem:[#allocation2 + $0x2e9] sm:$0xff]
    %v383 = vld [vmem:[#allocation2 + $0x2f1] sm:$0xff]
    %v384 = vld [vmem:[#allocation2 + $0x301] sm:$0xff]
    %v385 = vld [vmem:[#allocation2 + $0x309] sm:$0xff]
    %v386 = vld [vmem:[#allocation2 + $0x319] sm:$0xff]
    %v387 = vld [vmem:[#allocation2 + $0x321] sm:$0xff]
    %v388 = vld [vmem:[#allocation2 + $0x2] sm:$0xff]
    %v389 = vld [vmem:[#allocation2 + $0xa] sm:$0xff]
    %v390 = vld [vmem:[#allocation2 + $0x1a] sm:$0xff]
    %v391 = vld [vmem:[#allocation2 + $0x22] sm:$0xff]
    %v392 = vld [vmem:[#allocation2 + $0x32] sm:$0xff]
    %v393 = vld [vmem:[#allocation2 + $0x3a] sm:$0xff]
    %v394 = vld [vmem:[#allocation2 + $0x4a] sm:$0xff]
    %v395 = vld [vmem:[#allocation2 + $0x52] sm:$0xff]
    %v396 = vld [vmem:[#allocation2 + $0x62] sm:$0xff]
    %v397 = vld [vmem:[#allocation2 + $0x6a] sm:$0xff]
    %v398 = vld [vmem:[#allocation2 + $0x7a] sm:$0xff]
    %v399 = vld [vmem:[#allocation2 + $0x82] sm:$0xff]
    %v400 = vld [vmem:[#allocation2 + $0x92] sm:$0xff]
    %v401 = vld [vmem:[#allocation2 + $0x9a] sm:$0xff]
    %v402 = vld [vmem:[#allocation2 + $0xaa] sm:$0xff]
    %v403 = vld [vmem:[#allocation2 + $0xb2] sm:$0xff]
    %v404 = vld [vmem:[#allocation2 + $0xc2] sm:$0xff]
    %v405 = vld [vmem:[#allocation2 + $0xca] sm:$0xff]
    %v406 = vld [vmem:[#allocation2 + $0xda] sm:$0xff]
    %v407 = vld [vmem:[#allocation2 + $0xe2] sm:$0xff]
    %v408 = vld [vmem:[#allocation2 + $0xf2] sm:$0xff]
    %v409 = vld [vmem:[#allocation2 + $0xfa] sm:$0xff]
    %v410 = vld [vmem:[#allocation2 + $0x10a] sm:$0xff]
    %v411 = vld [vmem:[#allocation2 + $0x112] sm:$0xff]
    %v412 = vld [vmem:[#allocation2 + $0x122] sm:$0xff]
    %v413 = vld [vmem:[#allocation2 + $0x12a] sm:$0xff]
    %v414 = vld [vmem:[#allocation2 + $0x13a] sm:$0xff]
    %v415 = vld [vmem:[#allocation2 + $0x142] sm:$0xff]
    %v416 = vld [vmem:[#allocation2 + $0x152] sm:$0xff]
    %v417 = vld [vmem:[#allocation2 + $0x15a] sm:$0xff]
    %v418 = vld [vmem:[#allocation2 + $0x16a] sm:$0xff]
    %v419 = vld [vmem:[#allocation2 + $0x172] sm:$0xff]
    %v420 = vld [vmem:[#allocation2 + $0x1b2] sm:$0xff]
    %v421 = vld [vmem:[#allocation2 + $0x1ba] sm:$0xff]
    %v422 = vld [vmem:[#allocation2 + $0x1ca] sm:$0xff]
    %v423 = vld [vmem:[#allocation2 + $0x1d2] sm:$0xff]
    %v424 = vld [vmem:[#allocation2 + $0x1e2] sm:$0xff]
    %v425 = vld [vmem:[#allocation2 + $0x1ea] sm:$0xff]
    %v426 = vld [vmem:[#allocation2 + $0x1fa] sm:$0xff]
    %v427 = vld [vmem:[#allocation2 + $0x202] sm:$0xff]
    %v428 = vld [vmem:[#allocation2 + $0x212] sm:$0xff]
    %v429 = vld [vmem:[#allocation2 + $0x21a] sm:$0xff]
    %v430 = vld [vmem:[#allocation2 + $0x22a] sm:$0xff]
    %v431 = vld [vmem:[#allocation2 + $0x232] sm:$0xff]
    %v432 = vld [vmem:[#allocation2 + $0x242] sm:$0xff]
    %v433 = vld [vmem:[#allocation2 + $0x24a] sm:$0xff]
    %v434 = vld [vmem:[#allocation2 + $0x25a] sm:$0xff]
    %v435 = vld [vmem:[#allocation2 + $0x262] sm:$0xff]
    %v436 = vld [vmem:[#allocation2 + $0x272] sm:$0xff]
    %v437 = vld [vmem:[#allocation2 + $0x27a] sm:$0xff]
    %v438 = vld [vmem:[#allocation2 + $0x28a] sm:$0xff]
    %v439 = vld [vmem:[#allocation2 + $0x292] sm:$0xff]
    %v440 = vld [vmem:[#allocation2 + $0x2a2] sm:$0xff]
    %v441 = vld [vmem:[#allocation2 + $0x2aa] sm:$0xff]
    %v442 = vld [vmem:[#allocation2 + $0x2ba] sm:$0xff]
    %v443 = vld [vmem:[#allocation2 + $0x2c2] sm:$0xff]
    %v444 = vld [vmem:[#allocation2 + $0x2d2] sm:$0xff]
    %v445 = vld [vmem:[#allocation2 + $0x2da] sm:$0xff]
    %v446 = vld [vmem:[#allocation2 + $0x2ea] sm:$0xff]
    %v447 = vld [vmem:[#allocation2 + $0x2f2] sm:$0xff]
    %v448 = vld [vmem:[#allocation2 + $0x302] sm:$0xff]
    %v449 = vld [vmem:[#allocation2 + $0x30a] sm:$0xff]
    %v450 = vld [vmem:[#allocation2 + $0x31a] sm:$0xff]
    %v451 = vld [vmem:[#allocation2 + $0x322] sm:$0xff]
    %v452 = vld [vmem:[%s195] sm:$0xff]
    %v453 = vld [vmem:[%s195 + $0x8] sm:$0xff]
    %v454 = vld [vmem:[%s195 + $0x18] sm:$0xff]
    %v455 = vld [vmem:[%s195 + $0x20] sm:$0xff]
    %v456 = vld [vmem:[%s195 + $0x30] sm:$0xff]
    %v457 = vld [vmem:[%s195 + $0x38] sm:$0xff]
    %v458 = vld [vmem:[%s195 + $0x48] sm:$0xff]
    %v459 = vld [vmem:[%s195 + $0x50] sm:$0xff]
    %v460 = vld [vmem:[%s195 + $0x60] sm:$0xff]
    %v461 = vld [vmem:[%s195 + $0x68] sm:$0xff]
    %v462 = vld [vmem:[%s195 + $0x78] sm:$0xff]
    %v463 = vld [vmem:[%s195 + $0x80] sm:$0xff]
    %v464 = vld [vmem:[%s195 + $0x90] sm:$0xff]
    %v465 = vld [vmem:[%s195 + $0x98] sm:$0xff]
    %v466 = vld [vmem:[%s195 + $0xa8] sm:$0xff]
    %v467 = vld [vmem:[%s195 + $0xb0] sm:$0xff]
    %v468 = vld [vmem:[%s195 + $0xc0] sm:$0xff]
    %v469 = vld [vmem:[%s195 + $0xc8] sm:$0xff]
    %v470 = vld [vmem:[%s195 + $0xd8] sm:$0xff]
    %v471 = vld [vmem:[%s195 + $0xe0] sm:$0xff]
    %v472 = vld [vmem:[%s195 + $0xf0] sm:$0xff]
    %v473 = vld [vmem:[%s195 + $0xf8] sm:$0xff]
    %v474 = vld [vmem:[%s195 + $0x108] sm:$0xff]
    %v475 = vld [vmem:[%s195 + $0x110] sm:$0xff]
    %v476 = vld [vmem:[%s195 + $0x120] sm:$0xff]
    %v477 = vld [vmem:[%s195 + $0x128] sm:$0xff]
    %v478 = vld [vmem:[%s195 + $0x138] sm:$0xff]
    %v479 = vld [vmem:[%s195 + $0x140] sm:$0xff]
    %v480 = vld [vmem:[%s195 + $0x150] sm:$0xff]
    %v481 = vld [vmem:[%s195 + $0x158] sm:$0xff]
    %v482 = vld [vmem:[%s195 + $0x168] sm:$0xff]
    %v483 = vld [vmem:[%s195 + $0x170] sm:$0xff]
    %v484 = vld [vmem:[%s195 + $0x1b0] sm:$0xff]
    %v485 = vld [vmem:[%s195 + $0x1b8] sm:$0xff]
    %v486 = vld [vmem:[%s195 + $0x1c8] sm:$0xff]
    %v487 = vld [vmem:[%s195 + $0x1d0] sm:$0xff]
    %v488 = vld [vmem:[%s195 + $0x1e0] sm:$0xff]
    %v489 = vld [vmem:[%s195 + $0x1e8] sm:$0xff]
    %v490 = vld [vmem:[%s195 + $0x1f8] sm:$0xff]
    %v491 = vld [vmem:[%s195 + $0x200] sm:$0xff]
    %v492 = vld [vmem:[%s195 + $0x210] sm:$0xff]
    %v493 = vld [vmem:[%s195 + $0x218] sm:$0xff]
    %v494 = vld [vmem:[%s195 + $0x228] sm:$0xff]
    %v495 = vld [vmem:[%s195 + $0x230] sm:$0xff]
    %v496 = vld [vmem:[%s195 + $0x240] sm:$0xff]
    %v497 = vld [vmem:[%s195 + $0x248] sm:$0xff]
    %v498 = vld [vmem:[%s195 + $0x258] sm:$0xff]
    %v499 = vld [vmem:[%s195 + $0x260] sm:$0xff]
    %v500 = vld [vmem:[%s195 + $0x270] sm:$0xff]
    %v501 = vld [vmem:[%s195 + $0x278] sm:$0xff]
    %v502 = vld [vmem:[%s195 + $0x288] sm:$0xff]
    %v503 = vld [vmem:[%s195 + $0x290] sm:$0xff]
    %v504 = vld [vmem:[%s195 + $0x2a0] sm:$0xff]
    %v505 = vld [vmem:[%s195 + $0x2a8] sm:$0xff]
    %v506 = vld [vmem:[%s195 + $0x2b8] sm:$0xff]
    %v507 = vld [vmem:[%s195 + $0x2c0] sm:$0xff]
    %v508 = vld [vmem:[%s195 + $0x2d0] sm:$0xff]
    %v509 = vld [vmem:[%s195 + $0x2d8] sm:$0xff]
    %v510 = vld [vmem:[%s195 + $0x2e8] sm:$0xff]
    %v511 = vld [vmem:[%s195 + $0x2f0] sm:$0xff]
    %v512 = vld [vmem:[%s195 + $0x300] sm:$0xff]
    %v513 = vld [vmem:[%s195 + $0x308] sm:$0xff]
    %v514 = vld [vmem:[%s195 + $0x318] sm:$0xff]
    %v515 = vld [vmem:[%s195 + $0x320] sm:$0xff]
    %v516 = vld [vmem:[%s195 + $0x1] sm:$0xff]
    %v517 = vld [vmem:[%s195 + $0x9] sm:$0xff]
    %v518 = vld [vmem:[%s195 + $0x19] sm:$0xff]
    %v519 = vld [vmem:[%s195 + $0x21] sm:$0xff]
    %v520 = vld [vmem:[%s195 + $0x31] sm:$0xff]
    %v521 = vld [vmem:[%s195 + $0x39] sm:$0xff]
    %v522 = vld [vmem:[%s195 + $0x49] sm:$0xff]
    %v523 = vld [vmem:[%s195 + $0x51] sm:$0xff]
    %v524 = vld [vmem:[%s195 + $0x61] sm:$0xff]
    %v525 = vld [vmem:[%s195 + $0x69] sm:$0xff]
    %v526 = vld [vmem:[%s195 + $0x79] sm:$0xff]
    %v527 = vld [vmem:[%s195 + $0x81] sm:$0xff]
    %v528 = vld [vmem:[%s195 + $0x91] sm:$0xff]
    %v529 = vld [vmem:[%s195 + $0x99] sm:$0xff]
    %v530 = vld [vmem:[%s195 + $0xa9] sm:$0xff]
    %v531 = vld [vmem:[%s195 + $0xb1] sm:$0xff]
    %v532 = vld [vmem:[%s195 + $0xc1] sm:$0xff]
    %v533 = vld [vmem:[%s195 + $0xc9] sm:$0xff]
    %v534 = vld [vmem:[%s195 + $0xd9] sm:$0xff]
    %v535 = vld [vmem:[%s195 + $0xe1] sm:$0xff]
    %v536 = vld [vmem:[%s195 + $0xf1] sm:$0xff]
    %v537 = vld [vmem:[%s195 + $0xf9] sm:$0xff]
    %v538 = vld [vmem:[%s195 + $0x109] sm:$0xff]
    %v539 = vld [vmem:[%s195 + $0x111] sm:$0xff]
    %v540 = vld [vmem:[%s195 + $0x121] sm:$0xff]
    %v541 = vld [vmem:[%s195 + $0x129] sm:$0xff]
    %v542 = vld [vmem:[%s195 + $0x139] sm:$0xff]
    %v543 = vld [vmem:[%s195 + $0x141] sm:$0xff]
    %v544 = vld [vmem:[%s195 + $0x151] sm:$0xff]
    %v545 = vld [vmem:[%s195 + $0x159] sm:$0xff]
    %v546 = vld [vmem:[%s195 + $0x169] sm:$0xff]
    %v547 = vld [vmem:[%s195 + $0x171] sm:$0xff]
    %v548 = vld [vmem:[%s195 + $0x1b1] sm:$0xff]
    %v549 = vld [vmem:[%s195 + $0x1b9] sm:$0xff]
    %v550 = vld [vmem:[%s195 + $0x1c9] sm:$0xff]
    %v551 = vld [vmem:[%s195 + $0x1d1] sm:$0xff]
    %v552 = vld [vmem:[%s195 + $0x1e1] sm:$0xff]
    %v553 = vld [vmem:[%s195 + $0x1e9] sm:$0xff]
    %v554 = vld [vmem:[%s195 + $0x1f9] sm:$0xff]
    %v555 = vld [vmem:[%s195 + $0x201] sm:$0xff]
    %v556 = vld [vmem:[%s195 + $0x211] sm:$0xff]
    %v557 = vld [vmem:[%s195 + $0x219] sm:$0xff]
    %v558 = vld [vmem:[%s195 + $0x229] sm:$0xff]
    %v559 = vld [vmem:[%s195 + $0x231] sm:$0xff]
    %v560 = vld [vmem:[%s195 + $0x241] sm:$0xff]
    %v561 = vld [vmem:[%s195 + $0x249] sm:$0xff]
    %v562 = vld [vmem:[%s195 + $0x259] sm:$0xff]
    %v563 = vld [vmem:[%s195 + $0x261] sm:$0xff]
    %v564 = vld [vmem:[%s195 + $0x271] sm:$0xff]
    %v565 = vld [vmem:[%s195 + $0x279] sm:$0xff]
    %v566 = vld [vmem:[%s195 + $0x289] sm:$0xff]
    %v567 = vld [vmem:[%s195 + $0x291] sm:$0xff]
    %v568 = vld [vmem:[%s195 + $0x2a1] sm:$0xff]
    %v569 = vld [vmem:[%s195 + $0x2a9] sm:$0xff]
    %v570 = vld [vmem:[%s195 + $0x2b9] sm:$0xff]
    %v571 = vld [vmem:[%s195 + $0x2c1] sm:$0xff]
    %v572 = vld [vmem:[%s195 + $0x2d1] sm:$0xff]
    %v573 = vld [vmem:[%s195 + $0x2d9] sm:$0xff]
    %v574 = vld [vmem:[%s195 + $0x2e9] sm:$0xff]
    %v575 = vld [vmem:[%s195 + $0x2f1] sm:$0xff]
    %v576 = vld [vmem:[%s195 + $0x301] sm:$0xff]
    %v577 = vld [vmem:[%s195 + $0x309] sm:$0xff]
    %v578 = vld [vmem:[%s195 + $0x319] sm:$0xff]
    %v579 = vld [vmem:[%s195 + $0x321] sm:$0xff]
    %v580 = vld [vmem:[%s195 + $0x2] sm:$0xff]
    %v581 = vld [vmem:[%s195 + $0xa] sm:$0xff]
    %v582 = vld [vmem:[%s195 + $0x1a] sm:$0xff]
    %v583 = vld [vmem:[%s195 + $0x22] sm:$0xff]
    %v584 = vld [vmem:[%s195 + $0x32] sm:$0xff]
    %v585 = vld [vmem:[%s195 + $0x3a] sm:$0xff]
    %v586 = vld [vmem:[%s195 + $0x4a] sm:$0xff]
    %v587 = vld [vmem:[%s195 + $0x52] sm:$0xff]
    %v588 = vld [vmem:[%s195 + $0x62] sm:$0xff]
    %v589 = vld [vmem:[%s195 + $0x6a] sm:$0xff]
    %v590 = vld [vmem:[%s195 + $0x7a] sm:$0xff]
    %v591 = vld [vmem:[%s195 + $0x82] sm:$0xff]
    %v592 = vld [vmem:[%s195 + $0x92] sm:$0xff]
    %v593 = vld [vmem:[%s195 + $0x9a] sm:$0xff]
    %v594 = vld [vmem:[%s195 + $0xaa] sm:$0xff]
    %v595 = vld [vmem:[%s195 + $0xb2] sm:$0xff]
    %v596 = vld [vmem:[%s195 + $0xc2] sm:$0xff]
    %v597 = vld [vmem:[%s195 + $0xca] sm:$0xff]
    %v598 = vld [vmem:[%s195 + $0xda] sm:$0xff]
    %v599 = vld [vmem:[%s195 + $0xe2] sm:$0xff]
    %v600 = vld [vmem:[%s195 + $0xf2] sm:$0xff]
    %v601 = vld [vmem:[%s195 + $0xfa] sm:$0xff]
    %v602 = vld [vmem:[%s195 + $0x10a] sm:$0xff]
    %v603 = vld [vmem:[%s195 + $0x112] sm:$0xff]
    %v604 = vld [vmem:[%s195 + $0x122] sm:$0xff]
    %v605 = vld [vmem:[%s195 + $0x12a] sm:$0xff]
    %v606 = vld [vmem:[%s195 + $0x13a] sm:$0xff]
    %v607 = vld [vmem:[%s195 + $0x142] sm:$0xff]
    %v608 = vld [vmem:[%s195 + $0x152] sm:$0xff]
    %v609 = vld [vmem:[%s195 + $0x15a] sm:$0xff]
    %v610 = vld [vmem:[%s195 + $0x16a] sm:$0xff]
    %v611 = vld [vmem:[%s195 + $0x172] sm:$0xff]
    %v612 = vld [vmem:[%s195 + $0x1b2] sm:$0xff]
    %v613 = vld [vmem:[%s195 + $0x1ba] sm:$0xff]
    %v614 = vld [vmem:[%s195 + $0x1ca] sm:$0xff]
    %v615 = vld [vmem:[%s195 + $0x1d2] sm:$0xff]
    %v616 = vld [vmem:[%s195 + $0x1e2] sm:$0xff]
    %v617 = vld [vmem:[%s195 + $0x1ea] sm:$0xff]
    %v618 = vld [vmem:[%s195 + $0x1fa] sm:$0xff]
    %v619 = vld [vmem:[%s195 + $0x202] sm:$0xff]
    %v620 = vld [vmem:[%s195 + $0x212] sm:$0xff]
    %v621 = vld [vmem:[%s195 + $0x21a] sm:$0xff]
    %v622 = vld [vmem:[%s195 + $0x22a] sm:$0xff]
    %v623 = vld [vmem:[%s195 + $0x232] sm:$0xff]
    %v624 = vld [vmem:[%s195 + $0x242] sm:$0xff]
    %v625 = vld [vmem:[%s195 + $0x24a] sm:$0xff]
    %v626 = vld [vmem:[%s195 + $0x25a] sm:$0xff]
    %v627 = vld [vmem:[%s195 + $0x262] sm:$0xff]
    %v628 = vld [vmem:[%s195 + $0x272] sm:$0xff]
    %v629 = vld [vmem:[%s195 + $0x27a] sm:$0xff]
    %v630 = vld [vmem:[%s195 + $0x28a] sm:$0xff]
    %v631 = vld [vmem:[%s195 + $0x292] sm:$0xff]
    %v632 = vld [vmem:[%s195 + $0x2a2] sm:$0xff]
    %v633 = vld [vmem:[%s195 + $0x2aa] sm:$0xff]
    %v634 = vld [vmem:[%s195 + $0x2ba] sm:$0xff]
    %v635 = vld [vmem:[%s195 + $0x2c2] sm:$0xff]
    %v636 = vld [vmem:[%s195 + $0x2d2] sm:$0xff]
    %v637 = vld [vmem:[%s195 + $0x2da] sm:$0xff]
    %v638 = vld [vmem:[%s195 + $0x2ea] sm:$0xff]
    %v639 = vld [vmem:[%s195 + $0x2f2] sm:$0xff]
    %v640 = vld [vmem:[%s195 + $0x302] sm:$0xff]
    %v641 = vld [vmem:[%s195 + $0x30a] sm:$0xff]
    %v642 = vld [vmem:[%s195 + $0x31a] sm:$0xff]
    %v643 = vld [vmem:[%s195 + $0x322] sm:$0xff]
    %s644 = scalar_lea.vmem [#allocation2], 48
    %v645 = vld [vmem:[%s644] sm:$0xff]
    %v646 = vld [vmem:[%s644 + $0x8] sm:$0xff]
    %v647 = vld [vmem:[%s644 + $0x18] sm:$0xff]
    %v648 = vld [vmem:[%s644 + $0x20] sm:$0xff]
    %v649 = vld [vmem:[%s644 + $0x30] sm:$0xff]
    %v650 = vld [vmem:[%s644 + $0x38] sm:$0xff]
    %v651 = vld [vmem:[%s644 + $0x48] sm:$0xff]
    %v652 = vld [vmem:[%s644 + $0x50] sm:$0xff]
    %v653 = vld [vmem:[%s644 + $0x60] sm:$0xff]
    %v654 = vld [vmem:[%s644 + $0x68] sm:$0xff]
    %v655 = vld [vmem:[%s644 + $0x78] sm:$0xff]
    %v656 = vld [vmem:[%s644 + $0x80] sm:$0xff]
    %v657 = vld [vmem:[%s644 + $0x90] sm:$0xff]
    %v658 = vld [vmem:[%s644 + $0x98] sm:$0xff]
    %v659 = vld [vmem:[%s644 + $0xa8] sm:$0xff]
    %v660 = vld [vmem:[%s644 + $0xb0] sm:$0xff]
    %v661 = vld [vmem:[%s644 + $0xc0] sm:$0xff]
    %v662 = vld [vmem:[%s644 + $0xc8] sm:$0xff]
    %v663 = vld [vmem:[%s644 + $0xd8] sm:$0xff]
    %v664 = vld [vmem:[%s644 + $0xe0] sm:$0xff]
    %v665 = vld [vmem:[%s644 + $0xf0] sm:$0xff]
    %v666 = vld [vmem:[%s644 + $0xf8] sm:$0xff]
    %v667 = vld [vmem:[%s644 + $0x108] sm:$0xff]
    %v668 = vld [vmem:[%s644 + $0x110] sm:$0xff]
    %v669 = vld [vmem:[%s644 + $0x120] sm:$0xff]
    %v670 = vld [vmem:[%s644 + $0x128] sm:$0xff]
    %v671 = vld [vmem:[%s644 + $0x138] sm:$0xff]
    %v672 = vld [vmem:[%s644 + $0x140] sm:$0xff]
    %v673 = vld [vmem:[%s644 + $0x150] sm:$0xff]
    %v674 = vld [vmem:[%s644 + $0x158] sm:$0xff]
    %v675 = vld [vmem:[%s644 + $0x168] sm:$0xff]
    %v676 = vld [vmem:[%s644 + $0x170] sm:$0xff]
    %v677 = vld [vmem:[%s644 + $0x1b0] sm:$0xff]
    %v678 = vld [vmem:[%s644 + $0x1b8] sm:$0xff]
    %v679 = vld [vmem:[%s644 + $0x1c8] sm:$0xff]
    %v680 = vld [vmem:[%s644 + $0x1d0] sm:$0xff]
    %v681 = vld [vmem:[%s644 + $0x1e0] sm:$0xff]
    %v682 = vld [vmem:[%s644 + $0x1e8] sm:$0xff]
    %v683 = vld [vmem:[%s644 + $0x1f8] sm:$0xff]
    %v684 = vld [vmem:[%s644 + $0x200] sm:$0xff]
    %v685 = vld [vmem:[%s644 + $0x210] sm:$0xff]
    %v686 = vld [vmem:[%s644 + $0x218] sm:$0xff]
    %v687 = vld [vmem:[%s644 + $0x228] sm:$0xff]
    %v688 = vld [vmem:[%s644 + $0x230] sm:$0xff]
    %v689 = vld [vmem:[%s644 + $0x240] sm:$0xff]
    %v690 = vld [vmem:[%s644 + $0x248] sm:$0xff]
    %v691 = vld [vmem:[%s644 + $0x258] sm:$0xff]
    %v692 = vld [vmem:[%s644 + $0x260] sm:$0xff]
    %v693 = vld [vmem:[%s644 + $0x270] sm:$0xff]
    %v694 = vld [vmem:[%s644 + $0x278] sm:$0xff]
    %v695 = vld [vmem:[%s644 + $0x288] sm:$0xff]
    %v696 = vld [vmem:[%s644 + $0x290] sm:$0xff]
    %v697 = vld [vmem:[%s644 + $0x2a0] sm:$0xff]
    %v698 = vld [vmem:[%s644 + $0x2a8] sm:$0xff]
    %v699 = vld [vmem:[%s644 + $0x2b8] sm:$0xff]
    %v700 = vld [vmem:[%s644 + $0x2c0] sm:$0xff]
    %v701 = vld [vmem:[%s644 + $0x2d0] sm:$0xff]
    %v702 = vld [vmem:[%s644 + $0x2d8] sm:$0xff]
    %v703 = vld [vmem:[%s644 + $0x2e8] sm:$0xff]
    %v704 = vld [vmem:[%s644 + $0x2f0] sm:$0xff]
    %v705 = vld [vmem:[%s644 + $0x300] sm:$0xff]
    %v706 = vld [vmem:[%s644 + $0x308] sm:$0xff]
    %v707 = vld [vmem:[%s644 + $0x318] sm:$0xff]
    %v708 = vld [vmem:[%s644 + $0x320] sm:$0xff]
    %v709 = vld [vmem:[%s644 + $0x1] sm:$0xff]
    %v710 = vld [vmem:[%s644 + $0x9] sm:$0xff]
    %v711 = vld [vmem:[%s644 + $0x19] sm:$0xff]
    %v712 = vld [vmem:[%s644 + $0x21] sm:$0xff]
    %v713 = vld [vmem:[%s644 + $0x31] sm:$0xff]
    %v714 = vld [vmem:[%s644 + $0x39] sm:$0xff]
    %v715 = vld [vmem:[%s644 + $0x49] sm:$0xff]
    %v716 = vld [vmem:[%s644 + $0x51] sm:$0xff]
    %v717 = vld [vmem:[%s644 + $0x61] sm:$0xff]
    %v718 = vld [vmem:[%s644 + $0x69] sm:$0xff]
    %v719 = vld [vmem:[%s644 + $0x79] sm:$0xff]
    %v720 = vld [vmem:[%s644 + $0x81] sm:$0xff]
    %v721 = vld [vmem:[%s644 + $0x91] sm:$0xff]
    %v722 = vld [vmem:[%s644 + $0x99] sm:$0xff]
    %v723 = vld [vmem:[%s644 + $0xa9] sm:$0xff]
    %v724 = vld [vmem:[%s644 + $0xb1] sm:$0xff]
    %v725 = vld [vmem:[%s644 + $0xc1] sm:$0xff]
    %v726 = vld [vmem:[%s644 + $0xc9] sm:$0xff]
    %v727 = vld [vmem:[%s644 + $0xd9] sm:$0xff]
    %v728 = vld [vmem:[%s644 + $0xe1] sm:$0xff]
    %v729 = vld [vmem:[%s644 + $0xf1] sm:$0xff]
    %v730 = vld [vmem:[%s644 + $0xf9] sm:$0xff]
    %v731 = vld [vmem:[%s644 + $0x109] sm:$0xff]
    %v732 = vld [vmem:[%s644 + $0x111] sm:$0xff]
    %v733 = vld [vmem:[%s644 + $0x121] sm:$0xff]
    %v734 = vld [vmem:[%s644 + $0x129] sm:$0xff]
    %v735 = vld [vmem:[%s644 + $0x139] sm:$0xff]
    %v736 = vld [vmem:[%s644 + $0x141] sm:$0xff]
    %v737 = vld [vmem:[%s644 + $0x151] sm:$0xff]
    %v738 = vld [vmem:[%s644 + $0x159] sm:$0xff]
    %v739 = vld [vmem:[%s644 + $0x169] sm:$0xff]
    %v740 = vld [vmem:[%s644 + $0x171] sm:$0xff]
    %v741 = vld [vmem:[%s644 + $0x1b1] sm:$0xff]
    %v742 = vld [vmem:[%s644 + $0x1b9] sm:$0xff]
    %v743 = vld [vmem:[%s644 + $0x1c9] sm:$0xff]
    %v744 = vld [vmem:[%s644 + $0x1d1] sm:$0xff]
    %v745 = vld [vmem:[%s644 + $0x1e1] sm:$0xff]
    %v746 = vld [vmem:[%s644 + $0x1e9] sm:$0xff]
    %v747 = vld [vmem:[%s644 + $0x1f9] sm:$0xff]
    %v748 = vld [vmem:[%s644 + $0x201] sm:$0xff]
    %v749 = vld [vmem:[%s644 + $0x211] sm:$0xff]
    %v750 = vld [vmem:[%s644 + $0x219] sm:$0xff]
    %v751 = vld [vmem:[%s644 + $0x229] sm:$0xff]
    %v752 = vld [vmem:[%s644 + $0x231] sm:$0xff]
    %v753 = vld [vmem:[%s644 + $0x241] sm:$0xff]
    %v754 = vld [vmem:[%s644 + $0x249] sm:$0xff]
    %v755 = vld [vmem:[%s644 + $0x259] sm:$0xff]
    %v756 = vld [vmem:[%s644 + $0x261] sm:$0xff]
    %v757 = vld [vmem:[%s644 + $0x271] sm:$0xff]
    %v758 = vld [vmem:[%s644 + $0x279] sm:$0xff]
    %v759 = vld [vmem:[%s644 + $0x289] sm:$0xff]
    %v760 = vld [vmem:[%s644 + $0x291] sm:$0xff]
    %v761 = vld [vmem:[%s644 + $0x2a1] sm:$0xff]
    %v762 = vld [vmem:[%s644 + $0x2a9] sm:$0xff]
    %v763 = vld [vmem:[%s644 + $0x2b9] sm:$0xff]
    %v764 = vld [vmem:[%s644 + $0x2c1] sm:$0xff]
    %v765 = vld [vmem:[%s644 + $0x2d1] sm:$0xff]
    %v766 = vld [vmem:[%s644 + $0x2d9] sm:$0xff]
    %v767 = vld [vmem:[%s644 + $0x2e9] sm:$0xff]
    %v768 = vld [vmem:[%s644 + $0x2f1] sm:$0xff]
    %v769 = vld [vmem:[%s644 + $0x301] sm:$0xff]
    %v770 = vld [vmem:[%s644 + $0x309] sm:$0xff]
    %v771 = vld [vmem:[%s644 + $0x319] sm:$0xff]
    %v772 = vld [vmem:[%s644 + $0x321] sm:$0xff]
    %v773 = vld [vmem:[%s644 + $0x2] sm:$0xff]
    %v774 = vld [vmem:[%s644 + $0xa] sm:$0xff]
    %v775 = vld [vmem:[%s644 + $0x1a] sm:$0xff]
    %v776 = vld [vmem:[%s644 + $0x22] sm:$0xff]
    %v777 = vld [vmem:[%s644 + $0x32] sm:$0xff]
    %v778 = vld [vmem:[%s644 + $0x3a] sm:$0xff]
    %v779 = vld [vmem:[%s644 + $0x4a] sm:$0xff]
    %v780 = vld [vmem:[%s644 + $0x52] sm:$0xff]
    %v781 = vld [vmem:[%s644 + $0x62] sm:$0xff]
    %v782 = vld [vmem:[%s644 + $0x6a] sm:$0xff]
    %v783 = vld [vmem:[%s644 + $0x7a] sm:$0xff]
    %v784 = vld [vmem:[%s644 + $0x82] sm:$0xff]
    %v785 = vld [vmem:[%s644 + $0x92] sm:$0xff]
    %v786 = vld [vmem:[%s644 + $0x9a] sm:$0xff]
    %v787 = vld [vmem:[%s644 + $0xaa] sm:$0xff]
    %v788 = vld [vmem:[%s644 + $0xb2] sm:$0xff]
    %v789 = vld [vmem:[%s644 + $0xc2] sm:$0xff]
    %v790 = vld [vmem:[%s644 + $0xca] sm:$0xff]
    %v791 = vld [vmem:[%s644 + $0xda] sm:$0xff]
    %v792 = vld [vmem:[%s644 + $0xe2] sm:$0xff]
    %v793 = vld [vmem:[%s644 + $0xf2] sm:$0xff]
    %v794 = vld [vmem:[%s644 + $0xfa] sm:$0xff]
    %v795 = vld [vmem:[%s644 + $0x10a] sm:$0xff]
    %v796 = vld [vmem:[%s644 + $0x112] sm:$0xff]
    %v797 = vld [vmem:[%s644 + $0x122] sm:$0xff]
    %v798 = vld [vmem:[%s644 + $0x12a] sm:$0xff]
    %v799 = vld [vmem:[%s644 + $0x13a] sm:$0xff]
    %v800 = vld [vmem:[%s644 + $0x142] sm:$0xff]
    %v801 = vld [vmem:[%s644 + $0x152] sm:$0xff]
    %v802 = vld [vmem:[%s644 + $0x15a] sm:$0xff]
    %v803 = vld [vmem:[%s644 + $0x16a] sm:$0xff]
    %v804 = vld [vmem:[%s644 + $0x172] sm:$0xff]
    %v805 = vld [vmem:[%s644 + $0x1b2] sm:$0xff]
    %v806 = vld [vmem:[%s644 + $0x1ba] sm:$0xff]
    %v807 = vld [vmem:[%s644 + $0x1ca] sm:$0xff]
    %v808 = vld [vmem:[%s644 + $0x1d2] sm:$0xff]
    %v809 = vld [vmem:[%s644 + $0x1e2] sm:$0xff]
    %v810 = vld [vmem:[%s644 + $0x1ea] sm:$0xff]
    %v811 = vld [vmem:[%s644 + $0x1fa] sm:$0xff]
    %v812 = vld [vmem:[%s644 + $0x202] sm:$0xff]
    %v813 = vld [vmem:[%s644 + $0x212] sm:$0xff]
    %v814 = vld [vmem:[%s644 + $0x21a] sm:$0xff]
    %v815 = vld [vmem:[%s644 + $0x22a] sm:$0xff]
    %v816 = vld [vmem:[%s644 + $0x232] sm:$0xff]
    %v817 = vld [vmem:[%s644 + $0x242] sm:$0xff]
    %v818 = vld [vmem:[%s644 + $0x24a] sm:$0xff]
    %v819 = vld [vmem:[%s644 + $0x25a] sm:$0xff]
    %v820 = vld [vmem:[%s644 + $0x262] sm:$0xff]
    %v821 = vld [vmem:[%s644 + $0x272] sm:$0xff]
    %v822 = vld [vmem:[%s644 + $0x27a] sm:$0xff]
    %v823 = vld [vmem:[%s644 + $0x28a] sm:$0xff]
    %v824 = vld [vmem:[%s644 + $0x292] sm:$0xff]
    %v825 = vld [vmem:[%s644 + $0x2a2] sm:$0xff]
    %v826 = vld [vmem:[%s644 + $0x2aa] sm:$0xff]
    %v827 = vld [vmem:[%s644 + $0x2ba] sm:$0xff]
    %v828 = vld [vmem:[%s644 + $0x2c2] sm:$0xff]
    %v829 = vld [vmem:[%s644 + $0x2d2] sm:$0xff]
    %v830 = vld [vmem:[%s644 + $0x2da] sm:$0xff]
    %v831 = vld [vmem:[%s644 + $0x2ea] sm:$0xff]
    %v832 = vld [vmem:[%s644 + $0x2f2] sm:$0xff]
    %v833 = vld [vmem:[%s644 + $0x302] sm:$0xff]
    %v834 = vld [vmem:[%s644 + $0x30a] sm:$0xff]
    %v835 = vld [vmem:[%s644 + $0x31a] sm:$0xff]
    %v836 = vld [vmem:[%s644 + $0x322] sm:$0xff]
    %901 = vrot.lane.b32.xlu0 %v324, 4
    %v902 = vpop.permute.xlu0 %901
    %903 = vrot.lane.b32.xlu0 %v325, 4
    %v904 = vpop.permute.xlu0 %903
    %905 = vrot.lane.b32.xlu0 %v326, 4
    %v906 = vpop.permute.xlu0 %905
    %907 = vrot.lane.b32.xlu0 %v327, 4
    %v908 = vpop.permute.xlu0 %907
    %909 = vrot.lane.b32.xlu0 %v328, 4
    %v910 = vpop.permute.xlu0 %909
    %911 = vrot.lane.b32.xlu0 %v329, 4
    %v912 = vpop.permute.xlu0 %911
    %913 = vrot.lane.b32.xlu0 %v330, 4
    %v914 = vpop.permute.xlu0 %913
    %915 = vrot.lane.b32.xlu0 %v331, 4
    %v916 = vpop.permute.xlu0 %915
    %917 = vrot.lane.b32.xlu0 %v332, 4
    %v918 = vpop.permute.xlu0 %917
    %919 = vrot.lane.b32.xlu0 %v333, 4
    %v920 = vpop.permute.xlu0 %919
    %921 = vrot.lane.b32.xlu0 %v334, 4
    %v922 = vpop.permute.xlu0 %921
    %923 = vrot.lane.b32.xlu0 %v335, 4
    %v924 = vpop.permute.xlu0 %923
    %925 = vrot.lane.b32.xlu0 %v336, 4
    %v926 = vpop.permute.xlu0 %925
    %927 = vrot.lane.b32.xlu0 %v337, 4
    %v928 = vpop.permute.xlu0 %927
    %929 = vrot.lane.b32.xlu0 %v338, 4
    %v930 = vpop.permute.xlu0 %929
    %931 = vrot.lane.b32.xlu0 %v339, 4
    %v932 = vpop.permute.xlu0 %931
    %933 = vrot.lane.b32.xlu0 %v340, 4
    %v934 = vpop.permute.xlu0 %933
    %935 = vrot.lane.b32.xlu0 %v341, 4
    %v936 = vpop.permute.xlu0 %935
    %937 = vrot.lane.b32.xlu0 %v342, 4
    %v938 = vpop.permute.xlu0 %937
    %939 = vrot.lane.b32.xlu0 %v343, 4
    %v940 = vpop.permute.xlu0 %939
    %941 = vrot.lane.b32.xlu0 %v344, 4
    %v942 = vpop.permute.xlu0 %941
    %943 = vrot.lane.b32.xlu0 %v345, 4
    %v944 = vpop.permute.xlu0 %943
    %945 = vrot.lane.b32.xlu0 %v346, 4
    %v946 = vpop.permute.xlu0 %945
    %947 = vrot.lane.b32.xlu0 %v347, 4
    %v948 = vpop.permute.xlu0 %947
    %949 = vrot.lane.b32.xlu0 %v348, 4
    %v950 = vpop.permute.xlu0 %949
    %951 = vrot.lane.b32.xlu0 %v349, 4
    %v952 = vpop.permute.xlu0 %951
    %953 = vrot.lane.b32.xlu0 %v350, 4
    %v954 = vpop.permute.xlu0 %953
    %955 = vrot.lane.b32.xlu0 %v351, 4
    %v956 = vpop.permute.xlu0 %955
    %957 = vrot.lane.b32.xlu0 %v352, 4
    %v958 = vpop.permute.xlu0 %957
    %959 = vrot.lane.b32.xlu0 %v353, 4
    %v960 = vpop.permute.xlu0 %959
    %961 = vrot.lane.b32.xlu0 %v354, 4
    %v962 = vpop.permute.xlu0 %961
    %963 = vrot.lane.b32.xlu0 %v355, 4
    %v964 = vpop.permute.xlu0 %963
    %965 = vrot.lane.b32.xlu0 %v356, 4
    %v966 = vpop.permute.xlu0 %965
    %967 = vrot.lane.b32.xlu0 %v357, 4
    %v968 = vpop.permute.xlu0 %967
    %969 = vrot.lane.b32.xlu0 %v358, 4
    %v970 = vpop.permute.xlu0 %969
    %971 = vrot.lane.b32.xlu0 %v359, 4
    %v972 = vpop.permute.xlu0 %971
    %973 = vrot.lane.b32.xlu0 %v360, 4
    %v974 = vpop.permute.xlu0 %973
    %975 = vrot.lane.b32.xlu0 %v361, 4
    %v976 = vpop.permute.xlu0 %975
    %977 = vrot.lane.b32.xlu0 %v362, 4
    %v978 = vpop.permute.xlu0 %977
    %979 = vrot.lane.b32.xlu0 %v363, 4
    %v980 = vpop.permute.xlu0 %979
    %981 = vrot.lane.b32.xlu0 %v364, 4
    %v982 = vpop.permute.xlu0 %981
    %983 = vrot.lane.b32.xlu0 %v365, 4
    %v984 = vpop.permute.xlu0 %983
    %985 = vrot.lane.b32.xlu0 %v366, 4
    %v986 = vpop.permute.xlu0 %985
    %987 = vrot.lane.b32.xlu0 %v367, 4
    %v988 = vpop.permute.xlu0 %987
    %989 = vrot.lane.b32.xlu0 %v368, 4
    %v990 = vpop.permute.xlu0 %989
    %991 = vrot.lane.b32.xlu0 %v369, 4
    %v992 = vpop.permute.xlu0 %991
    %993 = vrot.lane.b32.xlu0 %v370, 4
    %v994 = vpop.permute.xlu0 %993
    %995 = vrot.lane.b32.xlu0 %v371, 4
    %v996 = vpop.permute.xlu0 %995
    %997 = vrot.lane.b32.xlu0 %v372, 4
    %v998 = vpop.permute.xlu0 %997
    %999 = vrot.lane.b32.xlu0 %v373, 4
    %v1000 = vpop.permute.xlu0 %999
    %1001 = vrot.lane.b32.xlu0 %v374, 4
    %v1002 = vpop.permute.xlu0 %1001
    %1003 = vrot.lane.b32.xlu0 %v375, 4
    %v1004 = vpop.permute.xlu0 %1003
    %1005 = vrot.lane.b32.xlu0 %v376, 4
    %v1006 = vpop.permute.xlu0 %1005
    %1007 = vrot.lane.b32.xlu0 %v377, 4
    %v1008 = vpop.permute.xlu0 %1007
    %1009 = vrot.lane.b32.xlu0 %v378, 4
    %v1010 = vpop.permute.xlu0 %1009
    %1011 = vrot.lane.b32.xlu0 %v379, 4
    %v1012 = vpop.permute.xlu0 %1011
    %1013 = vrot.lane.b32.xlu0 %v380, 4
    %v1014 = vpop.permute.xlu0 %1013
    %1015 = vrot.lane.b32.xlu0 %v381, 4
    %v1016 = vpop.permute.xlu0 %1015
    %1017 = vrot.lane.b32.xlu0 %v382, 4
    %v1018 = vpop.permute.xlu0 %1017
    %1019 = vrot.lane.b32.xlu0 %v383, 4
    %v1020 = vpop.permute.xlu0 %1019
    %1021 = vrot.lane.b32.xlu0 %v384, 4
    %v1022 = vpop.permute.xlu0 %1021
    %1023 = vrot.lane.b32.xlu0 %v385, 4
    %v1024 = vpop.permute.xlu0 %1023
    %1025 = vrot.lane.b32.xlu0 %v386, 4
    %v1026 = vpop.permute.xlu0 %1025
    %1027 = vrot.lane.b32.xlu0 %v387, 4
    %v1028 = vpop.permute.xlu0 %1027
    %1157 = vrot.lane.b32.xlu0 %v388, 8
    %v1158 = vpop.permute.xlu0 %1157
    %1159 = vrot.lane.b32.xlu0 %v389, 8
    %v1160 = vpop.permute.xlu0 %1159
    %1161 = vrot.lane.b32.xlu0 %v390, 8
    %v1162 = vpop.permute.xlu0 %1161
    %1163 = vrot.lane.b32.xlu0 %v391, 8
    %v1164 = vpop.permute.xlu0 %1163
    %1165 = vrot.lane.b32.xlu0 %v392, 8
    %v1166 = vpop.permute.xlu0 %1165
    %1167 = vrot.lane.b32.xlu0 %v393, 8
    %v1168 = vpop.permute.xlu0 %1167
    %1169 = vrot.lane.b32.xlu0 %v394, 8
    %v1170 = vpop.permute.xlu0 %1169
    %1171 = vrot.lane.b32.xlu0 %v395, 8
    %v1172 = vpop.permute.xlu0 %1171
    %1173 = vrot.lane.b32.xlu0 %v396, 8
    %v1174 = vpop.permute.xlu0 %1173
    %1175 = vrot.lane.b32.xlu0 %v397, 8
    %v1176 = vpop.permute.xlu0 %1175
    %1177 = vrot.lane.b32.xlu0 %v398, 8
    %v1178 = vpop.permute.xlu0 %1177
    %1179 = vrot.lane.b32.xlu0 %v399, 8
    %v1180 = vpop.permute.xlu0 %1179
    %1181 = vrot.lane.b32.xlu0 %v400, 8
    %v1182 = vpop.permute.xlu0 %1181
    %1183 = vrot.lane.b32.xlu0 %v401, 8
    %v1184 = vpop.permute.xlu0 %1183
    %1185 = vrot.lane.b32.xlu0 %v402, 8
    %v1186 = vpop.permute.xlu0 %1185
    %1187 = vrot.lane.b32.xlu0 %v403, 8
    %v1188 = vpop.permute.xlu0 %1187
    %1189 = vrot.lane.b32.xlu0 %v404, 8
    %v1190 = vpop.permute.xlu0 %1189
    %1191 = vrot.lane.b32.xlu0 %v405, 8
    %v1192 = vpop.permute.xlu0 %1191
    %1193 = vrot.lane.b32.xlu0 %v406, 8
    %v1194 = vpop.permute.xlu0 %1193
    %1195 = vrot.lane.b32.xlu0 %v407, 8
    %v1196 = vpop.permute.xlu0 %1195
    %1197 = vrot.lane.b32.xlu0 %v408, 8
    %v1198 = vpop.permute.xlu0 %1197
    %1199 = vrot.lane.b32.xlu0 %v409, 8
    %v1200 = vpop.permute.xlu0 %1199
    %1201 = vrot.lane.b32.xlu0 %v410, 8
    %v1202 = vpop.permute.xlu0 %1201
    %1203 = vrot.lane.b32.xlu0 %v411, 8
    %v1204 = vpop.permute.xlu0 %1203
    %1205 = vrot.lane.b32.xlu0 %v412, 8
    %v1206 = vpop.permute.xlu0 %1205
    %1207 = vrot.lane.b32.xlu0 %v413, 8
    %v1208 = vpop.permute.xlu0 %1207
    %1209 = vrot.lane.b32.xlu0 %v414, 8
    %v1210 = vpop.permute.xlu0 %1209
    %1211 = vrot.lane.b32.xlu0 %v415, 8
    %v1212 = vpop.permute.xlu0 %1211
    %1213 = vrot.lane.b32.xlu0 %v416, 8
    %v1214 = vpop.permute.xlu0 %1213
    %1215 = vrot.lane.b32.xlu0 %v417, 8
    %v1216 = vpop.permute.xlu0 %1215
    %1217 = vrot.lane.b32.xlu0 %v418, 8
    %v1218 = vpop.permute.xlu0 %1217
    %1219 = vrot.lane.b32.xlu0 %v419, 8
    %v1220 = vpop.permute.xlu0 %1219
    %1221 = vrot.lane.b32.xlu0 %v420, 8
    %v1222 = vpop.permute.xlu0 %1221
    %1223 = vrot.lane.b32.xlu0 %v421, 8
    %v1224 = vpop.permute.xlu0 %1223
    %1225 = vrot.lane.b32.xlu0 %v422, 8
    %v1226 = vpop.permute.xlu0 %1225
    %1227 = vrot.lane.b32.xlu0 %v423, 8
    %v1228 = vpop.permute.xlu0 %1227
    %1229 = vrot.lane.b32.xlu0 %v424, 8
    %v1230 = vpop.permute.xlu0 %1229
    %1231 = vrot.lane.b32.xlu0 %v425, 8
    %v1232 = vpop.permute.xlu0 %1231
    %1233 = vrot.lane.b32.xlu0 %v426, 8
    %v1234 = vpop.permute.xlu0 %1233
    %1235 = vrot.lane.b32.xlu0 %v427, 8
    %v1236 = vpop.permute.xlu0 %1235
    %1237 = vrot.lane.b32.xlu0 %v428, 8
    %v1238 = vpop.permute.xlu0 %1237
    %1239 = vrot.lane.b32.xlu0 %v429, 8
    %v1240 = vpop.permute.xlu0 %1239
    %1241 = vrot.lane.b32.xlu0 %v430, 8
    %v1242 = vpop.permute.xlu0 %1241
    %1243 = vrot.lane.b32.xlu0 %v431, 8
    %v1244 = vpop.permute.xlu0 %1243
    %1245 = vrot.lane.b32.xlu0 %v432, 8
    %v1246 = vpop.permute.xlu0 %1245
    %1247 = vrot.lane.b32.xlu0 %v433, 8
    %v1248 = vpop.permute.xlu0 %1247
    %1249 = vrot.lane.b32.xlu0 %v434, 8
    %v1250 = vpop.permute.xlu0 %1249
    %1251 = vrot.lane.b32.xlu0 %v435, 8
    %v1252 = vpop.permute.xlu0 %1251
    %1253 = vrot.lane.b32.xlu0 %v436, 8
    %v1254 = vpop.permute.xlu0 %1253
    %1255 = vrot.lane.b32.xlu0 %v437, 8
    %v1256 = vpop.permute.xlu0 %1255
    %1257 = vrot.lane.b32.xlu0 %v438, 8
    %v1258 = vpop.permute.xlu0 %1257
    %1259 = vrot.lane.b32.xlu0 %v439, 8
    %v1260 = vpop.permute.xlu0 %1259
    %1261 = vrot.lane.b32.xlu0 %v440, 8
    %v1262 = vpop.permute.xlu0 %1261
    %1263 = vrot.lane.b32.xlu0 %v441, 8
    %v1264 = vpop.permute.xlu0 %1263
    %1265 = vrot.lane.b32.xlu0 %v442, 8
    %v1266 = vpop.permute.xlu0 %1265
    %1267 = vrot.lane.b32.xlu0 %v443, 8
    %v1268 = vpop.permute.xlu0 %1267
    %1269 = vrot.lane.b32.xlu0 %v444, 8
    %v1270 = vpop.permute.xlu0 %1269
    %1271 = vrot.lane.b32.xlu0 %v445, 8
    %v1272 = vpop.permute.xlu0 %1271
    %1273 = vrot.lane.b32.xlu0 %v446, 8
    %v1274 = vpop.permute.xlu0 %1273
    %1275 = vrot.lane.b32.xlu0 %v447, 8
    %v1276 = vpop.permute.xlu0 %1275
    %1277 = vrot.lane.b32.xlu0 %v448, 8
    %v1278 = vpop.permute.xlu0 %1277
    %1279 = vrot.lane.b32.xlu0 %v449, 8
    %v1280 = vpop.permute.xlu0 %1279
    %1281 = vrot.lane.b32.xlu0 %v450, 8
    %v1282 = vpop.permute.xlu0 %1281
    %1283 = vrot.lane.b32.xlu0 %v451, 8
    %v1284 = vpop.permute.xlu0 %1283
    %1413 = vrot.lane.b32.xlu0 %v452, 12
    %v1414 = vpop.permute.xlu0 %1413
    %1415 = vrot.lane.b32.xlu0 %v453, 12
    %v1416 = vpop.permute.xlu0 %1415
    %1417 = vrot.lane.b32.xlu0 %v454, 12
    %v1418 = vpop.permute.xlu0 %1417
    %1419 = vrot.lane.b32.xlu0 %v455, 12
    %v1420 = vpop.permute.xlu0 %1419
    %1421 = vrot.lane.b32.xlu0 %v456, 12
    %v1422 = vpop.permute.xlu0 %1421
    %1423 = vrot.lane.b32.xlu0 %v457, 12
    %v1424 = vpop.permute.xlu0 %1423
    %1425 = vrot.lane.b32.xlu0 %v458, 12
    %v1426 = vpop.permute.xlu0 %1425
    %1427 = vrot.lane.b32.xlu0 %v459, 12
    %v1428 = vpop.permute.xlu0 %1427
    %1429 = vrot.lane.b32.xlu0 %v460, 12
    %v1430 = vpop.permute.xlu0 %1429
    %1431 = vrot.lane.b32.xlu0 %v461, 12
    %v1432 = vpop.permute.xlu0 %1431
    %1433 = vrot.lane.b32.xlu0 %v462, 12
    %v1434 = vpop.permute.xlu0 %1433
    %1435 = vrot.lane.b32.xlu0 %v463, 12
    %v1436 = vpop.permute.xlu0 %1435
    %1437 = vrot.lane.b32.xlu0 %v464, 12
    %v1438 = vpop.permute.xlu0 %1437
    %1439 = vrot.lane.b32.xlu0 %v465, 12
    %v1440 = vpop.permute.xlu0 %1439
    %1441 = vrot.lane.b32.xlu0 %v466, 12
    %v1442 = vpop.permute.xlu0 %1441
    %1443 = vrot.lane.b32.xlu0 %v467, 12
    %v1444 = vpop.permute.xlu0 %1443
    %1445 = vrot.lane.b32.xlu0 %v468, 12
    %v1446 = vpop.permute.xlu0 %1445
    %1447 = vrot.lane.b32.xlu0 %v469, 12
    %v1448 = vpop.permute.xlu0 %1447
    %1449 = vrot.lane.b32.xlu0 %v470, 12
    %v1450 = vpop.permute.xlu0 %1449
    %1451 = vrot.lane.b32.xlu0 %v471, 12
    %v1452 = vpop.permute.xlu0 %1451
    %1453 = vrot.lane.b32.xlu0 %v472, 12
    %v1454 = vpop.permute.xlu0 %1453
    %1455 = vrot.lane.b32.xlu0 %v473, 12
    %v1456 = vpop.permute.xlu0 %1455
    %1457 = vrot.lane.b32.xlu0 %v474, 12
    %v1458 = vpop.permute.xlu0 %1457
    %1459 = vrot.lane.b32.xlu0 %v475, 12
    %v1460 = vpop.permute.xlu0 %1459
    %1461 = vrot.lane.b32.xlu0 %v476, 12
    %v1462 = vpop.permute.xlu0 %1461
    %1463 = vrot.lane.b32.xlu0 %v477, 12
    %v1464 = vpop.permute.xlu0 %1463
    %1465 = vrot.lane.b32.xlu0 %v478, 12
    %v1466 = vpop.permute.xlu0 %1465
    %1467 = vrot.lane.b32.xlu0 %v479, 12
    %v1468 = vpop.permute.xlu0 %1467
    %1469 = vrot.lane.b32.xlu0 %v480, 12
    %v1470 = vpop.permute.xlu0 %1469
    %1471 = vrot.lane.b32.xlu0 %v481, 12
    %v1472 = vpop.permute.xlu0 %1471
    %1473 = vrot.lane.b32.xlu0 %v482, 12
    %v1474 = vpop.permute.xlu0 %1473
    %1475 = vrot.lane.b32.xlu0 %v483, 12
    %v1476 = vpop.permute.xlu0 %1475
    %1477 = vrot.lane.b32.xlu0 %v484, 12
    %v1478 = vpop.permute.xlu0 %1477
    %1479 = vrot.lane.b32.xlu0 %v485, 12
    %v1480 = vpop.permute.xlu0 %1479
    %1481 = vrot.lane.b32.xlu0 %v486, 12
    %v1482 = vpop.permute.xlu0 %1481
    %1483 = vrot.lane.b32.xlu0 %v487, 12
    %v1484 = vpop.permute.xlu0 %1483
    %1485 = vrot.lane.b32.xlu0 %v488, 12
    %v1486 = vpop.permute.xlu0 %1485
    %1487 = vrot.lane.b32.xlu0 %v489, 12
    %v1488 = vpop.permute.xlu0 %1487
    %1489 = vrot.lane.b32.xlu0 %v490, 12
    %v1490 = vpop.permute.xlu0 %1489
    %1491 = vrot.lane.b32.xlu0 %v491, 12
    %v1492 = vpop.permute.xlu0 %1491
    %1493 = vrot.lane.b32.xlu0 %v492, 12
    %v1494 = vpop.permute.xlu0 %1493
    %1495 = vrot.lane.b32.xlu0 %v493, 12
    %v1496 = vpop.permute.xlu0 %1495
    %1497 = vrot.lane.b32.xlu0 %v494, 12
    %v1498 = vpop.permute.xlu0 %1497
    %1499 = vrot.lane.b32.xlu0 %v495, 12
    %v1500 = vpop.permute.xlu0 %1499
    %1501 = vrot.lane.b32.xlu0 %v496, 12
    %v1502 = vpop.permute.xlu0 %1501
    %1503 = vrot.lane.b32.xlu0 %v497, 12
    %v1504 = vpop.permute.xlu0 %1503
    %1505 = vrot.lane.b32.xlu0 %v498, 12
    %v1506 = vpop.permute.xlu0 %1505
    %1507 = vrot.lane.b32.xlu0 %v499, 12
    %v1508 = vpop.permute.xlu0 %1507
    %1509 = vrot.lane.b32.xlu0 %v500, 12
    %v1510 = vpop.permute.xlu0 %1509
    %1511 = vrot.lane.b32.xlu0 %v501, 12
    %v1512 = vpop.permute.xlu0 %1511
    %1513 = vrot.lane.b32.xlu0 %v502, 12
    %v1514 = vpop.permute.xlu0 %1513
    %1515 = vrot.lane.b32.xlu0 %v503, 12
    %v1516 = vpop.permute.xlu0 %1515
    %1517 = vrot.lane.b32.xlu0 %v504, 12
    %v1518 = vpop.permute.xlu0 %1517
    %1519 = vrot.lane.b32.xlu0 %v505, 12
    %v1520 = vpop.permute.xlu0 %1519
    %1521 = vrot.lane.b32.xlu0 %v506, 12
    %v1522 = vpop.permute.xlu0 %1521
    %1523 = vrot.lane.b32.xlu0 %v507, 12
    %v1524 = vpop.permute.xlu0 %1523
    %1525 = vrot.lane.b32.xlu0 %v508, 12
    %v1526 = vpop.permute.xlu0 %1525
    %1527 = vrot.lane.b32.xlu0 %v509, 12
    %v1528 = vpop.permute.xlu0 %1527
    %1529 = vrot.lane.b32.xlu0 %v510, 12
    %v1530 = vpop.permute.xlu0 %1529
    %1531 = vrot.lane.b32.xlu0 %v511, 12
    %v1532 = vpop.permute.xlu0 %1531
    %1533 = vrot.lane.b32.xlu0 %v512, 12
    %v1534 = vpop.permute.xlu0 %1533
    %1535 = vrot.lane.b32.xlu0 %v513, 12
    %v1536 = vpop.permute.xlu0 %1535
    %1537 = vrot.lane.b32.xlu0 %v514, 12
    %v1538 = vpop.permute.xlu0 %1537
    %1539 = vrot.lane.b32.xlu0 %v515, 12
    %v1540 = vpop.permute.xlu0 %1539
    %1669 = vrot.lane.b32.xlu0 %v516, 16
    %v1670 = vpop.permute.xlu0 %1669
    %1671 = vrot.lane.b32.xlu0 %v517, 16
    %v1672 = vpop.permute.xlu0 %1671
    %1673 = vrot.lane.b32.xlu0 %v518, 16
    %v1674 = vpop.permute.xlu0 %1673
    %1675 = vrot.lane.b32.xlu0 %v519, 16
    %v1676 = vpop.permute.xlu0 %1675
    %1677 = vrot.lane.b32.xlu0 %v520, 16
    %v1678 = vpop.permute.xlu0 %1677
    %1679 = vrot.lane.b32.xlu0 %v521, 16
    %v1680 = vpop.permute.xlu0 %1679
    %1681 = vrot.lane.b32.xlu0 %v522, 16
    %v1682 = vpop.permute.xlu0 %1681
    %1683 = vrot.lane.b32.xlu0 %v523, 16
    %v1684 = vpop.permute.xlu0 %1683
    %1685 = vrot.lane.b32.xlu0 %v524, 16
    %v1686 = vpop.permute.xlu0 %1685
    %1687 = vrot.lane.b32.xlu0 %v525, 16
    %v1688 = vpop.permute.xlu0 %1687
    %1689 = vrot.lane.b32.xlu0 %v526, 16
    %v1690 = vpop.permute.xlu0 %1689
    %1691 = vrot.lane.b32.xlu0 %v527, 16
    %v1692 = vpop.permute.xlu0 %1691
    %1693 = vrot.lane.b32.xlu0 %v528, 16
    %v1694 = vpop.permute.xlu0 %1693
    %1695 = vrot.lane.b32.xlu0 %v529, 16
    %v1696 = vpop.permute.xlu0 %1695
    %1697 = vrot.lane.b32.xlu0 %v530, 16
    %v1698 = vpop.permute.xlu0 %1697
    %1699 = vrot.lane.b32.xlu0 %v531, 16
    %v1700 = vpop.permute.xlu0 %1699
    %1701 = vrot.lane.b32.xlu0 %v532, 16
    %v1702 = vpop.permute.xlu0 %1701
    %1703 = vrot.lane.b32.xlu0 %v533, 16
    %v1704 = vpop.permute.xlu0 %1703
    %1705 = vrot.lane.b32.xlu0 %v534, 16
    %v1706 = vpop.permute.xlu0 %1705
    %1707 = vrot.lane.b32.xlu0 %v535, 16
    %v1708 = vpop.permute.xlu0 %1707
    %1709 = vrot.lane.b32.xlu0 %v536, 16
    %v1710 = vpop.permute.xlu0 %1709
    %1711 = vrot.lane.b32.xlu0 %v537, 16
    %v1712 = vpop.permute.xlu0 %1711
    %1713 = vrot.lane.b32.xlu0 %v538, 16
    %v1714 = vpop.permute.xlu0 %1713
    %1715 = vrot.lane.b32.xlu0 %v539, 16
    %v1716 = vpop.permute.xlu0 %1715
    %1717 = vrot.lane.b32.xlu0 %v540, 16
    %v1718 = vpop.permute.xlu0 %1717
    %1719 = vrot.lane.b32.xlu0 %v541, 16
    %v1720 = vpop.permute.xlu0 %1719
    %1721 = vrot.lane.b32.xlu0 %v542, 16
    %v1722 = vpop.permute.xlu0 %1721
    %1723 = vrot.lane.b32.xlu0 %v543, 16
    %v1724 = vpop.permute.xlu0 %1723
    %1725 = vrot.lane.b32.xlu0 %v544, 16
    %v1726 = vpop.permute.xlu0 %1725
    %1727 = vrot.lane.b32.xlu0 %v545, 16
    %v1728 = vpop.permute.xlu0 %1727
    %1729 = vrot.lane.b32.xlu0 %v546, 16
    %v1730 = vpop.permute.xlu0 %1729
    %1731 = vrot.lane.b32.xlu0 %v547, 16
    %v1732 = vpop.permute.xlu0 %1731
    %1733 = vrot.lane.b32.xlu0 %v548, 16
    %v1734 = vpop.permute.xlu0 %1733
    %1735 = vrot.lane.b32.xlu0 %v549, 16
    %v1736 = vpop.permute.xlu0 %1735
    %1737 = vrot.lane.b32.xlu0 %v550, 16
    %v1738 = vpop.permute.xlu0 %1737
    %1739 = vrot.lane.b32.xlu0 %v551, 16
    %v1740 = vpop.permute.xlu0 %1739
    %1741 = vrot.lane.b32.xlu0 %v552, 16
    %v1742 = vpop.permute.xlu0 %1741
    %1743 = vrot.lane.b32.xlu0 %v553, 16
    %v1744 = vpop.permute.xlu0 %1743
    %1745 = vrot.lane.b32.xlu0 %v554, 16
    %v1746 = vpop.permute.xlu0 %1745
    %1747 = vrot.lane.b32.xlu0 %v555, 16
    %v1748 = vpop.permute.xlu0 %1747
    %1749 = vrot.lane.b32.xlu0 %v556, 16
    %v1750 = vpop.permute.xlu0 %1749
    %1751 = vrot.lane.b32.xlu0 %v557, 16
    %v1752 = vpop.permute.xlu0 %1751
    %1753 = vrot.lane.b32.xlu0 %v558, 16
    %v1754 = vpop.permute.xlu0 %1753
    %1755 = vrot.lane.b32.xlu0 %v559, 16
    %v1756 = vpop.permute.xlu0 %1755
    %1757 = vrot.lane.b32.xlu0 %v560, 16
    %v1758 = vpop.permute.xlu0 %1757
    %1759 = vrot.lane.b32.xlu0 %v561, 16
    %v1760 = vpop.permute.xlu0 %1759
    %1761 = vrot.lane.b32.xlu0 %v562, 16
    %v1762 = vpop.permute.xlu0 %1761
    %1763 = vrot.lane.b32.xlu0 %v563, 16
    %v1764 = vpop.permute.xlu0 %1763
    %1765 = vrot.lane.b32.xlu0 %v564, 16
    %v1766 = vpop.permute.xlu0 %1765
    %1767 = vrot.lane.b32.xlu0 %v565, 16
    %v1768 = vpop.permute.xlu0 %1767
    %1769 = vrot.lane.b32.xlu0 %v566, 16
    %v1770 = vpop.permute.xlu0 %1769
    %1771 = vrot.lane.b32.xlu0 %v567, 16
    %v1772 = vpop.permute.xlu0 %1771
    %1773 = vrot.lane.b32.xlu0 %v568, 16
    %v1774 = vpop.permute.xlu0 %1773
    %1775 = vrot.lane.b32.xlu0 %v569, 16
    %v1776 = vpop.permute.xlu0 %1775
    %1777 = vrot.lane.b32.xlu0 %v570, 16
    %v1778 = vpop.permute.xlu0 %1777
    %1779 = vrot.lane.b32.xlu0 %v571, 16
    %v1780 = vpop.permute.xlu0 %1779
    %1781 = vrot.lane.b32.xlu0 %v572, 16
    %v1782 = vpop.permute.xlu0 %1781
    %1783 = vrot.lane.b32.xlu0 %v573, 16
    %v1784 = vpop.permute.xlu0 %1783
    %1785 = vrot.lane.b32.xlu0 %v574, 16
    %v1786 = vpop.permute.xlu0 %1785
    %1787 = vrot.lane.b32.xlu0 %v575, 16
    %v1788 = vpop.permute.xlu0 %1787
    %1789 = vrot.lane.b32.xlu0 %v576, 16
    %v1790 = vpop.permute.xlu0 %1789
    %1791 = vrot.lane.b32.xlu0 %v577, 16
    %v1792 = vpop.permute.xlu0 %1791
    %1793 = vrot.lane.b32.xlu0 %v578, 16
    %v1794 = vpop.permute.xlu0 %1793
    %1795 = vrot.lane.b32.xlu0 %v579, 16
    %v1796 = vpop.permute.xlu0 %1795
    %1925 = vrot.lane.b32.xlu0 %v580, 20
    %v1926 = vpop.permute.xlu0 %1925
    %1927 = vrot.lane.b32.xlu0 %v581, 20
    %v1928 = vpop.permute.xlu0 %1927
    %1929 = vrot.lane.b32.xlu0 %v582, 20
    %v1930 = vpop.permute.xlu0 %1929
    %1931 = vrot.lane.b32.xlu0 %v583, 20
    %v1932 = vpop.permute.xlu0 %1931
    %1933 = vrot.lane.b32.xlu0 %v584, 20
    %v1934 = vpop.permute.xlu0 %1933
    %1935 = vrot.lane.b32.xlu0 %v585, 20
    %v1936 = vpop.permute.xlu0 %1935
    %1937 = vrot.lane.b32.xlu0 %v586, 20
    %v1938 = vpop.permute.xlu0 %1937
    %1939 = vrot.lane.b32.xlu0 %v587, 20
    %v1940 = vpop.permute.xlu0 %1939
    %1941 = vrot.lane.b32.xlu0 %v588, 20
    %v1942 = vpop.permute.xlu0 %1941
    %1943 = vrot.lane.b32.xlu0 %v589, 20
    %v1944 = vpop.permute.xlu0 %1943
    %1945 = vrot.lane.b32.xlu0 %v590, 20
    %v1946 = vpop.permute.xlu0 %1945
    %1947 = vrot.lane.b32.xlu0 %v591, 20
    %v1948 = vpop.permute.xlu0 %1947
    %1949 = vrot.lane.b32.xlu0 %v592, 20
    %v1950 = vpop.permute.xlu0 %1949
    %1951 = vrot.lane.b32.xlu0 %v593, 20
    %v1952 = vpop.permute.xlu0 %1951
    %1953 = vrot.lane.b32.xlu0 %v594, 20
    %v1954 = vpop.permute.xlu0 %1953
    %1955 = vrot.lane.b32.xlu0 %v595, 20
    %v1956 = vpop.permute.xlu0 %1955
    %1957 = vrot.lane.b32.xlu0 %v596, 20
    %v1958 = vpop.permute.xlu0 %1957
    %1959 = vrot.lane.b32.xlu0 %v597, 20
    %v1960 = vpop.permute.xlu0 %1959
    %1961 = vrot.lane.b32.xlu0 %v598, 20
    %v1962 = vpop.permute.xlu0 %1961
    %1963 = vrot.lane.b32.xlu0 %v599, 20
    %v1964 = vpop.permute.xlu0 %1963
    %1965 = vrot.lane.b32.xlu0 %v600, 20
    %v1966 = vpop.permute.xlu0 %1965
    %1967 = vrot.lane.b32.xlu0 %v601, 20
    %v1968 = vpop.permute.xlu0 %1967
    %1969 = vrot.lane.b32.xlu0 %v602, 20
    %v1970 = vpop.permute.xlu0 %1969
    %1971 = vrot.lane.b32.xlu0 %v603, 20
    %v1972 = vpop.permute.xlu0 %1971
    %1973 = vrot.lane.b32.xlu0 %v604, 20
    %v1974 = vpop.permute.xlu0 %1973
    %1975 = vrot.lane.b32.xlu0 %v605, 20
    %v1976 = vpop.permute.xlu0 %1975
    %1977 = vrot.lane.b32.xlu0 %v606, 20
    %v1978 = vpop.permute.xlu0 %1977
    %1979 = vrot.lane.b32.xlu0 %v607, 20
    %v1980 = vpop.permute.xlu0 %1979
    %1981 = vrot.lane.b32.xlu0 %v608, 20
    %v1982 = vpop.permute.xlu0 %1981
    %1983 = vrot.lane.b32.xlu0 %v609, 20
    %v1984 = vpop.permute.xlu0 %1983
    %1985 = vrot.lane.b32.xlu0 %v610, 20
    %v1986 = vpop.permute.xlu0 %1985
    %1987 = vrot.lane.b32.xlu0 %v611, 20
    %v1988 = vpop.permute.xlu0 %1987
    %1989 = vrot.lane.b32.xlu0 %v612, 20
    %v1990 = vpop.permute.xlu0 %1989
    %1991 = vrot.lane.b32.xlu0 %v613, 20
    %v1992 = vpop.permute.xlu0 %1991
    %1993 = vrot.lane.b32.xlu0 %v614, 20
    %v1994 = vpop.permute.xlu0 %1993
    %1995 = vrot.lane.b32.xlu0 %v615, 20
    %v1996 = vpop.permute.xlu0 %1995
    %1997 = vrot.lane.b32.xlu0 %v616, 20
    %v1998 = vpop.permute.xlu0 %1997
    %1999 = vrot.lane.b32.xlu0 %v617, 20
    %v2000 = vpop.permute.xlu0 %1999
    %2001 = vrot.lane.b32.xlu0 %v618, 20
    %v2002 = vpop.permute.xlu0 %2001
    %2003 = vrot.lane.b32.xlu0 %v619, 20
    %v2004 = vpop.permute.xlu0 %2003
    %2005 = vrot.lane.b32.xlu0 %v620, 20
    %v2006 = vpop.permute.xlu0 %2005
    %2007 = vrot.lane.b32.xlu0 %v621, 20
    %v2008 = vpop.permute.xlu0 %2007
    %2009 = vrot.lane.b32.xlu0 %v622, 20
    %v2010 = vpop.permute.xlu0 %2009
    %2011 = vrot.lane.b32.xlu0 %v623, 20
    %v2012 = vpop.permute.xlu0 %2011
    %2013 = vrot.lane.b32.xlu0 %v624, 20
    %v2014 = vpop.permute.xlu0 %2013
    %2015 = vrot.lane.b32.xlu0 %v625, 20
    %v2016 = vpop.permute.xlu0 %2015
    %2017 = vrot.lane.b32.xlu0 %v626, 20
    %v2018 = vpop.permute.xlu0 %2017
    %2019 = vrot.lane.b32.xlu0 %v627, 20
    %v2020 = vpop.permute.xlu0 %2019
    %2021 = vrot.lane.b32.xlu0 %v628, 20
    %v2022 = vpop.permute.xlu0 %2021
    %2023 = vrot.lane.b32.xlu0 %v629, 20
    %v2024 = vpop.permute.xlu0 %2023
    %2025 = vrot.lane.b32.xlu0 %v630, 20
    %v2026 = vpop.permute.xlu0 %2025
    %2027 = vrot.lane.b32.xlu0 %v631, 20
    %v2028 = vpop.permute.xlu0 %2027
    %2029 = vrot.lane.b32.xlu0 %v632, 20
    %v2030 = vpop.permute.xlu0 %2029
    %2031 = vrot.lane.b32.xlu0 %v633, 20
    %v2032 = vpop.permute.xlu0 %2031
    %2033 = vrot.lane.b32.xlu0 %v634, 20
    %v2034 = vpop.permute.xlu0 %2033
    %2035 = vrot.lane.b32.xlu0 %v635, 20
    %v2036 = vpop.permute.xlu0 %2035
    %2037 = vrot.lane.b32.xlu0 %v636, 20
    %v2038 = vpop.permute.xlu0 %2037
    %2039 = vrot.lane.b32.xlu0 %v637, 20
    %v2040 = vpop.permute.xlu0 %2039
    %2041 = vrot.lane.b32.xlu0 %v638, 20
    %v2042 = vpop.permute.xlu0 %2041
    %2043 = vrot.lane.b32.xlu0 %v639, 20
    %v2044 = vpop.permute.xlu0 %2043
    %2045 = vrot.lane.b32.xlu0 %v640, 20
    %v2046 = vpop.permute.xlu0 %2045
    %2047 = vrot.lane.b32.xlu0 %v641, 20
    %v2048 = vpop.permute.xlu0 %2047
    %2049 = vrot.lane.b32.xlu0 %v642, 20
    %v2050 = vpop.permute.xlu0 %2049
    %2051 = vrot.lane.b32.xlu0 %v643, 20
    %v2052 = vpop.permute.xlu0 %2051
    %2181 = vrot.lane.b32.xlu0 %v645, 24
    %v2182 = vpop.permute.xlu0 %2181
    %2183 = vrot.lane.b32.xlu0 %v646, 24
    %v2184 = vpop.permute.xlu0 %2183
    %2185 = vrot.lane.b32.xlu0 %v647, 24
    %v2186 = vpop.permute.xlu0 %2185
    %2187 = vrot.lane.b32.xlu0 %v648, 24
    %v2188 = vpop.permute.xlu0 %2187
    %2189 = vrot.lane.b32.xlu0 %v649, 24
    %v2190 = vpop.permute.xlu0 %2189
    %2191 = vrot.lane.b32.xlu0 %v650, 24
    %v2192 = vpop.permute.xlu0 %2191
    %2193 = vrot.lane.b32.xlu0 %v651, 24
    %v2194 = vpop.permute.xlu0 %2193
    %2195 = vrot.lane.b32.xlu0 %v652, 24
    %v2196 = vpop.permute.xlu0 %2195
    %2197 = vrot.lane.b32.xlu0 %v653, 24
    %v2198 = vpop.permute.xlu0 %2197
    %2199 = vrot.lane.b32.xlu0 %v654, 24
    %v2200 = vpop.permute.xlu0 %2199
    %2201 = vrot.lane.b32.xlu0 %v655, 24
    %v2202 = vpop.permute.xlu0 %2201
    %2203 = vrot.lane.b32.xlu0 %v656, 24
    %v2204 = vpop.permute.xlu0 %2203
    %2205 = vrot.lane.b32.xlu0 %v657, 24
    %v2206 = vpop.permute.xlu0 %2205
    %2207 = vrot.lane.b32.xlu0 %v658, 24
    %v2208 = vpop.permute.xlu0 %2207
    %2209 = vrot.lane.b32.xlu0 %v659, 24
    %v2210 = vpop.permute.xlu0 %2209
    %2211 = vrot.lane.b32.xlu0 %v660, 24
    %v2212 = vpop.permute.xlu0 %2211
    %2213 = vrot.lane.b32.xlu0 %v661, 24
    %v2214 = vpop.permute.xlu0 %2213
    %2215 = vrot.lane.b32.xlu0 %v662, 24
    %v2216 = vpop.permute.xlu0 %2215
    %2217 = vrot.lane.b32.xlu0 %v663, 24
    %v2218 = vpop.permute.xlu0 %2217
    %2219 = vrot.lane.b32.xlu0 %v664, 24
    %v2220 = vpop.permute.xlu0 %2219
    %2221 = vrot.lane.b32.xlu0 %v665, 24
    %v2222 = vpop.permute.xlu0 %2221
    %2223 = vrot.lane.b32.xlu0 %v666, 24
    %v2224 = vpop.permute.xlu0 %2223
    %2225 = vrot.lane.b32.xlu0 %v667, 24
    %v2226 = vpop.permute.xlu0 %2225
    %2227 = vrot.lane.b32.xlu0 %v668, 24
    %v2228 = vpop.permute.xlu0 %2227
    %2229 = vrot.lane.b32.xlu0 %v669, 24
    %v2230 = vpop.permute.xlu0 %2229
    %2231 = vrot.lane.b32.xlu0 %v670, 24
    %v2232 = vpop.permute.xlu0 %2231
    %2233 = vrot.lane.b32.xlu0 %v671, 24
    %v2234 = vpop.permute.xlu0 %2233
    %2235 = vrot.lane.b32.xlu0 %v672, 24
    %v2236 = vpop.permute.xlu0 %2235
    %2237 = vrot.lane.b32.xlu0 %v673, 24
    %v2238 = vpop.permute.xlu0 %2237
    %2239 = vrot.lane.b32.xlu0 %v674, 24
    %v2240 = vpop.permute.xlu0 %2239
    %2241 = vrot.lane.b32.xlu0 %v675, 24
    %v2242 = vpop.permute.xlu0 %2241
    %2243 = vrot.lane.b32.xlu0 %v676, 24
    %v2244 = vpop.permute.xlu0 %2243
    %2245 = vrot.lane.b32.xlu0 %v677, 24
    %v2246 = vpop.permute.xlu0 %2245
    %2247 = vrot.lane.b32.xlu0 %v678, 24
    %v2248 = vpop.permute.xlu0 %2247
    %2249 = vrot.lane.b32.xlu0 %v679, 24
    %v2250 = vpop.permute.xlu0 %2249
    %2251 = vrot.lane.b32.xlu0 %v680, 24
    %v2252 = vpop.permute.xlu0 %2251
    %2253 = vrot.lane.b32.xlu0 %v681, 24
    %v2254 = vpop.permute.xlu0 %2253
    %2255 = vrot.lane.b32.xlu0 %v682, 24
    %v2256 = vpop.permute.xlu0 %2255
    %2257 = vrot.lane.b32.xlu0 %v683, 24
    %v2258 = vpop.permute.xlu0 %2257
    %2259 = vrot.lane.b32.xlu0 %v684, 24
    %v2260 = vpop.permute.xlu0 %2259
    %2261 = vrot.lane.b32.xlu0 %v685, 24
    %v2262 = vpop.permute.xlu0 %2261
    %2263 = vrot.lane.b32.xlu0 %v686, 24
    %v2264 = vpop.permute.xlu0 %2263
    %2265 = vrot.lane.b32.xlu0 %v687, 24
    %v2266 = vpop.permute.xlu0 %2265
    %2267 = vrot.lane.b32.xlu0 %v688, 24
    %v2268 = vpop.permute.xlu0 %2267
    %2269 = vrot.lane.b32.xlu0 %v689, 24
    %v2270 = vpop.permute.xlu0 %2269
    %2271 = vrot.lane.b32.xlu0 %v690, 24
    %v2272 = vpop.permute.xlu0 %2271
    %2273 = vrot.lane.b32.xlu0 %v691, 24
    %v2274 = vpop.permute.xlu0 %2273
    %2275 = vrot.lane.b32.xlu0 %v692, 24
    %v2276 = vpop.permute.xlu0 %2275
    %2277 = vrot.lane.b32.xlu0 %v693, 24
    %v2278 = vpop.permute.xlu0 %2277
    %2279 = vrot.lane.b32.xlu0 %v694, 24
    %v2280 = vpop.permute.xlu0 %2279
    %2281 = vrot.lane.b32.xlu0 %v695, 24
    %v2282 = vpop.permute.xlu0 %2281
    %2283 = vrot.lane.b32.xlu0 %v696, 24
    %v2284 = vpop.permute.xlu0 %2283
    %2285 = vrot.lane.b32.xlu0 %v697, 24
    %v2286 = vpop.permute.xlu0 %2285
    %2287 = vrot.lane.b32.xlu0 %v698, 24
    %v2288 = vpop.permute.xlu0 %2287
    %2289 = vrot.lane.b32.xlu0 %v699, 24
    %v2290 = vpop.permute.xlu0 %2289
    %2291 = vrot.lane.b32.xlu0 %v700, 24
    %v2292 = vpop.permute.xlu0 %2291
    %2293 = vrot.lane.b32.xlu0 %v701, 24
    %v2294 = vpop.permute.xlu0 %2293
    %2295 = vrot.lane.b32.xlu0 %v702, 24
    %v2296 = vpop.permute.xlu0 %2295
    %2297 = vrot.lane.b32.xlu0 %v703, 24
    %v2298 = vpop.permute.xlu0 %2297
    %2299 = vrot.lane.b32.xlu0 %v704, 24
    %v2300 = vpop.permute.xlu0 %2299
    %2301 = vrot.lane.b32.xlu0 %v705, 24
    %v2302 = vpop.permute.xlu0 %2301
    %2303 = vrot.lane.b32.xlu0 %v706, 24
    %v2304 = vpop.permute.xlu0 %2303
    %2305 = vrot.lane.b32.xlu0 %v707, 24
    %v2306 = vpop.permute.xlu0 %2305
    %2307 = vrot.lane.b32.xlu0 %v708, 24
    %v2308 = vpop.permute.xlu0 %2307
    %2437 = vrot.lane.b32.xlu0 %v709, 28
    %v2438 = vpop.permute.xlu0 %2437
    %2439 = vrot.lane.b32.xlu0 %v710, 28
    %v2440 = vpop.permute.xlu0 %2439
    %2441 = vrot.lane.b32.xlu0 %v711, 28
    %v2442 = vpop.permute.xlu0 %2441
    %2443 = vrot.lane.b32.xlu0 %v712, 28
    %v2444 = vpop.permute.xlu0 %2443
    %2445 = vrot.lane.b32.xlu0 %v713, 28
    %v2446 = vpop.permute.xlu0 %2445
    %2447 = vrot.lane.b32.xlu0 %v714, 28
    %v2448 = vpop.permute.xlu0 %2447
    %2449 = vrot.lane.b32.xlu0 %v715, 28
    %v2450 = vpop.permute.xlu0 %2449
    %2451 = vrot.lane.b32.xlu0 %v716, 28
    %v2452 = vpop.permute.xlu0 %2451
    %2453 = vrot.lane.b32.xlu0 %v717, 28
    %v2454 = vpop.permute.xlu0 %2453
    %2455 = vrot.lane.b32.xlu0 %v718, 28
    %v2456 = vpop.permute.xlu0 %2455
    %2457 = vrot.lane.b32.xlu0 %v719, 28
    %v2458 = vpop.permute.xlu0 %2457
    %2459 = vrot.lane.b32.xlu0 %v720, 28
    %v2460 = vpop.permute.xlu0 %2459
    %2461 = vrot.lane.b32.xlu0 %v721, 28
    %v2462 = vpop.permute.xlu0 %2461
    %2463 = vrot.lane.b32.xlu0 %v722, 28
    %v2464 = vpop.permute.xlu0 %2463
    %2465 = vrot.lane.b32.xlu0 %v723, 28
    %v2466 = vpop.permute.xlu0 %2465
    %2467 = vrot.lane.b32.xlu0 %v724, 28
    %v2468 = vpop.permute.xlu0 %2467
    %2469 = vrot.lane.b32.xlu0 %v725, 28
    %v2470 = vpop.permute.xlu0 %2469
    %2471 = vrot.lane.b32.xlu0 %v726, 28
    %v2472 = vpop.permute.xlu0 %2471
    %2473 = vrot.lane.b32.xlu0 %v727, 28
    %v2474 = vpop.permute.xlu0 %2473
    %2475 = vrot.lane.b32.xlu0 %v728, 28
    %v2476 = vpop.permute.xlu0 %2475
    %2477 = vrot.lane.b32.xlu0 %v729, 28
    %v2478 = vpop.permute.xlu0 %2477
    %2479 = vrot.lane.b32.xlu0 %v730, 28
    %v2480 = vpop.permute.xlu0 %2479
    %2481 = vrot.lane.b32.xlu0 %v731, 28
    %v2482 = vpop.permute.xlu0 %2481
    %2483 = vrot.lane.b32.xlu0 %v732, 28
    %v2484 = vpop.permute.xlu0 %2483
    %2485 = vrot.lane.b32.xlu0 %v733, 28
    %v2486 = vpop.permute.xlu0 %2485
    %2487 = vrot.lane.b32.xlu0 %v734, 28
    %v2488 = vpop.permute.xlu0 %2487
    %2489 = vrot.lane.b32.xlu0 %v735, 28
    %v2490 = vpop.permute.xlu0 %2489
    %2491 = vrot.lane.b32.xlu0 %v736, 28
    %v2492 = vpop.permute.xlu0 %2491
    %2493 = vrot.lane.b32.xlu0 %v737, 28
    %v2494 = vpop.permute.xlu0 %2493
    %2495 = vrot.lane.b32.xlu0 %v738, 28
    %v2496 = vpop.permute.xlu0 %2495
    %2497 = vrot.lane.b32.xlu0 %v739, 28
    %v2498 = vpop.permute.xlu0 %2497
    %2499 = vrot.lane.b32.xlu0 %v740, 28
    %v2500 = vpop.permute.xlu0 %2499
    %2501 = vrot.lane.b32.xlu0 %v741, 28
    %v2502 = vpop.permute.xlu0 %2501
    %2503 = vrot.lane.b32.xlu0 %v742, 28
    %v2504 = vpop.permute.xlu0 %2503
    %2505 = vrot.lane.b32.xlu0 %v743, 28
    %v2506 = vpop.permute.xlu0 %2505
    %2507 = vrot.lane.b32.xlu0 %v744, 28
    %v2508 = vpop.permute.xlu0 %2507
    %2509 = vrot.lane.b32.xlu0 %v745, 28
    %v2510 = vpop.permute.xlu0 %2509
    %2511 = vrot.lane.b32.xlu0 %v746, 28
    %v2512 = vpop.permute.xlu0 %2511
    %2513 = vrot.lane.b32.xlu0 %v747, 28
    %v2514 = vpop.permute.xlu0 %2513
    %2515 = vrot.lane.b32.xlu0 %v748, 28
    %v2516 = vpop.permute.xlu0 %2515
    %2517 = vrot.lane.b32.xlu0 %v749, 28
    %v2518 = vpop.permute.xlu0 %2517
    %2519 = vrot.lane.b32.xlu0 %v750, 28
    %v2520 = vpop.permute.xlu0 %2519
    %2521 = vrot.lane.b32.xlu0 %v751, 28
    %v2522 = vpop.permute.xlu0 %2521
    %2523 = vrot.lane.b32.xlu0 %v752, 28
    %v2524 = vpop.permute.xlu0 %2523
    %2525 = vrot.lane.b32.xlu0 %v753, 28
    %v2526 = vpop.permute.xlu0 %2525
    %2527 = vrot.lane.b32.xlu0 %v754, 28
    %v2528 = vpop.permute.xlu0 %2527
    %2529 = vrot.lane.b32.xlu0 %v755, 28
    %v2530 = vpop.permute.xlu0 %2529
    %2531 = vrot.lane.b32.xlu0 %v756, 28
    %v2532 = vpop.permute.xlu0 %2531
    %2533 = vrot.lane.b32.xlu0 %v757, 28
    %v2534 = vpop.permute.xlu0 %2533
    %2535 = vrot.lane.b32.xlu0 %v758, 28
    %v2536 = vpop.permute.xlu0 %2535
    %2537 = vrot.lane.b32.xlu0 %v759, 28
    %v2538 = vpop.permute.xlu0 %2537
    %2539 = vrot.lane.b32.xlu0 %v760, 28
    %v2540 = vpop.permute.xlu0 %2539
    %2541 = vrot.lane.b32.xlu0 %v761, 28
    %v2542 = vpop.permute.xlu0 %2541
    %2543 = vrot.lane.b32.xlu0 %v762, 28
    %v2544 = vpop.permute.xlu0 %2543
    %2545 = vrot.lane.b32.xlu0 %v763, 28
    %v2546 = vpop.permute.xlu0 %2545
    %2547 = vrot.lane.b32.xlu0 %v764, 28
    %v2548 = vpop.permute.xlu0 %2547
    %2549 = vrot.lane.b32.xlu0 %v765, 28
    %v2550 = vpop.permute.xlu0 %2549
    %2551 = vrot.lane.b32.xlu0 %v766, 28
    %v2552 = vpop.permute.xlu0 %2551
    %2553 = vrot.lane.b32.xlu0 %v767, 28
    %v2554 = vpop.permute.xlu0 %2553
    %2555 = vrot.lane.b32.xlu0 %v768, 28
    %v2556 = vpop.permute.xlu0 %2555
    %2557 = vrot.lane.b32.xlu0 %v769, 28
    %v2558 = vpop.permute.xlu0 %2557
    %2559 = vrot.lane.b32.xlu0 %v770, 28
    %v2560 = vpop.permute.xlu0 %2559
    %2561 = vrot.lane.b32.xlu0 %v771, 28
    %v2562 = vpop.permute.xlu0 %2561
    %2563 = vrot.lane.b32.xlu0 %v772, 28
    %v2564 = vpop.permute.xlu0 %2563
    %2693 = vrot.lane.b32.xlu0 %v773, 32
    %v2694 = vpop.permute.xlu0 %2693
    %2695 = vrot.lane.b32.xlu0 %v774, 32
    %v2696 = vpop.permute.xlu0 %2695
    %2697 = vrot.lane.b32.xlu0 %v775, 32
    %v2698 = vpop.permute.xlu0 %2697
    %2699 = vrot.lane.b32.xlu0 %v776, 32
    %v2700 = vpop.permute.xlu0 %2699
    %2701 = vrot.lane.b32.xlu0 %v777, 32
    %v2702 = vpop.permute.xlu0 %2701
    %2703 = vrot.lane.b32.xlu0 %v778, 32
    %v2704 = vpop.permute.xlu0 %2703
    %2705 = vrot.lane.b32.xlu0 %v779, 32
    %v2706 = vpop.permute.xlu0 %2705
    %2707 = vrot.lane.b32.xlu0 %v780, 32
    %v2708 = vpop.permute.xlu0 %2707
    %2709 = vrot.lane.b32.xlu0 %v781, 32
    %v2710 = vpop.permute.xlu0 %2709
    %2711 = vrot.lane.b32.xlu0 %v782, 32
    %v2712 = vpop.permute.xlu0 %2711
    %2713 = vrot.lane.b32.xlu0 %v783, 32
    %v2714 = vpop.permute.xlu0 %2713
    %2715 = vrot.lane.b32.xlu0 %v784, 32
    %v2716 = vpop.permute.xlu0 %2715
    %2717 = vrot.lane.b32.xlu0 %v785, 32
    %v2718 = vpop.permute.xlu0 %2717
    %2719 = vrot.lane.b32.xlu0 %v786, 32
    %v2720 = vpop.permute.xlu0 %2719
    %2721 = vrot.lane.b32.xlu0 %v787, 32
    %v2722 = vpop.permute.xlu0 %2721
    %2723 = vrot.lane.b32.xlu0 %v788, 32
    %v2724 = vpop.permute.xlu0 %2723
    %2725 = vrot.lane.b32.xlu0 %v789, 32
    %v2726 = vpop.permute.xlu0 %2725
    %2727 = vrot.lane.b32.xlu0 %v790, 32
    %v2728 = vpop.permute.xlu0 %2727
    %2729 = vrot.lane.b32.xlu0 %v791, 32
    %v2730 = vpop.permute.xlu0 %2729
    %2731 = vrot.lane.b32.xlu0 %v792, 32
    %v2732 = vpop.permute.xlu0 %2731
    %2733 = vrot.lane.b32.xlu0 %v793, 32
    %v2734 = vpop.permute.xlu0 %2733
    %2735 = vrot.lane.b32.xlu0 %v794, 32
    %v2736 = vpop.permute.xlu0 %2735
    %2737 = vrot.lane.b32.xlu0 %v795, 32
    %v2738 = vpop.permute.xlu0 %2737
    %2739 = vrot.lane.b32.xlu0 %v796, 32
    %v2740 = vpop.permute.xlu0 %2739
    %2741 = vrot.lane.b32.xlu0 %v797, 32
    %v2742 = vpop.permute.xlu0 %2741
    %2743 = vrot.lane.b32.xlu0 %v798, 32
    %v2744 = vpop.permute.xlu0 %2743
    %2745 = vrot.lane.b32.xlu0 %v799, 32
    %v2746 = vpop.permute.xlu0 %2745
    %2747 = vrot.lane.b32.xlu0 %v800, 32
    %v2748 = vpop.permute.xlu0 %2747
    %2749 = vrot.lane.b32.xlu0 %v801, 32
    %v2750 = vpop.permute.xlu0 %2749
    %2751 = vrot.lane.b32.xlu0 %v802, 32
    %v2752 = vpop.permute.xlu0 %2751
    %2753 = vrot.lane.b32.xlu0 %v803, 32
    %v2754 = vpop.permute.xlu0 %2753
    %2755 = vrot.lane.b32.xlu0 %v804, 32
    %v2756 = vpop.permute.xlu0 %2755
    %2757 = vrot.lane.b32.xlu0 %v805, 32
    %v2758 = vpop.permute.xlu0 %2757
    %2759 = vrot.lane.b32.xlu0 %v806, 32
    %v2760 = vpop.permute.xlu0 %2759
    %2761 = vrot.lane.b32.xlu0 %v807, 32
    %v2762 = vpop.permute.xlu0 %2761
    %2763 = vrot.lane.b32.xlu0 %v808, 32
    %v2764 = vpop.permute.xlu0 %2763
    %2765 = vrot.lane.b32.xlu0 %v809, 32
    %v2766 = vpop.permute.xlu0 %2765
    %2767 = vrot.lane.b32.xlu0 %v810, 32
    %v2768 = vpop.permute.xlu0 %2767
    %2769 = vrot.lane.b32.xlu0 %v811, 32
    %v2770 = vpop.permute.xlu0 %2769
    %2771 = vrot.lane.b32.xlu0 %v812, 32
    %v2772 = vpop.permute.xlu0 %2771
    %2773 = vrot.lane.b32.xlu0 %v813, 32
    %v2774 = vpop.permute.xlu0 %2773
    %2775 = vrot.lane.b32.xlu0 %v814, 32
    %v2776 = vpop.permute.xlu0 %2775
    %2777 = vrot.lane.b32.xlu0 %v815, 32
    %v2778 = vpop.permute.xlu0 %2777
    %2779 = vrot.lane.b32.xlu0 %v816, 32
    %v2780 = vpop.permute.xlu0 %2779
    %2781 = vrot.lane.b32.xlu0 %v817, 32
    %v2782 = vpop.permute.xlu0 %2781
    %2783 = vrot.lane.b32.xlu0 %v818, 32
    %v2784 = vpop.permute.xlu0 %2783
    %2785 = vrot.lane.b32.xlu0 %v819, 32
    %v2786 = vpop.permute.xlu0 %2785
    %2787 = vrot.lane.b32.xlu0 %v820, 32
    %v2788 = vpop.permute.xlu0 %2787
    %2789 = vrot.lane.b32.xlu0 %v821, 32
    %v2790 = vpop.permute.xlu0 %2789
    %2791 = vrot.lane.b32.xlu0 %v822, 32
    %v2792 = vpop.permute.xlu0 %2791
    %2793 = vrot.lane.b32.xlu0 %v823, 32
    %v2794 = vpop.permute.xlu0 %2793
    %2795 = vrot.lane.b32.xlu0 %v824, 32
    %v2796 = vpop.permute.xlu0 %2795
    %2797 = vrot.lane.b32.xlu0 %v825, 32
    %v2798 = vpop.permute.xlu0 %2797
    %2799 = vrot.lane.b32.xlu0 %v826, 32
    %v2800 = vpop.permute.xlu0 %2799
    %2801 = vrot.lane.b32.xlu0 %v827, 32
    %v2802 = vpop.permute.xlu0 %2801
    %2803 = vrot.lane.b32.xlu0 %v828, 32
    %v2804 = vpop.permute.xlu0 %2803
    %2805 = vrot.lane.b32.xlu0 %v829, 32
    %v2806 = vpop.permute.xlu0 %2805
    %2807 = vrot.lane.b32.xlu0 %v830, 32
    %v2808 = vpop.permute.xlu0 %2807
    %2809 = vrot.lane.b32.xlu0 %v831, 32
    %v2810 = vpop.permute.xlu0 %2809
    %2811 = vrot.lane.b32.xlu0 %v832, 32
    %v2812 = vpop.permute.xlu0 %2811
    %2813 = vrot.lane.b32.xlu0 %v833, 32
    %v2814 = vpop.permute.xlu0 %2813
    %2815 = vrot.lane.b32.xlu0 %v834, 32
    %v2816 = vpop.permute.xlu0 %2815
    %2817 = vrot.lane.b32.xlu0 %v835, 32
    %v2818 = vpop.permute.xlu0 %2817
    %2819 = vrot.lane.b32.xlu0 %v836, 32
    %v2820 = vpop.permute.xlu0 %2819
    %v2885 = vsel %vm21, %v260, %v902
    %v2886 = vsel %vm21, %v261, %v904
    %v2887 = vsel %vm21, %v262, %v906
    %v2888 = vsel %vm21, %v263, %v908
    %v2889 = vsel %vm21, %v264, %v910
    %v2890 = vsel %vm21, %v265, %v912
    %v2891 = vsel %vm21, %v266, %v914
    %v2892 = vsel %vm21, %v267, %v916
    %v2893 = vsel %vm21, %v268, %v918
    %v2894 = vsel %vm21, %v269, %v920
    %v2895 = vsel %vm21, %v270, %v922
    %v2896 = vsel %vm21, %v271, %v924
    %v2897 = vsel %vm21, %v272, %v926
    %v2898 = vsel %vm21, %v273, %v928
    %v2899 = vsel %vm21, %v274, %v930
    %v2900 = vsel %vm21, %v275, %v932
    %v2901 = vsel %vm21, %v276, %v934
    %v2902 = vsel %vm21, %v277, %v936
    %v2903 = vsel %vm21, %v278, %v938
    %v2904 = vsel %vm21, %v279, %v940
    %v2905 = vsel %vm21, %v280, %v942
    %v2906 = vsel %vm21, %v281, %v944
    %v2907 = vsel %vm21, %v282, %v946
    %v2908 = vsel %vm21, %v283, %v948
    %v2909 = vsel %vm21, %v284, %v950
    %v2910 = vsel %vm21, %v285, %v952
    %v2911 = vsel %vm21, %v286, %v954
    %v2912 = vsel %vm21, %v287, %v956
    %v2913 = vsel %vm21, %v288, %v958
    %v2914 = vsel %vm21, %v289, %v960
    %v2915 = vsel %vm21, %v290, %v962
    %v2916 = vsel %vm21, %v291, %v964
    %v2917 = vsel %vm21, %v292, %v966
    %v2918 = vsel %vm21, %v293, %v968
    %v2919 = vsel %vm21, %v294, %v970
    %v2920 = vsel %vm21, %v295, %v972
    %v2921 = vsel %vm21, %v296, %v974
    %v2922 = vsel %vm21, %v297, %v976
    %v2923 = vsel %vm21, %v298, %v978
    %v2924 = vsel %vm21, %v299, %v980
    %v2925 = vsel %vm21, %v300, %v982
    %v2926 = vsel %vm21, %v301, %v984
    %v2927 = vsel %vm21, %v302, %v986
    %v2928 = vsel %vm21, %v303, %v988
    %v2929 = vsel %vm21, %v304, %v990
    %v2930 = vsel %vm21, %v305, %v992
    %v2931 = vsel %vm21, %v306, %v994
    %v2932 = vsel %vm21, %v307, %v996
    %v2933 = vsel %vm21, %v308, %v998
    %v2934 = vsel %vm21, %v309, %v1000
    %v2935 = vsel %vm21, %v310, %v1002
    %v2936 = vsel %vm21, %v311, %v1004
    %v2937 = vsel %vm21, %v312, %v1006
    %v2938 = vsel %vm21, %v313, %v1008
    %v2939 = vsel %vm21, %v314, %v1010
    %v2940 = vsel %vm21, %v315, %v1012
    %v2941 = vsel %vm21, %v316, %v1014
    %v2942 = vsel %vm21, %v317, %v1016
    %v2943 = vsel %vm21, %v318, %v1018
    %v2944 = vsel %vm21, %v319, %v1020
    %v2945 = vsel %vm21, %v320, %v1022
    %v2946 = vsel %vm21, %v321, %v1024
    %v2947 = vsel %vm21, %v322, %v1026
    %v2948 = vsel %vm21, %v323, %v1028
    %vm2949 = vcmask 64512
    %v2950 = vsel %vm2949, %v2885, %v1158
    %v2951 = vsel %vm2949, %v2886, %v1160
    %v2952 = vsel %vm2949, %v2887, %v1162
    %v2953 = vsel %vm2949, %v2888, %v1164
    %v2954 = vsel %vm2949, %v2889, %v1166
    %v2955 = vsel %vm2949, %v2890, %v1168
    %v2956 = vsel %vm2949, %v2891, %v1170
    %v2957 = vsel %vm2949, %v2892, %v1172
    %v2958 = vsel %vm2949, %v2893, %v1174
    %v2959 = vsel %vm2949, %v2894, %v1176
    %v2960 = vsel %vm2949, %v2895, %v1178
    %v2961 = vsel %vm2949, %v2896, %v1180
    %v2962 = vsel %vm2949, %v2897, %v1182
    %v2963 = vsel %vm2949, %v2898, %v1184
    %v2964 = vsel %vm2949, %v2899, %v1186
    %v2965 = vsel %vm2949, %v2900, %v1188
    %v2966 = vsel %vm2949, %v2901, %v1190
    %v2967 = vsel %vm2949, %v2902, %v1192
    %v2968 = vsel %vm2949, %v2903, %v1194
    %v2969 = vsel %vm2949, %v2904, %v1196
    %v2970 = vsel %vm2949, %v2905, %v1198
    %v2971 = vsel %vm2949, %v2906, %v1200
    %v2972 = vsel %vm2949, %v2907, %v1202
    %v2973 = vsel %vm2949, %v2908, %v1204
    %v2974 = vsel %vm2949, %v2909, %v1206
    %v2975 = vsel %vm2949, %v2910, %v1208
    %v2976 = vsel %vm2949, %v2911, %v1210
    %v2977 = vsel %vm2949, %v2912, %v1212
    %v2978 = vsel %vm2949, %v2913, %v1214
    %v2979 = vsel %vm2949, %v2914, %v1216
    %v2980 = vsel %vm2949, %v2915, %v1218
    %v2981 = vsel %vm2949, %v2916, %v1220
    %v2982 = vsel %vm2949, %v2917, %v1222
    %v2983 = vsel %vm2949, %v2918, %v1224
    %v2984 = vsel %vm2949, %v2919, %v1226
    %v2985 = vsel %vm2949, %v2920, %v1228
    %v2986 = vsel %vm2949, %v2921, %v1230
    %v2987 = vsel %vm2949, %v2922, %v1232
    %v2988 = vsel %vm2949, %v2923, %v1234
    %v2989 = vsel %vm2949, %v2924, %v1236
    %v2990 = vsel %vm2949, %v2925, %v1238
    %v2991 = vsel %vm2949, %v2926, %v1240
    %v2992 = vsel %vm2949, %v2927, %v1242
    %v2993 = vsel %vm2949, %v2928, %v1244
    %v2994 = vsel %vm2949, %v2929, %v1246
    %v2995 = vsel %vm2949, %v2930, %v1248
    %v2996 = vsel %vm2949, %v2931, %v1250
    %v2997 = vsel %vm2949, %v2932, %v1252
    %v2998 = vsel %vm2949, %v2933, %v1254
    %v2999 = vsel %vm2949, %v2934, %v1256
    %v3000 = vsel %vm2949, %v2935, %v1258
    %v3001 = vsel %vm2949, %v2936, %v1260
    %v3002 = vsel %vm2949, %v2937, %v1262
    %v3003 = vsel %vm2949, %v2938, %v1264
    %v3004 = vsel %vm2949, %v2939, %v1266
    %v3005 = vsel %vm2949, %v2940, %v1268
    %v3006 = vsel %vm2949, %v2941, %v1270
    %v3007 = vsel %vm2949, %v2942, %v1272
    %v3008 = vsel %vm2949, %v2943, %v1274
    %v3009 = vsel %vm2949, %v2944, %v1276
    %v3010 = vsel %vm2949, %v2945, %v1278
    %v3011 = vsel %vm2949, %v2946, %v1280
    %v3012 = vsel %vm2949, %v2947, %v1282
    %v3013 = vsel %vm2949, %v2948, %v1284
    %vm3014 = vcmask 97280
    %v3015 = vsel %vm3014, %v2950, %v1414
    %v3016 = vsel %vm3014, %v2951, %v1416
    %v3017 = vsel %vm3014, %v2952, %v1418
    %v3018 = vsel %vm3014, %v2953, %v1420
    %v3019 = vsel %vm3014, %v2954, %v1422
    %v3020 = vsel %vm3014, %v2955, %v1424
    %v3021 = vsel %vm3014, %v2956, %v1426
    %v3022 = vsel %vm3014, %v2957, %v1428
    %v3023 = vsel %vm3014, %v2958, %v1430
    %v3024 = vsel %vm3014, %v2959, %v1432
    %v3025 = vsel %vm3014, %v2960, %v1434
    %v3026 = vsel %vm3014, %v2961, %v1436
    %v3027 = vsel %vm3014, %v2962, %v1438
    %v3028 = vsel %vm3014, %v2963, %v1440
    %v3029 = vsel %vm3014, %v2964, %v1442
    %v3030 = vsel %vm3014, %v2965, %v1444
    %v3031 = vsel %vm3014, %v2966, %v1446
    %v3032 = vsel %vm3014, %v2967, %v1448
    %v3033 = vsel %vm3014, %v2968, %v1450
    %v3034 = vsel %vm3014, %v2969, %v1452
    %v3035 = vsel %vm3014, %v2970, %v1454
    %v3036 = vsel %vm3014, %v2971, %v1456
    %v3037 = vsel %vm3014, %v2972, %v1458
    %v3038 = vsel %vm3014, %v2973, %v1460
    %v3039 = vsel %vm3014, %v2974, %v1462
    %v3040 = vsel %vm3014, %v2975, %v1464
    %v3041 = vsel %vm3014, %v2976, %v1466
    %v3042 = vsel %vm3014, %v2977, %v1468
    %v3043 = vsel %vm3014, %v2978, %v1470
    %v3044 = vsel %vm3014, %v2979, %v1472
    %v3045 = vsel %vm3014, %v2980, %v1474
    %v3046 = vsel %vm3014, %v2981, %v1476
    %v3047 = vsel %vm3014, %v2982, %v1478
    %v3048 = vsel %vm3014, %v2983, %v1480
    %v3049 = vsel %vm3014, %v2984, %v1482
    %v3050 = vsel %vm3014, %v2985, %v1484
    %v3051 = vsel %vm3014, %v2986, %v1486
    %v3052 = vsel %vm3014, %v2987, %v1488
    %v3053 = vsel %vm3014, %v2988, %v1490
    %v3054 = vsel %vm3014, %v2989, %v1492
    %v3055 = vsel %vm3014, %v2990, %v1494
    %v3056 = vsel %vm3014, %v2991, %v1496
    %v3057 = vsel %vm3014, %v2992, %v1498
    %v3058 = vsel %vm3014, %v2993, %v1500
    %v3059 = vsel %vm3014, %v2994, %v1502
    %v3060 = vsel %vm3014, %v2995, %v1504
    %v3061 = vsel %vm3014, %v2996, %v1506
    %v3062 = vsel %vm3014, %v2997, %v1508
    %v3063 = vsel %vm3014, %v2998, %v1510
    %v3064 = vsel %vm3014, %v2999, %v1512
    %v3065 = vsel %vm3014, %v3000, %v1514
    %v3066 = vsel %vm3014, %v3001, %v1516
    %v3067 = vsel %vm3014, %v3002, %v1518
    %v3068 = vsel %vm3014, %v3003, %v1520
    %v3069 = vsel %vm3014, %v3004, %v1522
    %v3070 = vsel %vm3014, %v3005, %v1524
    %v3071 = vsel %vm3014, %v3006, %v1526
    %v3072 = vsel %vm3014, %v3007, %v1528
    %v3073 = vsel %vm3014, %v3008, %v1530
    %v3074 = vsel %vm3014, %v3009, %v1532
    %v3075 = vsel %vm3014, %v3010, %v1534
    %v3076 = vsel %vm3014, %v3011, %v1536
    %v3077 = vsel %vm3014, %v3012, %v1538
    %v3078 = vsel %vm3014, %v3013, %v1540
    %vm3079 = vcmask 130048
    %v3080 = vsel %vm3079, %v3015, %v1670
    %v3081 = vsel %vm3079, %v3016, %v1672
    %v3082 = vsel %vm3079, %v3017, %v1674
    %v3083 = vsel %vm3079, %v3018, %v1676
    %v3084 = vsel %vm3079, %v3019, %v1678
    %v3085 = vsel %vm3079, %v3020, %v1680
    %v3086 = vsel %vm3079, %v3021, %v1682
    %v3087 = vsel %vm3079, %v3022, %v1684
    %v3088 = vsel %vm3079, %v3023, %v1686
    %v3089 = vsel %vm3079, %v3024, %v1688
    %v3090 = vsel %vm3079, %v3025, %v1690
    %v3091 = vsel %vm3079, %v3026, %v1692
    %v3092 = vsel %vm3079, %v3027, %v1694
    %v3093 = vsel %vm3079, %v3028, %v1696
    %v3094 = vsel %vm3079, %v3029, %v1698
    %v3095 = vsel %vm3079, %v3030, %v1700
    %v3096 = vsel %vm3079, %v3031, %v1702
    %v3097 = vsel %vm3079, %v3032, %v1704
    %v3098 = vsel %vm3079, %v3033, %v1706
    %v3099 = vsel %vm3079, %v3034, %v1708
    %v3100 = vsel %vm3079, %v3035, %v1710
    %v3101 = vsel %vm3079, %v3036, %v1712
    %v3102 = vsel %vm3079, %v3037, %v1714
    %v3103 = vsel %vm3079, %v3038, %v1716
    %v3104 = vsel %vm3079, %v3039, %v1718
    %v3105 = vsel %vm3079, %v3040, %v1720
    %v3106 = vsel %vm3079, %v3041, %v1722
    %v3107 = vsel %vm3079, %v3042, %v1724
    %v3108 = vsel %vm3079, %v3043, %v1726
    %v3109 = vsel %vm3079, %v3044, %v1728
    %v3110 = vsel %vm3079, %v3045, %v1730
    %v3111 = vsel %vm3079, %v3046, %v1732
    %v3112 = vsel %vm3079, %v3047, %v1734
    %v3113 = vsel %vm3079, %v3048, %v1736
    %v3114 = vsel %vm3079, %v3049, %v1738
    %v3115 = vsel %vm3079, %v3050, %v1740
    %v3116 = vsel %vm3079, %v3051, %v1742
    %v3117 = vsel %vm3079, %v3052, %v1744
    %v3118 = vsel %vm3079, %v3053, %v1746
    %v3119 = vsel %vm3079, %v3054, %v1748
    %v3120 = vsel %vm3079, %v3055, %v1750
    %v3121 = vsel %vm3079, %v3056, %v1752
    %v3122 = vsel %vm3079, %v3057, %v1754
    %v3123 = vsel %vm3079, %v3058, %v1756
    %v3124 = vsel %vm3079, %v3059, %v1758
    %v3125 = vsel %vm3079, %v3060, %v1760
    %v3126 = vsel %vm3079, %v3061, %v1762
    %v3127 = vsel %vm3079, %v3062, %v1764
    %v3128 = vsel %vm3079, %v3063, %v1766
    %v3129 = vsel %vm3079, %v3064, %v1768
    %v3130 = vsel %vm3079, %v3065, %v1770
    %v3131 = vsel %vm3079, %v3066, %v1772
    %v3132 = vsel %vm3079, %v3067, %v1774
    %v3133 = vsel %vm3079, %v3068, %v1776
    %v3134 = vsel %vm3079, %v3069, %v1778
    %v3135 = vsel %vm3079, %v3070, %v1780
    %v3136 = vsel %vm3079, %v3071, %v1782
    %v3137 = vsel %vm3079, %v3072, %v1784
    %v3138 = vsel %vm3079, %v3073, %v1786
    %v3139 = vsel %vm3079, %v3074, %v1788
    %v3140 = vsel %vm3079, %v3075, %v1790
    %v3141 = vsel %vm3079, %v3076, %v1792
    %v3142 = vsel %vm3079, %v3077, %v1794
    %v3143 = vsel %vm3079, %v3078, %v1796
    %vm3144 = vcmask 162816
    %v3145 = vsel %vm3144, %v3080, %v1926
    %v3146 = vsel %vm3144, %v3081, %v1928
    %v3147 = vsel %vm3144, %v3082, %v1930
    %v3148 = vsel %vm3144, %v3083, %v1932
    %v3149 = vsel %vm3144, %v3084, %v1934
    %v3150 = vsel %vm3144, %v3085, %v1936
    %v3151 = vsel %vm3144, %v3086, %v1938
    %v3152 = vsel %vm3144, %v3087, %v1940
    %v3153 = vsel %vm3144, %v3088, %v1942
    %v3154 = vsel %vm3144, %v3089, %v1944
    %v3155 = vsel %vm3144, %v3090, %v1946
    %v3156 = vsel %vm3144, %v3091, %v1948
    %v3157 = vsel %vm3144, %v3092, %v1950
    %v3158 = vsel %vm3144, %v3093, %v1952
    %v3159 = vsel %vm3144, %v3094, %v1954
    %v3160 = vsel %vm3144, %v3095, %v1956
    %v3161 = vsel %vm3144, %v3096, %v1958
    %v3162 = vsel %vm3144, %v3097, %v1960
    %v3163 = vsel %vm3144, %v3098, %v1962
    %v3164 = vsel %vm3144, %v3099, %v1964
    %v3165 = vsel %vm3144, %v3100, %v1966
    %v3166 = vsel %vm3144, %v3101, %v1968
    %v3167 = vsel %vm3144, %v3102, %v1970
    %v3168 = vsel %vm3144, %v3103, %v1972
    %v3169 = vsel %vm3144, %v3104, %v1974
    %v3170 = vsel %vm3144, %v3105, %v1976
    %v3171 = vsel %vm3144, %v3106, %v1978
    %v3172 = vsel %vm3144, %v3107, %v1980
    %v3173 = vsel %vm3144, %v3108, %v1982
    %v3174 = vsel %vm3144, %v3109, %v1984
    %v3175 = vsel %vm3144, %v3110, %v1986
    %v3176 = vsel %vm3144, %v3111, %v1988
    %v3177 = vsel %vm3144, %v3112, %v1990
    %v3178 = vsel %vm3144, %v3113, %v1992
    %v3179 = vsel %vm3144, %v3114, %v1994
    %v3180 = vsel %vm3144, %v3115, %v1996
    %v3181 = vsel %vm3144, %v3116, %v1998
    %v3182 = vsel %vm3144, %v3117, %v2000
    %v3183 = vsel %vm3144, %v3118, %v2002
    %v3184 = vsel %vm3144, %v3119, %v2004
    %v3185 = vsel %vm3144, %v3120, %v2006
    %v3186 = vsel %vm3144, %v3121, %v2008
    %v3187 = vsel %vm3144, %v3122, %v2010
    %v3188 = vsel %vm3144, %v3123, %v2012
    %v3189 = vsel %vm3144, %v3124, %v2014
    %v3190 = vsel %vm3144, %v3125, %v2016
    %v3191 = vsel %vm3144, %v3126, %v2018
    %v3192 = vsel %vm3144, %v3127, %v2020
    %v3193 = vsel %vm3144, %v3128, %v2022
    %v3194 = vsel %vm3144, %v3129, %v2024
    %v3195 = vsel %vm3144, %v3130, %v2026
    %v3196 = vsel %vm3144, %v3131, %v2028
    %v3197 = vsel %vm3144, %v3132, %v2030
    %v3198 = vsel %vm3144, %v3133, %v2032
    %v3199 = vsel %vm3144, %v3134, %v2034
    %v3200 = vsel %vm3144, %v3135, %v2036
    %v3201 = vsel %vm3144, %v3136, %v2038
    %v3202 = vsel %vm3144, %v3137, %v2040
    %v3203 = vsel %vm3144, %v3138, %v2042
    %v3204 = vsel %vm3144, %v3139, %v2044
    %v3205 = vsel %vm3144, %v3140, %v2046
    %v3206 = vsel %vm3144, %v3141, %v2048
    %v3207 = vsel %vm3144, %v3142, %v2050
    %v3208 = vsel %vm3144, %v3143, %v2052
    %vm3209 = vcmask 195584
    %v3210 = vsel %vm3209, %v3145, %v2182
    %v3211 = vsel %vm3209, %v3146, %v2184
    %v3212 = vsel %vm3209, %v3147, %v2186
    %v3213 = vsel %vm3209, %v3148, %v2188
    %v3214 = vsel %vm3209, %v3149, %v2190
    %v3215 = vsel %vm3209, %v3150, %v2192
    %v3216 = vsel %vm3209, %v3151, %v2194
    %v3217 = vsel %vm3209, %v3152, %v2196
    %v3218 = vsel %vm3209, %v3153, %v2198
    %v3219 = vsel %vm3209, %v3154, %v2200
    %v3220 = vsel %vm3209, %v3155, %v2202
    %v3221 = vsel %vm3209, %v3156, %v2204
    %v3222 = vsel %vm3209, %v3157, %v2206
    %v3223 = vsel %vm3209, %v3158, %v2208
    %v3224 = vsel %vm3209, %v3159, %v2210
    %v3225 = vsel %vm3209, %v3160, %v2212
    %v3226 = vsel %vm3209, %v3161, %v2214
    %v3227 = vsel %vm3209, %v3162, %v2216
    %v3228 = vsel %vm3209, %v3163, %v2218
    %v3229 = vsel %vm3209, %v3164, %v2220
    %v3230 = vsel %vm3209, %v3165, %v2222
    %v3231 = vsel %vm3209, %v3166, %v2224
    %v3232 = vsel %vm3209, %v3167, %v2226
    %v3233 = vsel %vm3209, %v3168, %v2228
    %v3234 = vsel %vm3209, %v3169, %v2230
    %v3235 = vsel %vm3209, %v3170, %v2232
    %v3236 = vsel %vm3209, %v3171, %v2234
    %v3237 = vsel %vm3209, %v3172, %v2236
    %v3238 = vsel %vm3209, %v3173, %v2238
    %v3239 = vsel %vm3209, %v3174, %v2240
    %v3240 = vsel %vm3209, %v3175, %v2242
    %v3241 = vsel %vm3209, %v3176, %v2244
    %v3242 = vsel %vm3209, %v3177, %v2246
    %v3243 = vsel %vm3209, %v3178, %v2248
    %v3244 = vsel %vm3209, %v3179, %v2250
    %v3245 = vsel %vm3209, %v3180, %v2252
    %v3246 = vsel %vm3209, %v3181, %v2254
    %v3247 = vsel %vm3209, %v3182, %v2256
    %v3248 = vsel %vm3209, %v3183, %v2258
    %v3249 = vsel %vm3209, %v3184, %v2260
    %v3250 = vsel %vm3209, %v3185, %v2262
    %v3251 = vsel %vm3209, %v3186, %v2264
    %v3252 = vsel %vm3209, %v3187, %v2266
    %v3253 = vsel %vm3209, %v3188, %v2268
    %v3254 = vsel %vm3209, %v3189, %v2270
    %v3255 = vsel %vm3209, %v3190, %v2272
    %v3256 = vsel %vm3209, %v3191, %v2274
    %v3257 = vsel %vm3209, %v3192, %v2276
    %v3258 = vsel %vm3209, %v3193, %v2278
    %v3259 = vsel %vm3209, %v3194, %v2280
    %v3260 = vsel %vm3209, %v3195, %v2282
    %v3261 = vsel %vm3209, %v3196, %v2284
    %v3262 = vsel %vm3209, %v3197, %v2286
    %v3263 = vsel %vm3209, %v3198, %v2288
    %v3264 = vsel %vm3209, %v3199, %v2290
    %v3265 = vsel %vm3209, %v3200, %v2292
    %v3266 = vsel %vm3209, %v3201, %v2294
    %v3267 = vsel %vm3209, %v3202, %v2296
    %v3268 = vsel %vm3209, %v3203, %v2298
    %v3269 = vsel %vm3209, %v3204, %v2300
    %v3270 = vsel %vm3209, %v3205, %v2302
    %v3271 = vsel %vm3209, %v3206, %v2304
    %v3272 = vsel %vm3209, %v3207, %v2306
    %v3273 = vsel %vm3209, %v3208, %v2308
    %vm3274 = vcmask 228352
    %v3275 = vsel %vm3274, %v3210, %v2438
    %v3276 = vsel %vm3274, %v3211, %v2440
    %v3277 = vsel %vm3274, %v3212, %v2442
    %v3278 = vsel %vm3274, %v3213, %v2444
    %v3279 = vsel %vm3274, %v3214, %v2446
    %v3280 = vsel %vm3274, %v3215, %v2448
    %v3281 = vsel %vm3274, %v3216, %v2450
    %v3282 = vsel %vm3274, %v3217, %v2452
    %v3283 = vsel %vm3274, %v3218, %v2454
    %v3284 = vsel %vm3274, %v3219, %v2456
    %v3285 = vsel %vm3274, %v3220, %v2458
    %v3286 = vsel %vm3274, %v3221, %v2460
    %v3287 = vsel %vm3274, %v3222, %v2462
    %v3288 = vsel %vm3274, %v3223, %v2464
    %v3289 = vsel %vm3274, %v3224, %v2466
    %v3290 = vsel %vm3274, %v3225, %v2468
    %v3291 = vsel %vm3274, %v3226, %v2470
    %v3292 = vsel %vm3274, %v3227, %v2472
    %v3293 = vsel %vm3274, %v3228, %v2474
    %v3294 = vsel %vm3274, %v3229, %v2476
    %v3295 = vsel %vm3274, %v3230, %v2478
    %v3296 = vsel %vm3274, %v3231, %v2480
    %v3297 = vsel %vm3274, %v3232, %v2482
    %v3298 = vsel %vm3274, %v3233, %v2484
    %v3299 = vsel %vm3274, %v3234, %v2486
    %v3300 = vsel %vm3274, %v3235, %v2488
    %v3301 = vsel %vm3274, %v3236, %v2490
    %v3302 = vsel %vm3274, %v3237, %v2492
    %v3303 = vsel %vm3274, %v3238, %v2494
    %v3304 = vsel %vm3274, %v3239, %v2496
    %v3305 = vsel %vm3274, %v3240, %v2498
    %v3306 = vsel %vm3274, %v3241, %v2500
    %v3307 = vsel %vm3274, %v3242, %v2502
    %v3308 = vsel %vm3274, %v3243, %v2504
    %v3309 = vsel %vm3274, %v3244, %v2506
    %v3310 = vsel %vm3274, %v3245, %v2508
    %v3311 = vsel %vm3274, %v3246, %v2510
    %v3312 = vsel %vm3274, %v3247, %v2512
    %v3313 = vsel %vm3274, %v3248, %v2514
    %v3314 = vsel %vm3274, %v3249, %v2516
    %v3315 = vsel %vm3274, %v3250, %v2518
    %v3316 = vsel %vm3274, %v3251, %v2520
    %v3317 = vsel %vm3274, %v3252, %v2522
    %v3318 = vsel %vm3274, %v3253, %v2524
    %v3319 = vsel %vm3274, %v3254, %v2526
    %v3320 = vsel %vm3274, %v3255, %v2528
    %v3321 = vsel %vm3274, %v3256, %v2530
    %v3322 = vsel %vm3274, %v3257, %v2532
    %v3323 = vsel %vm3274, %v3258, %v2534
    %v3324 = vsel %vm3274, %v3259, %v2536
    %v3325 = vsel %vm3274, %v3260, %v2538
    %v3326 = vsel %vm3274, %v3261, %v2540
    %v3327 = vsel %vm3274, %v3262, %v2542
    %v3328 = vsel %vm3274, %v3263, %v2544
    %v3329 = vsel %vm3274, %v3264, %v2546
    %v3330 = vsel %vm3274, %v3265, %v2548
    %v3331 = vsel %vm3274, %v3266, %v2550
    %v3332 = vsel %vm3274, %v3267, %v2552
    %v3333 = vsel %vm3274, %v3268, %v2554
    %v3334 = vsel %vm3274, %v3269, %v2556
    %v3335 = vsel %vm3274, %v3270, %v2558
    %v3336 = vsel %vm3274, %v3271, %v2560
    %v3337 = vsel %vm3274, %v3272, %v2562
    %v3338 = vsel %vm3274, %v3273, %v2564
    %vm3339 = vcmask 261120
    %v3340 = vsel %vm3339, %v3275, %v2694
    %v3341 = vsel %vm3339, %v3276, %v2696
    %v3342 = vsel %vm3339, %v3277, %v2698
    %v3343 = vsel %vm3339, %v3278, %v2700
    %v3344 = vsel %vm3339, %v3279, %v2702
    %v3345 = vsel %vm3339, %v3280, %v2704
    %v3346 = vsel %vm3339, %v3281, %v2706
    %v3347 = vsel %vm3339, %v3282, %v2708
    %v3348 = vsel %vm3339, %v3283, %v2710
    %v3349 = vsel %vm3339, %v3284, %v2712
    %v3350 = vsel %vm3339, %v3285, %v2714
    %v3351 = vsel %vm3339, %v3286, %v2716
    %v3352 = vsel %vm3339, %v3287, %v2718
    %v3353 = vsel %vm3339, %v3288, %v2720
    %v3354 = vsel %vm3339, %v3289, %v2722
    %v3355 = vsel %vm3339, %v3290, %v2724
    %v3356 = vsel %vm3339, %v3291, %v2726
    %v3357 = vsel %vm3339, %v3292, %v2728
    %v3358 = vsel %vm3339, %v3293, %v2730
    %v3359 = vsel %vm3339, %v3294, %v2732
    %v3360 = vsel %vm3339, %v3295, %v2734
    %v3361 = vsel %vm3339, %v3296, %v2736
    %v3362 = vsel %vm3339, %v3297, %v2738
    %v3363 = vsel %vm3339, %v3298, %v2740
    %v3364 = vsel %vm3339, %v3299, %v2742
    %v3365 = vsel %vm3339, %v3300, %v2744
    %v3366 = vsel %vm3339, %v3301, %v2746
    %v3367 = vsel %vm3339, %v3302, %v2748
    %v3368 = vsel %vm3339, %v3303, %v2750
    %v3369 = vsel %vm3339, %v3304, %v2752
    %v3370 = vsel %vm3339, %v3305, %v2754
    %v3371 = vsel %vm3339, %v3306, %v2756
    %v3372 = vsel %vm3339, %v3307, %v2758
    %v3373 = vsel %vm3339, %v3308, %v2760
    %v3374 = vsel %vm3339, %v3309, %v2762
    %v3375 = vsel %vm3339, %v3310, %v2764
    %v3376 = vsel %vm3339, %v3311, %v2766
    %v3377 = vsel %vm3339, %v3312, %v2768
    %v3378 = vsel %vm3339, %v3313, %v2770
    %v3379 = vsel %vm3339, %v3314, %v2772
    %v3380 = vsel %vm3339, %v3315, %v2774
    %v3381 = vsel %vm3339, %v3316, %v2776
    %v3382 = vsel %vm3339, %v3317, %v2778
    %v3383 = vsel %vm3339, %v3318, %v2780
    %v3384 = vsel %vm3339, %v3319, %v2782
    %v3385 = vsel %vm3339, %v3320, %v2784
    %v3386 = vsel %vm3339, %v3321, %v2786
    %v3387 = vsel %vm3339, %v3322, %v2788
    %v3388 = vsel %vm3339, %v3323, %v2790
    %v3389 = vsel %vm3339, %v3324, %v2792
    %v3390 = vsel %vm3339, %v3325, %v2794
    %v3391 = vsel %vm3339, %v3326, %v2796
    %v3392 = vsel %vm3339, %v3327, %v2798
    %v3393 = vsel %vm3339, %v3328, %v2800
    %v3394 = vsel %vm3339, %v3329, %v2802
    %v3395 = vsel %vm3339, %v3330, %v2804
    %v3396 = vsel %vm3339, %v3331, %v2806
    %v3397 = vsel %vm3339, %v3332, %v2808
    %v3398 = vsel %vm3339, %v3333, %v2810
    %v3399 = vsel %vm3339, %v3334, %v2812
    %v3400 = vsel %vm3339, %v3335, %v2814
    %v3401 = vsel %vm3339, %v3336, %v2816
    %v3402 = vsel %vm3339, %v3337, %v2818
    %v3403 = vsel %vm3339, %v3338, %v2820
    %v3404 = vld [vmem:[%s1] sm:$0xff]
    %v3405 = vld [vmem:[%s1 + $0x8] sm:$0xff]
    %v3406 = vld [vmem:[%s1 + $0x10] sm:$0xff]
    %v3407 = vld [vmem:[%s1 + $0x18] sm:$0xff]
    %v3408 = vld [vmem:[%s1 + $0x20] sm:$0xf]
    %vm3409 = vcmask 293888
    %v3411 = vsel %vm3409, %v3340, 0
    %v3414 = vsel %vm3409, %v3341, 0
    %v3417 = vsel %vm3409, %v3342, 0
    %v3420 = vsel %vm3409, %v3343, 0
    %v3423 = vsel %vm3409, %v3344, 0
    %v3426 = vsel %vm3409, %v3345, 0
    %v3429 = vsel %vm3409, %v3346, 0
    %v3432 = vsel %vm3409, %v3347, 0
    %v3435 = vsel %vm3409, %v3348, 0
    %v3438 = vsel %vm3409, %v3349, 0
    %v3441 = vsel %vm3409, %v3350, 0
    %v3444 = vsel %vm3409, %v3351, 0
    %v3447 = vsel %vm3409, %v3352, 0
    %v3450 = vsel %vm3409, %v3353, 0
    %v3453 = vsel %vm3409, %v3354, 0
    %v3456 = vsel %vm3409, %v3355, 0
    %v3459 = vsel %vm3409, %v3356, 0
    %v3462 = vsel %vm3409, %v3357, 0
    %v3465 = vsel %vm3409, %v3358, 0
    %v3468 = vsel %vm3409, %v3359, 0
    %v3471 = vsel %vm3409, %v3360, 0
    %v3474 = vsel %vm3409, %v3361, 0
    %v3477 = vsel %vm3409, %v3362, 0
    %v3480 = vsel %vm3409, %v3363, 0
    %v3483 = vsel %vm3409, %v3364, 0
    %v3486 = vsel %vm3409, %v3365, 0
    %v3489 = vsel %vm3409, %v3366, 0
    %v3492 = vsel %vm3409, %v3367, 0
    %v3495 = vsel %vm3409, %v3368, 0
    %v3498 = vsel %vm3409, %v3369, 0
    %v3501 = vsel %vm3409, %v3370, 0
    %v3504 = vsel %vm3409, %v3371, 0
    %v3507 = vsel %vm3409, %v3372, 0
    %v3510 = vsel %vm3409, %v3373, 0
    %v3513 = vsel %vm3409, %v3374, 0
    %v3516 = vsel %vm3409, %v3375, 0
    %v3519 = vsel %vm3409, %v3376, 0
    %v3522 = vsel %vm3409, %v3377, 0
    %v3525 = vsel %vm3409, %v3378, 0
    %v3528 = vsel %vm3409, %v3379, 0
    %v3531 = vsel %vm3409, %v3380, 0
    %v3534 = vsel %vm3409, %v3381, 0
    %v3537 = vsel %vm3409, %v3382, 0
    %v3540 = vsel %vm3409, %v3383, 0
    %v3543 = vsel %vm3409, %v3384, 0
    %v3546 = vsel %vm3409, %v3385, 0
    %v3549 = vsel %vm3409, %v3386, 0
    %v3552 = vsel %vm3409, %v3387, 0
    %v3555 = vsel %vm3409, %v3388, 0
    %v3558 = vsel %vm3409, %v3389, 0
    %v3561 = vsel %vm3409, %v3390, 0
    %v3564 = vsel %vm3409, %v3391, 0
    %v3567 = vsel %vm3409, %v3392, 0
    %v3570 = vsel %vm3409, %v3393, 0
    %v3573 = vsel %vm3409, %v3394, 0
    %v3576 = vsel %vm3409, %v3395, 0
    %v3579 = vsel %vm3409, %v3396, 0
    %v3582 = vsel %vm3409, %v3397, 0
    %v3585 = vsel %vm3409, %v3398, 0
    %v3588 = vsel %vm3409, %v3399, 0
    %v3591 = vsel %vm3409, %v3400, 0
    %v3594 = vsel %vm3409, %v3401, 0
    %v3597 = vsel %vm3409, %v3402, 0
    %v3600 = vsel %vm3409, %v3403, 0
    %vm3602 = vcmask 1043456
    %v3604 = vsel %vm3602, %v3408, 0
    %3606 = vmatpush.msra.mxu0 0.0
    %3607 = vmatpush.msra.mxu0 0.0
    %3608 = vmatpush.msra.mxu0 0.0
    %3609 = vmatpush.msra.mxu0 0.0
    %3610 = vmatpush.msra.mxu0 0.0
    %3611 = vmatpush.msra.mxu0 0.0
    %3612 = vmatpush.msra.mxu0 0.0
    %3613 = vmatpush.msra.mxu0 0.0
    %3614 = vmatpush.msra.mxu0 0.0
    %3615 = vmatpush.msra.mxu0 0.0
    %3616 = vmatpush.msra.mxu0 0.0
    %3617 = vmatpush.msra.mxu0 %v3604
    %3618 = vmatpush.msra.mxu0 %v3407
    %3619 = vmatpush.msra.mxu0 %v3406
    %3620 = vmatpush.msra.mxu0 %v3405
    %3621 = vmatpush.msra.mxu0 %v3404
    %3622 = vmatmul.f32.gmra.mxu0 %v3411
    %v3623 = vpop.f32.mrf.mxu0
    %v3624 = vadd.f32 0.0, %v3623
    %3625 = vmatmul.f32.gmra.mxu0 %v3414
    %v3626 = vpop.f32.mrf.mxu0
    %v3627 = vadd.f32 0.0, %v3626
    %3628 = vmatmul.f32.gmra.mxu0 %v3417
    %v3629 = vpop.f32.mrf.mxu0
    %v3630 = vadd.f32 0.0, %v3629
    %3631 = vmatmul.f32.gmra.mxu0 %v3420
    %v3632 = vpop.f32.mrf.mxu0
    %v3633 = vadd.f32 0.0, %v3632
    %3634 = vmatmul.f32.gmra.mxu0 %v3423
    %v3635 = vpop.f32.mrf.mxu0
    %v3636 = vadd.f32 0.0, %v3635
    %3637 = vmatmul.f32.gmra.mxu0 %v3426
    %v3638 = vpop.f32.mrf.mxu0
    %v3639 = vadd.f32 0.0, %v3638
    %3640 = vmatmul.f32.gmra.mxu0 %v3429
    %v3641 = vpop.f32.mrf.mxu0
    %v3642 = vadd.f32 0.0, %v3641
    %3643 = vmatmul.f32.gmra.mxu0 %v3432
    %v3644 = vpop.f32.mrf.mxu0
    %v3645 = vadd.f32 0.0, %v3644
    %3646 = vmatmul.f32.gmra.mxu0 %v3435
    %v3647 = vpop.f32.mrf.mxu0
    %v3648 = vadd.f32 0.0, %v3647
    %3649 = vmatmul.f32.gmra.mxu0 %v3438
    %v3650 = vpop.f32.mrf.mxu0
    %v3651 = vadd.f32 0.0, %v3650
    %3652 = vmatmul.f32.gmra.mxu0 %v3441
    %v3653 = vpop.f32.mrf.mxu0
    %v3654 = vadd.f32 0.0, %v3653
    %3655 = vmatmul.f32.gmra.mxu0 %v3444
    %v3656 = vpop.f32.mrf.mxu0
    %v3657 = vadd.f32 0.0, %v3656
    %3658 = vmatmul.f32.gmra.mxu0 %v3447
    %v3659 = vpop.f32.mrf.mxu0
    %v3660 = vadd.f32 0.0, %v3659
    %3661 = vmatmul.f32.gmra.mxu0 %v3450
    %v3662 = vpop.f32.mrf.mxu0
    %v3663 = vadd.f32 0.0, %v3662
    %3664 = vmatmul.f32.gmra.mxu0 %v3453
    %v3665 = vpop.f32.mrf.mxu0
    %v3666 = vadd.f32 0.0, %v3665
    %3667 = vmatmul.f32.gmra.mxu0 %v3456
    %v3668 = vpop.f32.mrf.mxu0
    %v3669 = vadd.f32 0.0, %v3668
    %3670 = vmatmul.f32.gmra.mxu0 %v3459
    %v3671 = vpop.f32.mrf.mxu0
    %v3672 = vadd.f32 0.0, %v3671
    %3673 = vmatmul.f32.gmra.mxu0 %v3462
    %v3674 = vpop.f32.mrf.mxu0
    %v3675 = vadd.f32 0.0, %v3674
    %3676 = vmatmul.f32.gmra.mxu0 %v3465
    %v3677 = vpop.f32.mrf.mxu0
    %v3678 = vadd.f32 0.0, %v3677
    %3679 = vmatmul.f32.gmra.mxu0 %v3468
    %v3680 = vpop.f32.mrf.mxu0
    %v3681 = vadd.f32 0.0, %v3680
    %3682 = vmatmul.f32.gmra.mxu0 %v3471
    %v3683 = vpop.f32.mrf.mxu0
    %v3684 = vadd.f32 0.0, %v3683
    %3685 = vmatmul.f32.gmra.mxu0 %v3474
    %v3686 = vpop.f32.mrf.mxu0
    %v3687 = vadd.f32 0.0, %v3686
    %3688 = vmatmul.f32.gmra.mxu0 %v3477
    %v3689 = vpop.f32.mrf.mxu0
    %v3690 = vadd.f32 0.0, %v3689
    %3691 = vmatmul.f32.gmra.mxu0 %v3480
    %v3692 = vpop.f32.mrf.mxu0
    %v3693 = vadd.f32 0.0, %v3692
    %3694 = vmatmul.f32.gmra.mxu0 %v3483
    %v3695 = vpop.f32.mrf.mxu0
    %v3696 = vadd.f32 0.0, %v3695
    %3697 = vmatmul.f32.gmra.mxu0 %v3486
    %v3698 = vpop.f32.mrf.mxu0
    %v3699 = vadd.f32 0.0, %v3698
    %3700 = vmatmul.f32.gmra.mxu0 %v3489
    %v3701 = vpop.f32.mrf.mxu0
    %v3702 = vadd.f32 0.0, %v3701
    %3703 = vmatmul.f32.gmra.mxu0 %v3492
    %v3704 = vpop.f32.mrf.mxu0
    %v3705 = vadd.f32 0.0, %v3704
    %3706 = vmatmul.f32.gmra.mxu0 %v3495
    %v3707 = vpop.f32.mrf.mxu0
    %v3708 = vadd.f32 0.0, %v3707
    %3709 = vmatmul.f32.gmra.mxu0 %v3498
    %v3710 = vpop.f32.mrf.mxu0
    %v3711 = vadd.f32 0.0, %v3710
    %3712 = vmatmul.f32.gmra.mxu0 %v3501
    %v3713 = vpop.f32.mrf.mxu0
    %v3714 = vadd.f32 0.0, %v3713
    %3715 = vmatmul.f32.gmra.mxu0 %v3504
    %v3716 = vpop.f32.mrf.mxu0
    %v3717 = vadd.f32 0.0, %v3716
    %3718 = vmatmul.f32.gmra.mxu0 %v3507
    %v3719 = vpop.f32.mrf.mxu0
    %v3720 = vadd.f32 0.0, %v3719
    %3721 = vmatmul.f32.gmra.mxu0 %v3510
    %v3722 = vpop.f32.mrf.mxu0
    %v3723 = vadd.f32 0.0, %v3722
    %3724 = vmatmul.f32.gmra.mxu0 %v3513
    %v3725 = vpop.f32.mrf.mxu0
    %v3726 = vadd.f32 0.0, %v3725
    %3727 = vmatmul.f32.gmra.mxu0 %v3516
    %v3728 = vpop.f32.mrf.mxu0
    %v3729 = vadd.f32 0.0, %v3728
    %3730 = vmatmul.f32.gmra.mxu0 %v3519
    %v3731 = vpop.f32.mrf.mxu0
    %v3732 = vadd.f32 0.0, %v3731
    %3733 = vmatmul.f32.gmra.mxu0 %v3522
    %v3734 = vpop.f32.mrf.mxu0
    %v3735 = vadd.f32 0.0, %v3734
    %3736 = vmatmul.f32.gmra.mxu0 %v3525
    %v3737 = vpop.f32.mrf.mxu0
    %v3738 = vadd.f32 0.0, %v3737
    %3739 = vmatmul.f32.gmra.mxu0 %v3528
    %v3740 = vpop.f32.mrf.mxu0
    %v3741 = vadd.f32 0.0, %v3740
    %3742 = vmatmul.f32.gmra.mxu0 %v3531
    %v3743 = vpop.f32.mrf.mxu0
    %v3744 = vadd.f32 0.0, %v3743
    %3745 = vmatmul.f32.gmra.mxu0 %v3534
    %v3746 = vpop.f32.mrf.mxu0
    %v3747 = vadd.f32 0.0, %v3746
    %3748 = vmatmul.f32.gmra.mxu0 %v3537
    %v3749 = vpop.f32.mrf.mxu0
    %v3750 = vadd.f32 0.0, %v3749
    %3751 = vmatmul.f32.gmra.mxu0 %v3540
    %v3752 = vpop.f32.mrf.mxu0
    %v3753 = vadd.f32 0.0, %v3752
    %3754 = vmatmul.f32.gmra.mxu0 %v3543
    %v3755 = vpop.f32.mrf.mxu0
    %v3756 = vadd.f32 0.0, %v3755
    %3757 = vmatmul.f32.gmra.mxu0 %v3546
    %v3758 = vpop.f32.mrf.mxu0
    %v3759 = vadd.f32 0.0, %v3758
    %3760 = vmatmul.f32.gmra.mxu0 %v3549
    %v3761 = vpop.f32.mrf.mxu0
    %v3762 = vadd.f32 0.0, %v3761
    %3763 = vmatmul.f32.gmra.mxu0 %v3552
    %v3764 = vpop.f32.mrf.mxu0
    %v3765 = vadd.f32 0.0, %v3764
    %3766 = vmatmul.f32.gmra.mxu0 %v3555
    %v3767 = vpop.f32.mrf.mxu0
    %v3768 = vadd.f32 0.0, %v3767
    %3769 = vmatmul.f32.gmra.mxu0 %v3558
    %v3770 = vpop.f32.mrf.mxu0
    %v3771 = vadd.f32 0.0, %v3770
    %3772 = vmatmul.f32.gmra.mxu0 %v3561
    %v3773 = vpop.f32.mrf.mxu0
    %v3774 = vadd.f32 0.0, %v3773
    %3775 = vmatmul.f32.gmra.mxu0 %v3564
    %v3776 = vpop.f32.mrf.mxu0
    %v3777 = vadd.f32 0.0, %v3776
    %3778 = vmatmul.f32.gmra.mxu0 %v3567
    %v3779 = vpop.f32.mrf.mxu0
    %v3780 = vadd.f32 0.0, %v3779
    %3781 = vmatmul.f32.gmra.mxu0 %v3570
    %v3782 = vpop.f32.mrf.mxu0
    %v3783 = vadd.f32 0.0, %v3782
    %3784 = vmatmul.f32.gmra.mxu0 %v3573
    %v3785 = vpop.f32.mrf.mxu0
    %v3786 = vadd.f32 0.0, %v3785
    %3787 = vmatmul.f32.gmra.mxu0 %v3576
    %v3788 = vpop.f32.mrf.mxu0
    %v3789 = vadd.f32 0.0, %v3788
    %3790 = vmatmul.f32.gmra.mxu0 %v3579
    %v3791 = vpop.f32.mrf.mxu0
    %v3792 = vadd.f32 0.0, %v3791
    %3793 = vmatmul.f32.gmra.mxu0 %v3582
    %v3794 = vpop.f32.mrf.mxu0
    %v3795 = vadd.f32 0.0, %v3794
    %3796 = vmatmul.f32.gmra.mxu0 %v3585
    %v3797 = vpop.f32.mrf.mxu0
    %v3798 = vadd.f32 0.0, %v3797
    %3799 = vmatmul.f32.gmra.mxu0 %v3588
    %v3800 = vpop.f32.mrf.mxu0
    %v3801 = vadd.f32 0.0, %v3800
    %3802 = vmatmul.f32.gmra.mxu0 %v3591
    %v3803 = vpop.f32.mrf.mxu0
    %v3804 = vadd.f32 0.0, %v3803
    %3805 = vmatmul.f32.gmra.mxu0 %v3594
    %v3806 = vpop.f32.mrf.mxu0
    %v3807 = vadd.f32 0.0, %v3806
    %3808 = vmatmul.f32.gmra.mxu0 %v3597
    %v3809 = vpop.f32.mrf.mxu0
    %v3810 = vadd.f32 0.0, %v3809
    %3811 = vmatmul.f32.gmra.mxu0 %v3600
    %v3812 = vpop.f32.mrf.mxu0
    %v3813 = vadd.f32 0.0, %v3812
    %3814 = vdwg.mxu0
    %3815 = vxpose.xlu0.b32.start [1/16] %v3624, 128
    %3816 = vxpose.xlu0.b32.cont [2/16] %v3627, 128
    %3817 = vxpose.xlu0.b32.cont [3/16] %v3630, 128
    %3818 = vxpose.xlu0.b32.cont [4/16] %v3633, 128
    %3819 = vxpose.xlu0.b32.cont [5/16] %v3636, 128
    %3820 = vxpose.xlu0.b32.cont [6/16] %v3639, 128
    %3821 = vxpose.xlu0.b32.cont [7/16] %v3642, 128
    %3822 = vxpose.xlu0.b32.cont [8/16] %v3645, 128
    %3823 = vxpose.xlu0.b32.cont [9/16] %v3648, 128
    %3824 = vxpose.xlu0.b32.cont [10/16] %v3651, 128
    %3825 = vxpose.xlu0.b32.cont [11/16] %v3654, 128
    %3826 = vxpose.xlu0.b32.cont [12/16] %v3657, 128
    %3827 = vxpose.xlu0.b32.cont [13/16] %v3660, 128
    %3828 = vxpose.xlu0.b32.cont [14/16] %v3663, 128
    %3829 = vxpose.xlu0.b32.cont [15/16] %v3666, 128
    %3830 = vxpose.xlu0.b32.end [16/16] %v3669, 128
    %v3831 = vpop.trf.xlu0
    %v3832 = vpop.trf.xlu0
    %v3833 = vpop.trf.xlu0
    %v3834 = vpop.trf.xlu0
    %v3835 = vpop.trf.xlu0
    %v3836 = vpop.trf.xlu0
    %v3837 = vpop.trf.xlu0
    %v3838 = vpop.trf.xlu0
    %v3839 = vpop.trf.xlu0
    %v3840 = vpop.trf.xlu0
    %v3841 = vpop.trf.xlu0
    %v3842 = vpop.trf.xlu0
    %v3843 = vpop.trf.xlu0
    %v3844 = vpop.trf.xlu0
    %v3845 = vpop.trf.xlu0
    %v3846 = vpop.trf.xlu0
    %3847 = vxpose.xlu0.b32.start [1/16] %v3672, 128
    %3848 = vxpose.xlu0.b32.cont [2/16] %v3675, 128
    %3849 = vxpose.xlu0.b32.cont [3/16] %v3678, 128
    %3850 = vxpose.xlu0.b32.cont [4/16] %v3681, 128
    %3851 = vxpose.xlu0.b32.cont [5/16] %v3684, 128
    %3852 = vxpose.xlu0.b32.cont [6/16] %v3687, 128
    %3853 = vxpose.xlu0.b32.cont [7/16] %v3690, 128
    %3854 = vxpose.xlu0.b32.cont [8/16] %v3693, 128
    %3855 = vxpose.xlu0.b32.cont [9/16] %v3696, 128
    %3856 = vxpose.xlu0.b32.cont [10/16] %v3699, 128
    %3857 = vxpose.xlu0.b32.cont [11/16] %v3702, 128
    %3858 = vxpose.xlu0.b32.cont [12/16] %v3705, 128
    %3859 = vxpose.xlu0.b32.cont [13/16] %v3708, 128
    %3860 = vxpose.xlu0.b32.cont [14/16] %v3711, 128
    %3861 = vxpose.xlu0.b32.cont [15/16] %v3714, 128
    %3862 = vxpose.xlu0.b32.end [16/16] %v3717, 128
    %v3863 = vpop.trf.xlu0
    %v3864 = vpop.trf.xlu0
    %v3865 = vpop.trf.xlu0
    %v3866 = vpop.trf.xlu0
    %v3867 = vpop.trf.xlu0
    %v3868 = vpop.trf.xlu0
    %v3869 = vpop.trf.xlu0
    %v3870 = vpop.trf.xlu0
    %v3871 = vpop.trf.xlu0
    %v3872 = vpop.trf.xlu0
    %v3873 = vpop.trf.xlu0
    %v3874 = vpop.trf.xlu0
    %v3875 = vpop.trf.xlu0
    %v3876 = vpop.trf.xlu0
    %v3877 = vpop.trf.xlu0
    %v3878 = vpop.trf.xlu0
    %3879 = vxpose.xlu0.b32.start [1/16] %v3720, 128
    %3880 = vxpose.xlu0.b32.cont [2/16] %v3723, 128
    %3881 = vxpose.xlu0.b32.cont [3/16] %v3726, 128
    %3882 = vxpose.xlu0.b32.cont [4/16] %v3729, 128
    %3883 = vxpose.xlu0.b32.cont [5/16] %v3732, 128
    %3884 = vxpose.xlu0.b32.cont [6/16] %v3735, 128
    %3885 = vxpose.xlu0.b32.cont [7/16] %v3738, 128
    %3886 = vxpose.xlu0.b32.cont [8/16] %v3741, 128
    %3887 = vxpose.xlu0.b32.cont [9/16] %v3744, 128
    %3888 = vxpose.xlu0.b32.cont [10/16] %v3747, 128
    %3889 = vxpose.xlu0.b32.cont [11/16] %v3750, 128
    %3890 = vxpose.xlu0.b32.cont [12/16] %v3753, 128
    %3891 = vxpose.xlu0.b32.cont [13/16] %v3756, 128
    %3892 = vxpose.xlu0.b32.cont [14/16] %v3759, 128
    %3893 = vxpose.xlu0.b32.cont [15/16] %v3762, 128
    %3894 = vxpose.xlu0.b32.end [16/16] %v3765, 128
    %v3895 = vpop.trf.xlu0
    %v3896 = vpop.trf.xlu0
    %v3897 = vpop.trf.xlu0
    %v3898 = vpop.trf.xlu0
    %v3899 = vpop.trf.xlu0
    %v3900 = vpop.trf.xlu0
    %v3901 = vpop.trf.xlu0
    %v3902 = vpop.trf.xlu0
    %v3903 = vpop.trf.xlu0
    %v3904 = vpop.trf.xlu0
    %v3905 = vpop.trf.xlu0
    %v3906 = vpop.trf.xlu0
    %v3907 = vpop.trf.xlu0
    %v3908 = vpop.trf.xlu0
    %v3909 = vpop.trf.xlu0
    %v3910 = vpop.trf.xlu0
    %3911 = vxpose.xlu0.b32.start [1/16] %v3768, 128
    %3912 = vxpose.xlu0.b32.cont [2/16] %v3771, 128
    %3913 = vxpose.xlu0.b32.cont [3/16] %v3774, 128
    %3914 = vxpose.xlu0.b32.cont [4/16] %v3777, 128
    %3915 = vxpose.xlu0.b32.cont [5/16] %v3780, 128
    %3916 = vxpose.xlu0.b32.cont [6/16] %v3783, 128
    %3917 = vxpose.xlu0.b32.cont [7/16] %v3786, 128
    %3918 = vxpose.xlu0.b32.cont [8/16] %v3789, 128
    %3919 = vxpose.xlu0.b32.cont [9/16] %v3792, 128
    %3920 = vxpose.xlu0.b32.cont [10/16] %v3795, 128
    %3921 = vxpose.xlu0.b32.cont [11/16] %v3798, 128
    %3922 = vxpose.xlu0.b32.cont [12/16] %v3801, 128
    %3923 = vxpose.xlu0.b32.cont [13/16] %v3804, 128
    %3924 = vxpose.xlu0.b32.cont [14/16] %v3807, 128
    %3925 = vxpose.xlu0.b32.cont [15/16] %v3810, 128
    %3926 = vxpose.xlu0.b32.end [16/16] %v3813, 128
    %v3927 = vpop.trf.xlu0
    %v3928 = vpop.trf.xlu0
    %v3929 = vpop.trf.xlu0
    %v3930 = vpop.trf.xlu0
    %v3931 = vpop.trf.xlu0
    %v3932 = vpop.trf.xlu0
    %v3933 = vpop.trf.xlu0
    %v3934 = vpop.trf.xlu0
    %v3935 = vpop.trf.xlu0
    %v3936 = vpop.trf.xlu0
    %v3937 = vpop.trf.xlu0
    %v3938 = vpop.trf.xlu0
    %v3939 = vpop.trf.xlu0
    %v3940 = vpop.trf.xlu0
    %v3941 = vpop.trf.xlu0
    %v3942 = vpop.trf.xlu0
    %v3943 = vld [vmem:[%s2] sm:$0xff]
    %3945 = vset.pattern.permute.xlu0 0
    %3946 = vperm.xlu0 %3945, %v3943
    %v3947 = vpop.permute.xlu0 %3946
    %v3949 = vmul.f32 %v3831, %v3947
    %v3950 = vmul.f32 %v3863, %v3947
    %v3951 = vmul.f32 %v3895, %v3947
    %v3952 = vmul.f32 %v3927, %v3947
    %v3953 = vadd.f32 %v3949, %v3950
    %v3954 = vadd.f32 %v3953, %v3951
    %v3955 = vadd.f32 %v3954, %v3952
    %3956 = vadd.xlane.f32.xlu0 %v3955
    %v3957 = vpop.xlane.xlu0 %3956
    %v3958 = vmul.f32 %v3949, %v3949
    %v3959 = vmul.f32 %v3950, %v3950
    %v3960 = vmul.f32 %v3951, %v3951
    %v3961 = vmul.f32 %v3952, %v3952
    %v3962 = vadd.f32 %v3958, %v3959
    %v3963 = vadd.f32 %v3962, %v3960
    %v3964 = vadd.f32 %v3963, %v3961
    %3965 = vadd.xlane.f32.xlu0 %v3964
    %v3966 = vpop.xlane.xlu0 %3965
    %v3967 = vrcp.pop 512.0
    %v3968 = vmul.f32 512.0, %v3967
    %v3969 = vsub.f32 1.0, %v3968
    %v3970 = vmul.f32 %v3967, %v3969
    %v3971 = vadd.f32 %v3967, %v3970
    %vm3972 = vweird.f32 %v3967
    %v3973 = vsel %vm3972, %v3967, %v3971
    %v3974 = vmul.f32 %v3957, %v3973
    %v3975 = vmul.f32 %v3966, %v3973
    %v3976 = vmul.f32 %v3974, %v3974
    %v3977 = vsub.f32 %v3975, %v3976
    %v3978 = vadd.f32 %v3977, 1e-05
    %v3979 = vrsqrt.pop %v3978
    %v3980 = vmul.f32 %v3979, %v3978
    %v3981 = vmul.f32 %v3980, %v3979
    %v3982 = vmul.f32 0.5, %v3981
    %v3983 = vsub.f32 1.5, %v3982
    %v3984 = vmul.f32 %v3979, %v3983
    %vm3985 = vweird.f32 %v3978
    %vm3986 = vweird.f32 %v3979
    %vm3987 = vmor %vm3985, %vm3986
    %v3988 = vsel %vm3987, %v3979, %v3984
    %v3989 = vsub.f32 %v3949, %v3974
    %v3990 = vsub.f32 %v3950, %v3974
    %v3991 = vsub.f32 %v3951, %v3974
    %v3992 = vsub.f32 %v3952, %v3974
    %v3993 = vld [vmem:[%s3] sm:$0xff]
    %v3994 = vmul.f32 %v3988, %v3993
    %3996 = vset.pattern.permute.xlu0 0
    %3997 = vperm.xlu0 %3996, %v3994
    %v3998 = vpop.permute.xlu0 %3997
    %v4000 = vmul.f32 %v3989, %v3998
    %v4001 = vmul.f32 %v3990, %v3998
    %v4002 = vmul.f32 %v3991, %v3998
    %v4003 = vmul.f32 %v3992, %v3998
    %v4004 = vld [vmem:[%s4] sm:$0xff]
    %4006 = vset.pattern.permute.xlu0 0
    %4007 = vperm.xlu0 %4006, %v4004
    %v4008 = vpop.permute.xlu0 %4007
    %v4010 = vadd.f32 %v4000, %v4008
    %v4011 = vadd.f32 %v4001, %v4008
    %v4012 = vadd.f32 %v4002, %v4008
    %v4013 = vadd.f32 %v4003, %v4008
    %4014 = vst [vmem:[#allocation3] sm:$0xff] %v4010
    %4015 = vst [vmem:[#allocation3 + $0x8] sm:$0xff] %v4011
    %s4016 = scalar_lea.vmem [#allocation3], 16
    %4017 = vst [vmem:[%s4016] sm:$0xff] %v4012
    %4018 = vst [vmem:[%s4016 + $0x8] sm:$0xff] %v4013
    // Predicated region
    $region22: #{tpu_custom_call.1} parent=1 // pred_check
      _
    $region23: #{tpu_custom_call.1} parent=1 // pred_check_branch
      %4020 = sbr.rel (0) target = $region25
    $region24: #{tpu_custom_call.1} parent=1 // pred_region
      %4022 = vsyncadd [#allocation4], 0
      %s4023 = sshll.u32 [#allocation3], 4
      %s4024 = int_to_ptr.vmem [resolvable:$true] %s4023
      %s4025 = sshll.u32 %s5, 4
      %s4026 = int_to_ptr.hbm [resolvable:$true] %s4025
      %4031 = dma.vmem_to_hbm [thread:$0]  %s4024, 512, %s4026, [#allocation4], 256, 256, 16
    $region25: #{tpu_custom_call.1} parent=1 // pred_fallthru
      _
    // Predicated region
    $region26: #{tpu_custom_call.1} parent=1 // pred_check
      _
    $region27: #{tpu_custom_call.1} parent=1 // pred_check_branch
      %4033 = sbr.rel (0) target = $region29
    $region28: #{tpu_custom_call.1} parent=1 // pred_region
      %4035 = dma.done [#allocation4], 512
    $region29: #{tpu_custom_call.1} parent=1 // pred_fallthru
      _
    %4036 = vsyncpa [#allocation4], 1

</llo_original>
